<compile_context>
chip_gen: v7x
topology: tpu7x:2x2x1
jax: 0.10.0
libtpu: 0.0.40
codegen_flags: <defaults>
</compile_context>

<pallas_src>
import math
import functools

import jax
import jax.numpy as jnp
from jax.experimental import pallas as pl
from jax.experimental.pallas import tpu as pltpu

SINE_W0 = 20.0  # Sine()/FirstSine() default w0 used inside FCBlock


def _round_up(x, m):
    return ((x + m - 1) // m) * m


def _choose_tile(n_rows, tile_n, min_grid_steps):
    """Lane-aligned row tile, clamped for tiny N, split so the grid keeps >=2 steps."""
    tile = max(128, min(_round_up(tile_n, 128), _round_up(n_rows, 128)))
    if min_grid_steps > 1 and n_rows > 128:
        tile = min(tile, max(128, _round_up(-(-n_rows // min_grid_steps), 128)))
    return tile


def prepare_params(params, *, hidden_in_bf16=False):
    """Fold w0 into sine-fed layers; reshape biases to (dout,1); transpose final weight
    to an (H,1) column when out_features==1 (VPU/XLU final layer).

    params: list of (W, b) in PyTorch layout: W (out_dim, in_dim), b (out_dim,).
    Returns (folded_params, last_vpu). Reuse across calls (weights rarely change)."""
    n_layers = len(params)
    out_features = params[-1][0].shape[0]
    last_vpu = (out_features == 1)
    folded = []
    for li, (W, b) in enumerate(params):
        scale = SINE_W0 if li < n_layers - 1 else 1.0
        Wf = jnp.asarray(W, jnp.float32) * scale
        bf = (jnp.asarray(b, jnp.float32) * scale).reshape(-1, 1)
        if hidden_in_bf16 and 0 < li < n_layers - 1:
            Wf = Wf.astype(jnp.bfloat16)          # hidden layers only; first/last stay f32
        if li == n_layers - 1 and last_vpu:
            Wf = Wf.T                             # (din, 1) column for mul + sublane reduce
        folded.append((Wf, bf))
    return folded, last_vpu


def prepare_coords(x, *, tile_n=8192, min_grid_steps=2):
    """Transpose + zero-pad the coordinates once (samples -> lane axis).
    Cache the result across calls when the coordinate grid is reused."""
    n_rows, _ = x.shape
    tile = _choose_tile(n_rows, tile_n, min_grid_steps)
    n_pad = _round_up(n_rows, tile)
    xT = jnp.pad(jnp.asarray(x, jnp.float32).T, ((0, 0), (0, n_pad - n_rows)))
    return xT, n_rows, tile


def _coordnet_kernel(n_layers, last_vpu, *refs):
    """refs = (xT_ref, w0, b0, ..., w_{L-1}, b_{L-1}, outT_ref).

    Activations stay transposed: (features, tile_n). Weights are (dout, din) with w0
    already folded in, so each layer is h <- W @ h + b, sin() after all but the last.
    When last_vpu, the final weight ref is an (din, 1) column and the layer runs as a
    broadcast-multiply + cross-sublane reduce (keeps the M=1 pass off the MXU)."""
    xT_ref = refs[0]
    outT_ref = refs[-1]
    wb_refs = refs[1:-1]

    h = xT_ref[...]                                          # (in_features, tile_n) f32
    for li in range(n_layers):
        w = wb_refs[2 * li][...]
        b = wb_refs[2 * li + 1][...].astype(jnp.float32)     # (dout,1) -> lane broadcast
        if li == n_layers - 1 and last_vpu:
            # (din,1) * (din,tile) -> sublane reduce on the XLU; MXU stays idle here.
            h = jnp.sum(w.astype(jnp.float32) * h, axis=0, keepdims=True) + b
        else:
            h = jnp.dot(w, h.astype(w.dtype),
                        preferred_element_type=jnp.float32) + b
        if li < n_layers - 1:
            h = jnp.sin(h)                                   # w0 already folded into w/b
    outT_ref[...] = h.astype(outT_ref.dtype)                 # lane-dense store


def coordinate_net_forward_prepared(xT, n_valid, folded, last_vpu, *, tile_n,
                                    vmem_limit_bytes=None):
    """Run the Pallas kernel on already-prepared (transposed, padded) coords + params."""
    in_features, n_pad = xT.shape
    assert n_pad % tile_n == 0
    n_layers = len(folded)
    out_features = folded[-1][1].shape[0]
    grid = (n_pad // tile_n,)

    flat_args = []
    in_specs = [pl.BlockSpec((in_features, tile_n), lambda i: (0, i))]
    for (W, b) in folded:
        flat_args.extend([W, b])
        in_specs.append(pl.BlockSpec(W.shape, lambda i: (0, 0)))   # grid-invariant -> resident
        in_specs.append(pl.BlockSpec(b.shape, lambda i: (0, 0)))

    # Advisory cost estimate for XLA scheduling.
    flops = 0
    transcendentals = 0
    max_width = in_features
    for li, (W, b) in enumerate(folded):
        dout = b.shape[0]
        din = W.shape[0] if (li == n_layers - 1 and last_vpu) else W.shape[1]
        max_width = max(max_width, din, dout)
        flops += 2 * n_pad * din * dout + n_pad * dout
        if li < n_layers - 1:
            transcendentals += n_pad * dout
    bytes_accessed = (xT.size + n_pad * out_features) * 4
    bytes_accessed += sum(int(W.size) * W.dtype.itemsize + int(b.size) * 4
                          for W, b in folded)

    if vmem_limit_bytes is None:
        # double-buffered in/out tiles + a few live (max_width, tile_n) f32 temporaries,
        # 2x safety margin, clamped so it stays legal on v5e/v6e/v7x.
        est = 4 * tile_n * (2 * in_features + 2 * out_features + 4 * max_width) + (4 << 20)
        vmem_limit_bytes = int(min(max(2 * est, 32 << 20), 48 << 20))

    outT = pl.pallas_call(
        functools.partial(_coordnet_kernel, n_layers, last_vpu),
        out_shape=jax.ShapeDtypeStruct((out_features, n_pad), jnp.float32),
        grid_spec=pltpu.PrefetchScalarGridSpec(
            num_scalar_prefetch=0,
            grid=grid,
            in_specs=in_specs,
            out_specs=pl.BlockSpec((out_features, tile_n), lambda i: (0, i)),
        ),
        compiler_params=pltpu.CompilerParams(
            dimension_semantics=("parallel",),
            vmem_limit_bytes=vmem_limit_bytes),
        cost_estimate=pl.CostEstimate(
            flops=flops,
            transcendentals=transcendentals,
            bytes_accessed=bytes_accessed),
    )(xT, *flat_args)

    return outT[:, :n_valid].T                               # (N, out_features)


def coordinate_net_forward(x, params, *, tile_n=8192, min_grid_steps=2,
                           hidden_in_bf16=False):
    """x: (N, in_features) float32; params: PyTorch-layout [(W,b), ...]."""
    folded, last_vpu = prepare_params(params, hidden_in_bf16=hidden_in_bf16)
    xT, n_valid, tile = prepare_coords(x, tile_n=tile_n, min_grid_steps=min_grid_steps)
    return coordinate_net_forward_prepared(xT, n_valid, folded, last_vpu, tile_n=tile)


def init_coordinate_net_params(key, in_features=3, hidden_features=64,
                               num_hidden_layers=3, out_features=1):
    """Deterministic synthetic init mirroring FCBlock's sine init scheme (PyTorch layout).

    first layer  : W ~ U(-1/in, 1/in)                          (first_layer_sine_init)
    other layers : W ~ U(-sqrt(6/in)/30, sqrt(6/in)/30)         (sine_init, w0=30)
    biases       : U(-1/sqrt(in), 1/sqrt(in))                   (nn.Linear default)
    """
    dims = [in_features] + [hidden_features] * (num_hidden_layers + 1) + [out_features]
    params = []
    for li in range(len(dims) - 1):
        din, dout = dims[li], dims[li + 1]
        key, kw, kb = jax.random.split(key, 3)
        if li == 0:
            w_bound = 1.0 / din
        else:
            w_bound = math.sqrt(6.0 / din) / 30.0
        W = jax.random.uniform(kw, (dout, din), jnp.float32, -w_bound, w_bound)
        b_bound = 1.0 / math.sqrt(din)
        b = jax.random.uniform(kb, (dout,), jnp.float32, -b_bound, b_bound)
        params.append((W, b))
    return params


def _reference_forward(x, params):
    """Pure-JAX reference matching the PyTorch module (nl='sine', w0=20)."""
    h = x
    n_layers = len(params)
    for li, (W, b) in enumerate(params):
        h = h @ W.T + b
        if li < n_layers - 1:
            h = jnp.sin(SINE_W0 * h)
    return h


if __name__ == "__main__":
    key = jax.random.PRNGKey(0)

    # Small-but-consistent shapes: 3-D coords, hidden width 64, 3 hidden layers, scalar out.
    in_features, hidden_features, num_hidden_layers, out_features = 3, 64, 3, 1

    params = init_coordinate_net_params(
        key, in_features=in_features, hidden_features=hidden_features,
        num_hidden_layers=num_hidden_layers, out_features=out_features)

    # Case 1: tile-aligned N (splits into 2 grid steps -> exercises the v7x 2-TC path).
    key, kx = jax.random.split(key)
    x = jax.random.uniform(kx, (256, in_features), jnp.float32, -1.0, 1.0)
    out = jax.block_until_ready(coordinate_net_forward(x, params))
    ref = _reference_forward(x, params)
    assert out.shape == (256, out_features)
    assert jnp.max(jnp.abs(out - ref)) < 2e-4, "Pallas output mismatch vs JAX reference"

    # Case 2: ragged N (exercises padding + result slicing, single grid step).
    key, kx2 = jax.random.split(key)
    x2 = jax.random.uniform(kx2, (77, in_features), jnp.float32, -1.0, 1.0)
    out2 = jax.block_until_ready(coordinate_net_forward(x2, params))
    ref2 = _reference_forward(x2, params)
    assert out2.shape == (77, out_features)
    assert jnp.max(jnp.abs(out2 - ref2)) < 2e-4, "Pallas output mismatch (ragged N)"

    # Case 3: prepared-input path (coords/params reused across calls) + opt-in bf16 knob.
    folded_bf, last_vpu = prepare_params(params, hidden_in_bf16=True)
    xT, n_valid, tile = prepare_coords(x)
    out_bf = jax.block_until_ready(
        coordinate_net_forward_prepared(xT, n_valid, folded_bf, last_vpu, tile_n=tile))
    assert out_bf.shape == (256, out_features)
    assert bool(jnp.all(jnp.isfinite(out_bf)))
    assert jnp.max(jnp.abs(out_bf - ref)) < 1e-1, "bf16 opt-in path drifted too far"

    print("KERNEL_OK")
</pallas_src>

<mosaic_0001>
module attributes {stable_mosaic.version = 11 : i64} {
  func.func @_coordnet_kernel(%arg0: i32, %arg1: memref<3x128xf32, #tpu.memory_space<vmem>>, %arg2: memref<64x3xf32, #tpu.memory_space<vmem>>, %arg3: memref<64x1xf32, #tpu.memory_space<vmem>>, %arg4: memref<64x64xf32, #tpu.memory_space<vmem>>, %arg5: memref<64x1xf32, #tpu.memory_space<vmem>>, %arg6: memref<64x64xf32, #tpu.memory_space<vmem>>, %arg7: memref<64x1xf32, #tpu.memory_space<vmem>>, %arg8: memref<64x64xf32, #tpu.memory_space<vmem>>, %arg9: memref<64x1xf32, #tpu.memory_space<vmem>>, %arg10: memref<64x1xf32, #tpu.memory_space<vmem>>, %arg11: memref<1x1xf32, #tpu.memory_space<vmem>>, %arg12: memref<1x128xf32, #tpu.memory_space<vmem>>) attributes {dimension_semantics = [#tpu.dimension_semantics<parallel>], iteration_bounds = array<i64: 2>, scalar_prefetch = 0 : i64, scratch_operands = 0 : i64, tpu.core_type = #tpu.core_type<tc>, window_params = [{transform_indices = @transform_0, window_bounds = array<i64: 3, 128>}, {pipeline_mode = #tpu.pipeline_mode<synchronous>, transform_indices = @transform_1, window_bounds = array<i64: 64, 3>}, {pipeline_mode = #tpu.pipeline_mode<synchronous>, transform_indices = @transform_2, window_bounds = array<i64: 64, 1>}, {pipeline_mode = #tpu.pipeline_mode<synchronous>, transform_indices = @transform_3, window_bounds = array<i64: 64, 64>}, {pipeline_mode = #tpu.pipeline_mode<synchronous>, transform_indices = @transform_4, window_bounds = array<i64: 64, 1>}, {pipeline_mode = #tpu.pipeline_mode<synchronous>, transform_indices = @transform_5, window_bounds = array<i64: 64, 64>}, {pipeline_mode = #tpu.pipeline_mode<synchronous>, transform_indices = @transform_6, window_bounds = array<i64: 64, 1>}, {pipeline_mode = #tpu.pipeline_mode<synchronous>, transform_indices = @transform_7, window_bounds = array<i64: 64, 64>}, {pipeline_mode = #tpu.pipeline_mode<synchronous>, transform_indices = @transform_8, window_bounds = array<i64: 64, 1>}, {pipeline_mode = #tpu.pipeline_mode<synchronous>, transform_indices = @transform_9, window_bounds = array<i64: 64, 1>}, {pipeline_mode = #tpu.pipeline_mode<synchronous>, transform_indices = @transform_10, window_bounds = array<i64: 1, 1>}, {transform_indices = @transform_11, window_bounds = array<i64: 1, 128>}]} {
    %c0 = arith.constant 0 : index
    %c0_0 = arith.constant 0 : index
    %0 = vector.load %arg1[%c0, %c0_0] : memref<3x128xf32, #tpu.memory_space<vmem>>, vector<3x128xf32>
    %c0_1 = arith.constant 0 : index
    %c0_2 = arith.constant 0 : index
    %1 = vector.load %arg2[%c0_1, %c0_2] : memref<64x3xf32, #tpu.memory_space<vmem>>, vector<64x3xf32>
    %c0_3 = arith.constant 0 : index
    %c0_4 = arith.constant 0 : index
    %2 = vector.load %arg3[%c0_3, %c0_4] : memref<64x1xf32, #tpu.memory_space<vmem>>, vector<64x1xf32>
    %cst = arith.constant dense<0.000000e+00> : vector<64x128xf32>
    %3 = tpu.matmul %1, %0, %cst {dimension_numbers = #tpu.dot_dimension_numbers<[1], [0], [0], [1], [0, 0, 1, 1], [], []>} : vector<64x3xf32>, vector<3x128xf32>, vector<64x128xf32> -> vector<64x128xf32>
    %4 = vector.broadcast %2 : vector<64x1xf32> to vector<64x128xf32>
    %5 = arith.addf %3, %4 : vector<64x128xf32>
    %6 = math.sin %5 : vector<64x128xf32>
    %c0_5 = arith.constant 0 : index
    %c0_6 = arith.constant 0 : index
    %7 = vector.load %arg4[%c0_5, %c0_6] : memref<64x64xf32, #tpu.memory_space<vmem>>, vector<64x64xf32>
    %c0_7 = arith.constant 0 : index
    %c0_8 = arith.constant 0 : index
    %8 = vector.load %arg5[%c0_7, %c0_8] : memref<64x1xf32, #tpu.memory_space<vmem>>, vector<64x1xf32>
    %cst_9 = arith.constant dense<0.000000e+00> : vector<64x128xf32>
    %9 = tpu.matmul %7, %6, %cst_9 {dimension_numbers = #tpu.dot_dimension_numbers<[1], [0], [0], [1], [0, 0, 1, 1], [], []>} : vector<64x64xf32>, vector<64x128xf32>, vector<64x128xf32> -> vector<64x128xf32>
    %10 = vector.broadcast %8 : vector<64x1xf32> to vector<64x128xf32>
    %11 = arith.addf %9, %10 : vector<64x128xf32>
    %12 = math.sin %11 : vector<64x128xf32>
    %c0_10 = arith.constant 0 : index
    %c0_11 = arith.constant 0 : index
    %13 = vector.load %arg6[%c0_10, %c0_11] : memref<64x64xf32, #tpu.memory_space<vmem>>, vector<64x64xf32>
    %c0_12 = arith.constant 0 : index
    %c0_13 = arith.constant 0 : index
    %14 = vector.load %arg7[%c0_12, %c0_13] : memref<64x1xf32, #tpu.memory_space<vmem>>, vector<64x1xf32>
    %cst_14 = arith.constant dense<0.000000e+00> : vector<64x128xf32>
    %15 = tpu.matmul %13, %12, %cst_14 {dimension_numbers = #tpu.dot_dimension_numbers<[1], [0], [0], [1], [0, 0, 1, 1], [], []>} : vector<64x64xf32>, vector<64x128xf32>, vector<64x128xf32> -> vector<64x128xf32>
    %16 = vector.broadcast %14 : vector<64x1xf32> to vector<64x128xf32>
    %17 = arith.addf %15, %16 : vector<64x128xf32>
    %18 = math.sin %17 : vector<64x128xf32>
    %c0_15 = arith.constant 0 : index
    %c0_16 = arith.constant 0 : index
    %19 = vector.load %arg8[%c0_15, %c0_16] : memref<64x64xf32, #tpu.memory_space<vmem>>, vector<64x64xf32>
    %c0_17 = arith.constant 0 : index
    %c0_18 = arith.constant 0 : index
    %20 = vector.load %arg9[%c0_17, %c0_18] : memref<64x1xf32, #tpu.memory_space<vmem>>, vector<64x1xf32>
    %cst_19 = arith.constant dense<0.000000e+00> : vector<64x128xf32>
    %21 = tpu.matmul %19, %18, %cst_19 {dimension_numbers = #tpu.dot_dimension_numbers<[1], [0], [0], [1], [0, 0, 1, 1], [], []>} : vector<64x64xf32>, vector<64x128xf32>, vector<64x128xf32> -> vector<64x128xf32>
    %22 = vector.broadcast %20 : vector<64x1xf32> to vector<64x128xf32>
    %23 = arith.addf %21, %22 : vector<64x128xf32>
    %24 = math.sin %23 : vector<64x128xf32>
    %c0_20 = arith.constant 0 : index
    %c0_21 = arith.constant 0 : index
    %25 = vector.load %arg10[%c0_20, %c0_21] : memref<64x1xf32, #tpu.memory_space<vmem>>, vector<64x1xf32>
    %c0_22 = arith.constant 0 : index
    %c0_23 = arith.constant 0 : index
    %26 = vector.load %arg11[%c0_22, %c0_23] : memref<1x1xf32, #tpu.memory_space<vmem>>, vector<1x1xf32>
    %27 = vector.broadcast %25 : vector<64x1xf32> to vector<64x128xf32>
    %28 = arith.mulf %27, %24 : vector<64x128xf32>
    %cst_24 = arith.constant dense<0.000000e+00> : vector<128xf32>
    %29 = vector.multi_reduction <add>, %28, %cst_24 [0] : vector<64x128xf32> to vector<128xf32>
    %30 = vector.shape_cast %29 : vector<128xf32> to vector<1x128xf32>
    %31 = vector.broadcast %26 : vector<1x1xf32> to vector<1x128xf32>
    %32 = arith.addf %30, %31 : vector<1x128xf32>
    %c0_25 = arith.constant 0 : index
    %c0_26 = arith.constant 0 : index
    %33 = vector.load %arg12[%c0_25, %c0_26] : memref<1x128xf32, #tpu.memory_space<vmem>>, vector<1x128xf32>
    tpu.vector_store %arg12[%c0_25, %c0_26], %32 {strides = array<i32>} : memref<1x128xf32, #tpu.memory_space<vmem>>, vector<1x128xf32>,
    return
  }
  func.func @transform_0(%arg0: i32) -> (i32, i32) {
    %c0_i32 = arith.constant 0 : i32
    %c0_i32_0 = arith.constant 0 : i32
    return %c0_i32, %arg0 : i32, i32
  }
  func.func @transform_1(%arg0: i32) -> (i32, i32) {
    %c0_i32 = arith.constant 0 : i32
    %c0_i32_0 = arith.constant 0 : i32
    %c0_i32_1 = arith.constant 0 : i32
    return %c0_i32, %c0_i32_0 : i32, i32
  }
  func.func @transform_2(%arg0: i32) -> (i32, i32) {
    %c0_i32 = arith.constant 0 : i32
    %c0_i32_0 = arith.constant 0 : i32
    %c0_i32_1 = arith.constant 0 : i32
    return %c0_i32, %c0_i32_0 : i32, i32
  }
  func.func @transform_3(%arg0: i32) -> (i32, i32) {
    %c0_i32 = arith.constant 0 : i32
    %c0_i32_0 = arith.constant 0 : i32
    %c0_i32_1 = arith.constant 0 : i32
    return %c0_i32, %c0_i32_0 : i32, i32
  }
  func.func @transform_4(%arg0: i32) -> (i32, i32) {
    %c0_i32 = arith.constant 0 : i32
    %c0_i32_0 = arith.constant 0 : i32
    %c0_i32_1 = arith.constant 0 : i32
    return %c0_i32, %c0_i32_0 : i32, i32
  }
  func.func @transform_5(%arg0: i32) -> (i32, i32) {
    %c0_i32 = arith.constant 0 : i32
    %c0_i32_0 = arith.constant 0 : i32
    %c0_i32_1 = arith.constant 0 : i32
    return %c0_i32, %c0_i32_0 : i32, i32
  }
  func.func @transform_6(%arg0: i32) -> (i32, i32) {
    %c0_i32 = arith.constant 0 : i32
    %c0_i32_0 = arith.constant 0 : i32
    %c0_i32_1 = arith.constant 0 : i32
    return %c0_i32, %c0_i32_0 : i32, i32
  }
  func.func @transform_7(%arg0: i32) -> (i32, i32) {
    %c0_i32 = arith.constant 0 : i32
    %c0_i32_0 = arith.constant 0 : i32
    %c0_i32_1 = arith.constant 0 : i32
    return %c0_i32, %c0_i32_0 : i32, i32
  }
  func.func @transform_8(%arg0: i32) -> (i32, i32) {
    %c0_i32 = arith.constant 0 : i32
    %c0_i32_0 = arith.constant 0 : i32
    %c0_i32_1 = arith.constant 0 : i32
    return %c0_i32, %c0_i32_0 : i32, i32
  }
  func.func @transform_9(%arg0: i32) -> (i32, i32) {
    %c0_i32 = arith.constant 0 : i32
    %c0_i32_0 = arith.constant 0 : i32
    %c0_i32_1 = arith.constant 0 : i32
    return %c0_i32, %c0_i32_0 : i32, i32
  }
  func.func @transform_10(%arg0: i32) -> (i32, i32) {
    %c0_i32 = arith.constant 0 : i32
    %c0_i32_0 = arith.constant 0 : i32
    %c0_i32_1 = arith.constant 0 : i32
    return %c0_i32, %c0_i32_0 : i32, i32
  }
  func.func @transform_11(%arg0: i32) -> (i32, i32) {
    %c0_i32 = arith.constant 0 : i32
    %c0_i32_0 = arith.constant 0 : i32
    return %c0_i32, %arg0 : i32, i32
  }
}

</mosaic_0001>

<llo_original>
// kernel: tpu_custom_call.1
$region0: #{tpu_custom_call.1}
  #allocation0 [shape = 'u32[]', space=smem, size = 0x4, offset = 0x4, fixed_abs, tag = 'smem constant byte address 0x4 - core index']
  #allocation1 [shape = 'u32[144,128]{1,0:T(1,128)}', space=vmem, size = 0x12000, scoped, tag = 'internal scratch']
  #allocation2 [shape = 'f32[1,1]{1,0:T(1,128)S(1)}', space=vmem, size = 0x200, scoped, tag = 'scoped memory for tpu_custom_call.1']
  %s0 = inlined_call_operand.vmem [shape: f32[3,256], index: 0, kind: input, shape index: {}]
  %s1 = inlined_call_operand.vmem [shape: f32[64,3], index: 1, kind: input, shape index: {}]
  %s2 = inlined_call_operand.vmem [shape: f32[64,1], index: 2, kind: input, shape index: {}]
  %s3 = inlined_call_operand.vmem [shape: f32[64,64], index: 3, kind: input, shape index: {}]
  %s4 = inlined_call_operand.vmem [shape: f32[64,1], index: 4, kind: input, shape index: {}]
  %s5 = inlined_call_operand.vmem [shape: f32[64,64], index: 5, kind: input, shape index: {}]
  %s6 = inlined_call_operand.vmem [shape: f32[64,1], index: 6, kind: input, shape index: {}]
  %s7 = inlined_call_operand.vmem [shape: f32[64,64], index: 7, kind: input, shape index: {}]
  %s8 = inlined_call_operand.vmem [shape: f32[64,1], index: 8, kind: input, shape index: {}]
  %s9 = inlined_call_operand.vmem [shape: f32[64,1], index: 9, kind: input, shape index: {}]
  %s10 = inlined_call_operand.<no memory space> [shape: f32[1,1], index: 10, kind: input, shape index: {}]
  %s11 = inlined_call_operand.hbm [shape: f32[1,256], index: 11, kind: output, shape index: {}]
  %s12 = sld [smem:[#allocation0]]
  $region77: #{tpu_custom_call.1} parent=0
    _
  %s14 = ssub.s32 1, %s12
  %s15 = scalar_select 0, %s14, %s12
  %v16 = vstv %s10
  %17 = vst [vmem:[#allocation2] sm:$0x1] %v16
  $region1: #{tpu_custom_call.1} parent=0
    #allocation3 [shape = 'u8[1024]{0}', space=vmem, size = 0x400, scoped, tag = 'output window, operand 0']
    #allocation4 [shape = 's32[2]{0}', space=sflag, size = 0x8, scoped, tag = 'scoped memory for tpu_custom_call.1']
    %18 = vsyncpa [#allocation4], 0
    %s19 = scalar_lea.sflag [#allocation4], 1
    %20 = vsyncpa %s19, 0
    loop: start=0, step=1, limit=4
    $region2: #{tpu_custom_call.1} parent=1 // loop_pre_header
      _
    $region3: #{tpu_custom_call.1} parent=1 // loop_header
      %s22 = sphi 0, %s26
      %p23 = scmp.ge.s32.totalorder %s22, 4
      %s32 = sphi 0, %s34
      %s35 = sphi 0, %s32
      %s36 = sphi 0, %s35
      %s52 = sphi 0, %s36
      %s56 = sphi 0, %s56
      %s58 = sphi 0, %s56
      %s59 = sphi 0, %s58
      %s73 = sphi 0, %s59
      %s77 = sphi 0, %s77
      %s79 = sphi 0, %s77
      %s80 = sphi 0, %s79
      %s94 = sphi 0, %s80
      %s98 = sphi 0, %s98
      %s100 = sphi 0, %s98
      %s101 = sphi 0, %s100
      %s115 = sphi 0, %s101
      %s119 = sphi 0, %s119
      %s121 = sphi 0, %s119
      %s122 = sphi 0, %s121
      %s136 = sphi 0, %s122
      %s140 = sphi 0, %s140
      %s142 = sphi 0, %s140
      %s143 = sphi 0, %s142
      %s157 = sphi 0, %s143
      %s161 = sphi 0, %s161
      %s163 = sphi 0, %s161
      %s164 = sphi 0, %s163
      %s178 = sphi 0, %s164
      %s182 = sphi 0, %s182
      %s184 = sphi 0, %s182
      %s185 = sphi 0, %s184
      %s199 = sphi 0, %s185
      %s203 = sphi 0, %s203
      %s205 = sphi 0, %s203
      %s206 = sphi 0, %s205
      %s220 = sphi 0, %s206
      %s224 = sphi 0, %s224
      %s226 = sphi 0, %s224
      %s227 = sphi 0, %s226
      %s241 = sphi 0, %s227
      %s245 = sphi 0, %s245
      %s247 = sphi 0, %s245
      %s248 = sphi 0, %s247
      %s262 = sphi 0, %s248
      %s268 = sphi 0, %s270
      %s271 = sphi 0, %s268
      %s272 = sphi 0, %s271
      %s288 = sphi 0, %s272
    $region4: #{tpu_custom_call.1} parent=1 // loop_header_branch
      %25 = sbr.rel (%p23) target = $region8
    $region5: #{tpu_custom_call.1} parent=1 // loop_body
      %s27 = ssub.s32 %s22, 1
      %s28 = ssub.s32 %s22, 2
      %s29 = sadd.s32 %s22, 1
      %s30 = ssub.s32 %s22, %s29
      %p31 = scmp.eq.s32.totalorder %s30, 0
      %s33 = sadd.s32 %s32, 1
      %s34 = scalar_select %p31, %s32, %s33
      %p37 = pneg %p31
      %p38 = scmp.eq.s32.totalorder %s22, 1
      %p39 = por %p37, %p38
      %p40 = scmp.ne.s32.totalorder %s32, %s35
      %p41 = scmp.eq.s32.totalorder %s22, 0
      %p42 = por %p40, %p41
      %p43 = scmp.ne.s32.totalorder %s32, %s35
      %p44 = scmp.eq.s32.totalorder %s27, 1
      %p45 = por %p43, %p44
      %p46 = scmp.ne.s32.totalorder %s35, %s36
      %p47 = scmp.eq.s32.totalorder %s27, 0
      %p48 = por %p46, %p47
      %p49 = scmp.ne.s32.totalorder %s35, %s36
      %p50 = scmp.eq.s32.totalorder %s28, 1
      %p51 = por %p49, %p50
      %p53 = scmp.ne.s32.totalorder %s36, %s52
      %p54 = scmp.eq.s32.totalorder %s28, 0
      %p55 = por %p53, %p54
      %s57 = sadd.s32 %s56, 1
      %p60 = scmp.eq.s32.totalorder %s22, 1
      %p61 = scmp.ne.s32.totalorder %s56, %s58
      %p62 = scmp.eq.s32.totalorder %s22, 0
      %p63 = por %p61, %p62
      %p64 = scmp.ne.s32.totalorder %s56, %s58
      %p65 = scmp.eq.s32.totalorder %s27, 1
      %p66 = por %p64, %p65
      %p67 = scmp.ne.s32.totalorder %s58, %s59
      %p68 = scmp.eq.s32.totalorder %s27, 0
      %p69 = por %p67, %p68
      %p70 = scmp.ne.s32.totalorder %s58, %s59
      %p71 = scmp.eq.s32.totalorder %s28, 1
      %p72 = por %p70, %p71
      %p74 = scmp.ne.s32.totalorder %s59, %s73
      %p75 = scmp.eq.s32.totalorder %s28, 0
      %p76 = por %p74, %p75
      %s78 = sadd.s32 %s77, 1
      %p81 = scmp.eq.s32.totalorder %s22, 1
      %p82 = scmp.ne.s32.totalorder %s77, %s79
      %p83 = scmp.eq.s32.totalorder %s22, 0
      %p84 = por %p82, %p83
      %p85 = scmp.ne.s32.totalorder %s77, %s79
      %p86 = scmp.eq.s32.totalorder %s27, 1
      %p87 = por %p85, %p86
      %p88 = scmp.ne.s32.totalorder %s79, %s80
      %p89 = scmp.eq.s32.totalorder %s27, 0
      %p90 = por %p88, %p89
      %p91 = scmp.ne.s32.totalorder %s79, %s80
      %p92 = scmp.eq.s32.totalorder %s28, 1
      %p93 = por %p91, %p92
      %p95 = scmp.ne.s32.totalorder %s80, %s94
      %p96 = scmp.eq.s32.totalorder %s28, 0
      %p97 = por %p95, %p96
      %s99 = sadd.s32 %s98, 1
      %p102 = scmp.eq.s32.totalorder %s22, 1
      %p103 = scmp.ne.s32.totalorder %s98, %s100
      %p104 = scmp.eq.s32.totalorder %s22, 0
      %p105 = por %p103, %p104
      %p106 = scmp.ne.s32.totalorder %s98, %s100
      %p107 = scmp.eq.s32.totalorder %s27, 1
      %p108 = por %p106, %p107
      %p109 = scmp.ne.s32.totalorder %s100, %s101
      %p110 = scmp.eq.s32.totalorder %s27, 0
      %p111 = por %p109, %p110
      %p112 = scmp.ne.s32.totalorder %s100, %s101
      %p113 = scmp.eq.s32.totalorder %s28, 1
      %p114 = por %p112, %p113
      %p116 = scmp.ne.s32.totalorder %s101, %s115
      %p117 = scmp.eq.s32.totalorder %s28, 0
      %p118 = por %p116, %p117
      %s120 = sadd.s32 %s119, 1
      %p123 = scmp.eq.s32.totalorder %s22, 1
      %p124 = scmp.ne.s32.totalorder %s119, %s121
      %p125 = scmp.eq.s32.totalorder %s22, 0
      %p126 = por %p124, %p125
      %p127 = scmp.ne.s32.totalorder %s119, %s121
      %p128 = scmp.eq.s32.totalorder %s27, 1
      %p129 = por %p127, %p128
      %p130 = scmp.ne.s32.totalorder %s121, %s122
      %p131 = scmp.eq.s32.totalorder %s27, 0
      %p132 = por %p130, %p131
      %p133 = scmp.ne.s32.totalorder %s121, %s122
      %p134 = scmp.eq.s32.totalorder %s28, 1
      %p135 = por %p133, %p134
      %p137 = scmp.ne.s32.totalorder %s122, %s136
      %p138 = scmp.eq.s32.totalorder %s28, 0
      %p139 = por %p137, %p138
      %s141 = sadd.s32 %s140, 1
      %p144 = scmp.eq.s32.totalorder %s22, 1
      %p145 = scmp.ne.s32.totalorder %s140, %s142
      %p146 = scmp.eq.s32.totalorder %s22, 0
      %p147 = por %p145, %p146
      %p148 = scmp.ne.s32.totalorder %s140, %s142
      %p149 = scmp.eq.s32.totalorder %s27, 1
      %p150 = por %p148, %p149
      %p151 = scmp.ne.s32.totalorder %s142, %s143
      %p152 = scmp.eq.s32.totalorder %s27, 0
      %p153 = por %p151, %p152
      %p154 = scmp.ne.s32.totalorder %s142, %s143
      %p155 = scmp.eq.s32.totalorder %s28, 1
      %p156 = por %p154, %p155
      %p158 = scmp.ne.s32.totalorder %s143, %s157
      %p159 = scmp.eq.s32.totalorder %s28, 0
      %p160 = por %p158, %p159
      %s162 = sadd.s32 %s161, 1
      %p165 = scmp.eq.s32.totalorder %s22, 1
      %p166 = scmp.ne.s32.totalorder %s161, %s163
      %p167 = scmp.eq.s32.totalorder %s22, 0
      %p168 = por %p166, %p167
      %p169 = scmp.ne.s32.totalorder %s161, %s163
      %p170 = scmp.eq.s32.totalorder %s27, 1
      %p171 = por %p169, %p170
      %p172 = scmp.ne.s32.totalorder %s163, %s164
      %p173 = scmp.eq.s32.totalorder %s27, 0
      %p174 = por %p172, %p173
      %p175 = scmp.ne.s32.totalorder %s163, %s164
      %p176 = scmp.eq.s32.totalorder %s28, 1
      %p177 = por %p175, %p176
      %p179 = scmp.ne.s32.totalorder %s164, %s178
      %p180 = scmp.eq.s32.totalorder %s28, 0
      %p181 = por %p179, %p180
      %s183 = sadd.s32 %s182, 1
      %p186 = scmp.eq.s32.totalorder %s22, 1
      %p187 = scmp.ne.s32.totalorder %s182, %s184
      %p188 = scmp.eq.s32.totalorder %s22, 0
      %p189 = por %p187, %p188
      %p190 = scmp.ne.s32.totalorder %s182, %s184
      %p191 = scmp.eq.s32.totalorder %s27, 1
      %p192 = por %p190, %p191
      %p193 = scmp.ne.s32.totalorder %s184, %s185
      %p194 = scmp.eq.s32.totalorder %s27, 0
      %p195 = por %p193, %p194
      %p196 = scmp.ne.s32.totalorder %s184, %s185
      %p197 = scmp.eq.s32.totalorder %s28, 1
      %p198 = por %p196, %p197
      %p200 = scmp.ne.s32.totalorder %s185, %s199
      %p201 = scmp.eq.s32.totalorder %s28, 0
      %p202 = por %p200, %p201
      %s204 = sadd.s32 %s203, 1
      %p207 = scmp.eq.s32.totalorder %s22, 1
      %p208 = scmp.ne.s32.totalorder %s203, %s205
      %p209 = scmp.eq.s32.totalorder %s22, 0
      %p210 = por %p208, %p209
      %p211 = scmp.ne.s32.totalorder %s203, %s205
      %p212 = scmp.eq.s32.totalorder %s27, 1
      %p213 = por %p211, %p212
      %p214 = scmp.ne.s32.totalorder %s205, %s206
      %p215 = scmp.eq.s32.totalorder %s27, 0
      %p216 = por %p214, %p215
      %p217 = scmp.ne.s32.totalorder %s205, %s206
      %p218 = scmp.eq.s32.totalorder %s28, 1
      %p219 = por %p217, %p218
      %p221 = scmp.ne.s32.totalorder %s206, %s220
      %p222 = scmp.eq.s32.totalorder %s28, 0
      %p223 = por %p221, %p222
      %s225 = sadd.s32 %s224, 1
      %p228 = scmp.eq.s32.totalorder %s22, 1
      %p229 = scmp.ne.s32.totalorder %s224, %s226
      %p230 = scmp.eq.s32.totalorder %s22, 0
      %p231 = por %p229, %p230
      %p232 = scmp.ne.s32.totalorder %s224, %s226
      %p233 = scmp.eq.s32.totalorder %s27, 1
      %p234 = por %p232, %p233
      %p235 = scmp.ne.s32.totalorder %s226, %s227
      %p236 = scmp.eq.s32.totalorder %s27, 0
      %p237 = por %p235, %p236
      %p238 = scmp.ne.s32.totalorder %s226, %s227
      %p239 = scmp.eq.s32.totalorder %s28, 1
      %p240 = por %p238, %p239
      %p242 = scmp.ne.s32.totalorder %s227, %s241
      %p243 = scmp.eq.s32.totalorder %s28, 0
      %p244 = por %p242, %p243
      %s246 = sadd.s32 %s245, 1
      %p249 = scmp.eq.s32.totalorder %s22, 1
      %p250 = scmp.ne.s32.totalorder %s245, %s247
      %p251 = scmp.eq.s32.totalorder %s22, 0
      %p252 = por %p250, %p251
      %p253 = scmp.ne.s32.totalorder %s245, %s247
      %p254 = scmp.eq.s32.totalorder %s27, 1
      %p255 = por %p253, %p254
      %p256 = scmp.ne.s32.totalorder %s247, %s248
      %p257 = scmp.eq.s32.totalorder %s27, 0
      %p258 = por %p256, %p257
      %p259 = scmp.ne.s32.totalorder %s247, %s248
      %p260 = scmp.eq.s32.totalorder %s28, 1
      %p261 = por %p259, %p260
      %p263 = scmp.ne.s32.totalorder %s248, %s262
      %p264 = scmp.eq.s32.totalorder %s28, 0
      %p265 = por %p263, %p264
      %s266 = ssub.s32 %s22, %s29
      %p267 = scmp.eq.s32.totalorder %s266, 0
      %s269 = sadd.s32 %s268, 1
      %s270 = scalar_select %p267, %s268, %s269
      %p273 = pneg %p267
      %p274 = scmp.eq.s32.totalorder %s22, 1
      %p275 = por %p273, %p274
      %p276 = scmp.ne.s32.totalorder %s268, %s271
      %p277 = scmp.eq.s32.totalorder %s22, 0
      %p278 = por %p276, %p277
      %p279 = scmp.ne.s32.totalorder %s268, %s271
      %p280 = scmp.eq.s32.totalorder %s27, 1
      %p281 = por %p279, %p280
      %p282 = scmp.ne.s32.totalorder %s271, %s272
      %p283 = scmp.eq.s32.totalorder %s27, 0
      %p284 = por %p282, %p283
      %p285 = scmp.ne.s32.totalorder %s271, %s272
      %p286 = scmp.eq.s32.totalorder %s28, 1
      %p287 = por %p285, %p286
      %p289 = scmp.ne.s32.totalorder %s272, %s288
      %p290 = scmp.eq.s32.totalorder %s28, 0
      %p291 = por %p289, %p290
      %p292 = scmp.le.s32.totalorder 1, %s22
      %p293 = scmp.lt.s32.totalorder %s22, 3
      %p294 = pnand %p292, %p293
      %p295 = pneg %p294
      // Predicated region
      $region9: #{tpu_custom_call.1} parent=5 // pred_check
        _
      $region10: #{tpu_custom_call.1} parent=5 // pred_check_branch
        %297 = sbr.rel (%p294) target = $region12
      $region11: #{tpu_custom_call.1} parent=5 // pred_region
        %s298 = ssub.s32 %s22, 1
        // Predicated region
        $region13: #{tpu_custom_call.1} parent=11 // pred_check
          %p299 = pneg %p69
        $region14: #{tpu_custom_call.1} parent=11 // pred_check_branch
          %301 = sbr.rel (%p299) target = $region16
        $region15: #{tpu_custom_call.1} parent=11 // pred_region
          _
        $region16: #{tpu_custom_call.1} parent=11 // pred_fallthru
          _
        // Predicated region
        $region17: #{tpu_custom_call.1} parent=11 // pred_check
          %p302 = pneg %p90
        $region18: #{tpu_custom_call.1} parent=11 // pred_check_branch
          %304 = sbr.rel (%p302) target = $region20
        $region19: #{tpu_custom_call.1} parent=11 // pred_region
          _
        $region20: #{tpu_custom_call.1} parent=11 // pred_fallthru
          _
        // Predicated region
        $region21: #{tpu_custom_call.1} parent=11 // pred_check
          %p305 = pneg %p111
        $region22: #{tpu_custom_call.1} parent=11 // pred_check_branch
          %307 = sbr.rel (%p305) target = $region24
        $region23: #{tpu_custom_call.1} parent=11 // pred_region
          _
        $region24: #{tpu_custom_call.1} parent=11 // pred_fallthru
          _
        // Predicated region
        $region25: #{tpu_custom_call.1} parent=11 // pred_check
          %p308 = pneg %p132
        $region26: #{tpu_custom_call.1} parent=11 // pred_check_branch
          %310 = sbr.rel (%p308) target = $region28
        $region27: #{tpu_custom_call.1} parent=11 // pred_region
          _
        $region28: #{tpu_custom_call.1} parent=11 // pred_fallthru
          _
        // Predicated region
        $region29: #{tpu_custom_call.1} parent=11 // pred_check
          %p311 = pneg %p153
        $region30: #{tpu_custom_call.1} parent=11 // pred_check_branch
          %313 = sbr.rel (%p311) target = $region32
        $region31: #{tpu_custom_call.1} parent=11 // pred_region
          _
        $region32: #{tpu_custom_call.1} parent=11 // pred_fallthru
          _
        // Predicated region
        $region33: #{tpu_custom_call.1} parent=11 // pred_check
          %p314 = pneg %p174
        $region34: #{tpu_custom_call.1} parent=11 // pred_check_branch
          %316 = sbr.rel (%p314) target = $region36
        $region35: #{tpu_custom_call.1} parent=11 // pred_region
          _
        $region36: #{tpu_custom_call.1} parent=11 // pred_fallthru
          _
        // Predicated region
        $region37: #{tpu_custom_call.1} parent=11 // pred_check
          %p317 = pneg %p195
        $region38: #{tpu_custom_call.1} parent=11 // pred_check_branch
          %319 = sbr.rel (%p317) target = $region40
        $region39: #{tpu_custom_call.1} parent=11 // pred_region
          _
        $region40: #{tpu_custom_call.1} parent=11 // pred_fallthru
          _
        // Predicated region
        $region41: #{tpu_custom_call.1} parent=11 // pred_check
          %p320 = pneg %p216
        $region42: #{tpu_custom_call.1} parent=11 // pred_check_branch
          %322 = sbr.rel (%p320) target = $region44
        $region43: #{tpu_custom_call.1} parent=11 // pred_region
          _
        $region44: #{tpu_custom_call.1} parent=11 // pred_fallthru
          _
        // Predicated region
        $region45: #{tpu_custom_call.1} parent=11 // pred_check
          %p323 = pneg %p237
        $region46: #{tpu_custom_call.1} parent=11 // pred_check_branch
          %325 = sbr.rel (%p323) target = $region48
        $region47: #{tpu_custom_call.1} parent=11 // pred_region
          _
        $region48: #{tpu_custom_call.1} parent=11 // pred_fallthru
          _
        // Predicated region
        $region49: #{tpu_custom_call.1} parent=11 // pred_check
          %p326 = pneg %p258
        $region50: #{tpu_custom_call.1} parent=11 // pred_check_branch
          %328 = sbr.rel (%p326) target = $region52
        $region51: #{tpu_custom_call.1} parent=11 // pred_region
          _
        $region52: #{tpu_custom_call.1} parent=11 // pred_fallthru
          _
      $region12: #{tpu_custom_call.1} parent=5 // pred_fallthru
        _
      %p329 = scmp.lt.s32.totalorder %s22, 2
      // Predicated region
      $region53: #{tpu_custom_call.1} parent=5 // pred_check
        %p330 = pneg %p329
      $region54: #{tpu_custom_call.1} parent=5 // pred_check_branch
        %332 = sbr.rel (%p330) target = $region56
      $region55: #{tpu_custom_call.1} parent=5 // pred_region
        // Predicated region
        $region57: #{tpu_custom_call.1} parent=55 // pred_check
          %p333 = pneg %p42
        $region58: #{tpu_custom_call.1} parent=55 // pred_check_branch
          %335 = sbr.rel (%p333) target = $region60
        $region59: #{tpu_custom_call.1} parent=55 // pred_region
          %p336 = scmp.lt.s32.totalorder %s22, 1
          %s337 = scalar_select %p336, %s22, 1
          %s338 = smul.addr %s337, 4
          %s339 = scalar_lea.vmem %s0, %s338
        $region60: #{tpu_custom_call.1} parent=55 // pred_fallthru
          _
      $region56: #{tpu_custom_call.1} parent=5 // pred_fallthru
        _
      %p340 = scmp.le.s32.totalorder 1, %s22
      %p341 = scmp.lt.s32.totalorder %s22, 3
      %p342 = pnand %p340, %p341
      %p343 = pneg %p342
      // Predicated region
      $region61: #{tpu_custom_call.1} parent=5 // pred_check
        _
      $region62: #{tpu_custom_call.1} parent=5 // pred_check_branch
        %345 = sbr.rel (%p342) target = $region64
      $region63: #{tpu_custom_call.1} parent=5 // pred_region
        %s346 = ssub.s32 %s22, 1
        %p347 = scmp.lt.s32.totalorder %s27, 1
        %s348 = scalar_select %p347, %s27, 1
        %s349 = smul.addr %s348, 4
        %s350 = scalar_lea.vmem %s0, %s349
        %p351 = pneg %p48
        %p352 = pneg %p45
        %p353 = pneg %p69
        %p354 = pneg %p66
        %p355 = pneg %p90
        %p356 = pneg %p87
        %p357 = pneg %p111
        %p358 = pneg %p108
        %p359 = pneg %p132
        %p360 = pneg %p129
        %p361 = pneg %p153
        %p362 = pneg %p150
        %p363 = pneg %p174
        %p364 = pneg %p171
        %p365 = pneg %p195
        %p366 = pneg %p192
        %p367 = pneg %p216
        %p368 = pneg %p213
        %p369 = pneg %p237
        %p370 = pneg %p234
        %p371 = pneg %p258
        %p372 = pneg %p255
        %p373 = pneg %p284
        %p374 = pneg %p281
        %s375 = sand.u32 %s271, 1
        %s376 = scalar_lea.sflag [#allocation4], %s375
        %s377 = sand.u32 %s271, 1
        %s378 = scalar_lea.vmem [#allocation3], %s377
        %p379 = scmp.lt.s32.totalorder %s27, 1
        %s380 = scalar_select %p379, %s27, 1
        %s381 = smul.addr %s380, 4
        %s382 = scalar_lea.vmem %s0, %s381
        %v383 = vld [vmem:[%s382] sm:$0x7]
        %v384 = vld [vmem:[%s1] sm:$0xff]
        %v385 = vld [vmem:[%s1 + $0x8] sm:$0xff]
        %v386 = vld [vmem:[%s1 + $0x10] sm:$0xff]
        %v387 = vld [vmem:[%s1 + $0x18] sm:$0xff]
        %v388 = vld [vmem:[%s1 + $0x20] sm:$0xff]
        %v389 = vld [vmem:[%s1 + $0x28] sm:$0xff]
        %v390 = vld [vmem:[%s1 + $0x30] sm:$0xff]
        %v391 = vld [vmem:[%s1 + $0x38] sm:$0xff]
        %v392 = vld [vmem:[%s2] sm:$0xff]
        %v393 = vld [vmem:[%s2 + $0x8] sm:$0xff]
        %v394 = vld [vmem:[%s2 + $0x10] sm:$0xff]
        %v395 = vld [vmem:[%s2 + $0x18] sm:$0xff]
        %v396 = vld [vmem:[%s2 + $0x20] sm:$0xff]
        %v397 = vld [vmem:[%s2 + $0x28] sm:$0xff]
        %v398 = vld [vmem:[%s2 + $0x30] sm:$0xff]
        %v399 = vld [vmem:[%s2 + $0x38] sm:$0xff]
        %401 = vset.pattern.permute.xlu0 0
        %402 = vperm.xlu0 %401, %v392
        %v403 = vpop.permute.xlu0 %402
        %406 = vset.pattern.permute.xlu0 0
        %407 = vperm.xlu0 %406, %v393
        %v408 = vpop.permute.xlu0 %407
        %411 = vset.pattern.permute.xlu0 0
        %412 = vperm.xlu0 %411, %v394
        %v413 = vpop.permute.xlu0 %412
        %416 = vset.pattern.permute.xlu0 0
        %417 = vperm.xlu0 %416, %v395
        %v418 = vpop.permute.xlu0 %417
        %421 = vset.pattern.permute.xlu0 0
        %422 = vperm.xlu0 %421, %v396
        %v423 = vpop.permute.xlu0 %422
        %426 = vset.pattern.permute.xlu0 0
        %427 = vperm.xlu0 %426, %v397
        %v428 = vpop.permute.xlu0 %427
        %431 = vset.pattern.permute.xlu0 0
        %432 = vperm.xlu0 %431, %v398
        %v433 = vpop.permute.xlu0 %432
        %436 = vset.pattern.permute.xlu0 0
        %437 = vperm.xlu0 %436, %v399
        %v438 = vpop.permute.xlu0 %437
        %vm440 = vcmask 23552
        %v442 = vsel %vm440, %v384, 0
        %v445 = vsel %vm440, %v385, 0
        %v448 = vsel %vm440, %v386, 0
        %v451 = vsel %vm440, %v387, 0
        %v454 = vsel %vm440, %v388, 0
        %v457 = vsel %vm440, %v389, 0
        %v460 = vsel %vm440, %v390, 0
        %v463 = vsel %vm440, %v391, 0
        %vm465 = vcmask 1042432
        %v467 = vsel %vm465, %v383, 0
        %469 = vmatprep.subr.mxu0 0.0
        %470 = vmatpush1.msra.mxu0 %v467
        %471 = vmatprep.subr.mxu0 0.0
        %472 = vmatpush1.msra.mxu0 0.0
        %473 = vmatprep.subr.mxu0 0.0
        %474 = vmatpush1.msra.mxu0 0.0
        %475 = vmatprep.subr.mxu0 0.0
        %476 = vmatpush1.msra.mxu0 0.0
        %477 = vmatprep.subr.mxu0 0.0
        %478 = vmatpush1.msra.mxu0 0.0
        %479 = vmatprep.subr.mxu0 0.0
        %480 = vmatpush1.msra.mxu0 0.0
        %481 = vmatprep.subr.mxu0 0.0
        %482 = vmatpush1.msra.mxu0 0.0
        %483 = vmatprep.subr.mxu0 0.0
        %484 = vmatpush1.msra.mxu0 0.0
        %485 = vmatprep.subr.mxu0 0.0
        %486 = vmatpush1.msra.mxu0 0.0
        %487 = vmatprep.subr.mxu0 0.0
        %488 = vmatpush1.msra.mxu0 0.0
        %489 = vmatprep.subr.mxu0 0.0
        %490 = vmatpush1.msra.mxu0 0.0
        %491 = vmatprep.subr.mxu0 0.0
        %492 = vmatpush1.msra.mxu0 0.0
        %493 = vmatprep.subr.mxu0 0.0
        %494 = vmatpush1.msra.mxu0 0.0
        %495 = vmatprep.subr.mxu0 0.0
        %496 = vmatpush1.msra.mxu0 0.0
        %497 = vmatprep.subr.mxu0 0.0
        %498 = vmatpush1.msra.mxu0 0.0
        %499 = vmatprep.subr.mxu0 0.0
        %500 = vmatpush1.msra.mxu0 0.0
        %501 = vmatprep.subr.mxu0 0.0
        %502 = vmatpush1.msra.mxu0 0.0
        %503 = vmatprep.subr.mxu0 0.0
        %504 = vmatpush1.msra.mxu0 0.0
        %505 = vmatprep.subr.mxu0 0.0
        %506 = vmatpush1.msra.mxu0 0.0
        %507 = vmatprep.subr.mxu0 0.0
        %508 = vmatpush1.msra.mxu0 0.0
        %509 = vmatprep.subr.mxu0 0.0
        %510 = vmatpush1.msra.mxu0 0.0
        %511 = vmatprep.subr.mxu0 0.0
        %512 = vmatpush1.msra.mxu0 0.0
        %513 = vmatprep.subr.mxu0 0.0
        %514 = vmatpush1.msra.mxu0 0.0
        %515 = vmatprep.subr.mxu0 0.0
        %516 = vmatpush1.msra.mxu0 0.0
        %517 = vmatprep.subr.mxu0 0.0
        %518 = vmatpush1.msra.mxu0 0.0
        %519 = vmatprep.subr.mxu0 0.0
        %520 = vmatpush1.msra.mxu0 0.0
        %521 = vmatprep.subr.mxu0 0.0
        %522 = vmatpush1.msra.mxu0 0.0
        %523 = vmatprep.subr.mxu0 0.0
        %524 = vmatpush1.msra.mxu0 0.0
        %525 = vmatprep.subr.mxu0 0.0
        %526 = vmatpush1.msra.mxu0 0.0
        %527 = vmatprep.subr.mxu0 0.0
        %528 = vmatpush1.msra.mxu0 0.0
        %529 = vmatprep.subr.mxu0 0.0
        %530 = vmatpush1.msra.mxu0 0.0
        %531 = vmatprep.subr.mxu0 0.0
        %532 = vmatpush1.msra.mxu0 0.0
        %533 = vmatprep.mubr.f32.mxu0 0.0
        %534 = vmatmul.mubr.f32.gmra.mrb[0].mxu0 %v442
        %v535 = vpop.f32.mrb[0].mxu0
        %v536 = vadd.f32 %v403, %v535
        %v537 = vpop.f32.mrb[0].mxu0
        %538 = vmatprep.mubr.f32.mxu0 0.0
        %539 = vmatmul.mubr.f32.gmra.mrb[0].mxu0 %v445
        %v540 = vpop.f32.mrb[0].mxu0
        %v541 = vadd.f32 %v408, %v540
        %v542 = vpop.f32.mrb[0].mxu0
        %543 = vmatprep.mubr.f32.mxu0 0.0
        %544 = vmatmul.mubr.f32.gmra.mrb[0].mxu0 %v448
        %v545 = vpop.f32.mrb[0].mxu0
        %v546 = vadd.f32 %v413, %v545
        %v547 = vpop.f32.mrb[0].mxu0
        %548 = vmatprep.mubr.f32.mxu0 0.0
        %549 = vmatmul.mubr.f32.gmra.mrb[0].mxu0 %v451
        %v550 = vpop.f32.mrb[0].mxu0
        %v551 = vadd.f32 %v418, %v550
        %v552 = vpop.f32.mrb[0].mxu0
        %553 = vmatprep.mubr.f32.mxu0 0.0
        %554 = vmatmul.mubr.f32.gmra.mrb[0].mxu0 %v454
        %v555 = vpop.f32.mrb[0].mxu0
        %v556 = vadd.f32 %v423, %v555
        %v557 = vpop.f32.mrb[0].mxu0
        %558 = vmatprep.mubr.f32.mxu0 0.0
        %559 = vmatmul.mubr.f32.gmra.mrb[0].mxu0 %v457
        %v560 = vpop.f32.mrb[0].mxu0
        %v561 = vadd.f32 %v428, %v560
        %v562 = vpop.f32.mrb[0].mxu0
        %563 = vmatprep.mubr.f32.mxu0 0.0
        %564 = vmatmul.mubr.f32.gmra.mrb[0].mxu0 %v460
        %v565 = vpop.f32.mrb[0].mxu0
        %v566 = vadd.f32 %v433, %v565
        %v567 = vpop.f32.mrb[0].mxu0
        %568 = vmatprep.mubr.f32.mxu0 0.0
        %569 = vmatmul.mubr.f32.gmra.mrb[0].mxu0 %v463
        %v570 = vpop.f32.mrb[0].mxu0
        %v571 = vadd.f32 %v438, %v570
        %v572 = vpop.f32.mrb[0].mxu0
        %573 = vdwg.mxu0
        %v574 = vand.u32 2147483647, %v536
        %vm575 = vcmp.le.f32.partialorder %v574, 0.7853982
        %vm576 = vcmp.lt.s32.totalorder %v536, 0
        %v577 = vand.u32 %v536, 2139095040
        %v578 = vshrl.u32 %v577, 23
        %v579 = vsub.s32 %v578, 127
        %v580 = vand.u32 2147483647, %v536
        %v581 = vand.u32 %v580, 8388607
        %v582 = vor.u32 %v581, 8388608
        %v583 = vsub.s32 0, %v582
        %v584 = vadd.s32 %v579, 1
        %vm585 = vcmp.gt.s32.totalorder %v584, 0
        %v586 = vsel %vm585, %v584, 0
        %v587 = vshrl.u32 %v586, 5
        %v588 = vand.u32 %v586, 31
        %v589 = vsub.s32 32, %v588
        %v590 = vshrl.u32 683565275, %v589
        %v591 = vshll.u32 683565275, %v588
        %v592 = vshrl.u32 2475754826, %v589
        %v593 = vor.u32 %v591, %v592
        %v594 = vshll.u32 2475754826, %v588
        %v595 = vshrl.u32 2131351028, %v589
        %v596 = vor.u32 %v594, %v595
        %v597 = vshll.u32 2131351028, %v588
        %v598 = vshrl.u32 2102212464, %v589
        %v599 = vor.u32 %v597, %v598
        %v600 = vshll.u32 2102212464, %v588
        %v601 = vshrl.u32 920167782, %v589
        %v602 = vor.u32 %v600, %v601
        %v603 = vshll.u32 920167782, %v588
        %v604 = vshrl.u32 1326507024, %v589
        %v605 = vor.u32 %v603, %v604
        %vm606 = vcmp.lt.s32.totalorder %v587, 1
        %vm607 = vcmp.lt.s32.totalorder %v587, 2
        %vm608 = vcmp.lt.s32.totalorder %v587, 3
        %vm609 = vcmp.lt.s32.totalorder %v587, 4
        %v610 = vsel %vm606, %v590, %v593
        %v611 = vsel %vm609, %v599, 2102212464
        %v612 = vsel %vm608, %v596, %v611
        %v613 = vsel %vm607, %v610, %v612
        %v614 = vsel %vm606, %v593, %v596
        %v615 = vsel %vm609, %v602, 920167782
        %v616 = vsel %vm608, %v599, %v615
        %v617 = vsel %vm607, %v614, %v616
        %v618 = vsel %vm606, %v596, %v599
        %v619 = vsel %vm609, %v605, 1326507024
        %v620 = vsel %vm608, %v602, %v619
        %v621 = vsel %vm607, %v618, %v620
        %v622 = vshll.u32 %v582, 8
        %v623 = vmul.u32.u64.compose %v622, %v621
        %v624 = vextract.low.u32 %v623
        %v625 = vextract.high.u32 %v623
        %v626 = vmul.u32.u64.compose %v622, %v617
        %v627 = vextract.low.u32 %v626
        %v628 = vextract.high.u32 %v626
        %v629 = vmul.u32 %v622, %v613
        %v630 = vadd.s32 %v625, %v627
        %vm631 = vc.u32 %v625, %v627
        %v632 = vadd.s32 %v628, 1
        %v633 = vsel %vm631, %v632, %v628
        %v634 = vadd.s32 %v629, %v633
        %v635 = vadd.s32 %v634, 536870912
        %v636 = vshrl.u32 %v635, 30
        %v637 = vshll.u32 %v636, 30
        %v638 = vsub.s32 %v634, %v637
        %vm639 = vcmp.lt.s32.totalorder %v638, 0
        %v640 = vsub.s32 0, %v638
        %v641 = vsel %vm639, %v640, %v638
        %v642 = vclz %v641
        %v643 = vsub.s32 %v642, 2
        %vm644 = vcmp.gt.s32.totalorder 0, %v643
        %v645 = vsel %vm644, 0, %v643
        %v646 = vsub.s32 32, %v645
        %v647 = vshll.u32 %v638, %v645
        %v648 = vshrl.u32 %v630, %v646
        %v649 = vor.u32 %v647, %v648
        %v650 = vsub.s32 4294967266, %v645
        %v651 = vadd.s32 %v650, 127
        %v652 = vshll.u32 %v651, 23
        %v653 = vor.u32 4788187, %v652
        %v654 = vand.u32 2147483647, %v653
        %v656 = vcvt.s32.f32 %v649
        %v657 = vmul.f32 %v656, %v654
        %v658 = vxor.u32 %v657, 2147483648
        %v659 = vsel %vm576, %v658, %v657
        %v660 = vsub.s32 4, %v636
        %v661 = vsel %vm576, %v660, %v636
        %v662 = vsel %vm575, %v536, %v659
        %v663 = vsel %vm575, 0, %v661
        %v664 = vcosq.f32.pop %v662
        %v665 = vsinq.f32.pop %v662
        %vm666 = vweird.f32 %v536
        %v667 = vadd.s32 %v663, 3
        %v668 = vand.u32 %v667, 3
        %vm669 = vcmp.lt.s32.totalorder %v668, 2
        %vm670 = vcmp.eq.s32.totalorder %v668, 0
        %v671 = vxor.u32 %v665, 2147483648
        %v672 = vsel %vm670, %v664, %v671
        %vm673 = vcmp.eq.s32.totalorder %v668, 2
        %v674 = vxor.u32 %v664, 2147483648
        %v675 = vsel %vm673, %v674, %v665
        %v676 = vsel %vm669, %v672, %v675
        %v677 = vsel %vm666, nan, %v676
        %v678 = vand.u32 2147483647, %v541
        %vm679 = vcmp.le.f32.partialorder %v678, 0.7853982
        %vm680 = vcmp.lt.s32.totalorder %v541, 0
        %v681 = vand.u32 %v541, 2139095040
        %v682 = vshrl.u32 %v681, 23
        %v683 = vsub.s32 %v682, 127
        %v684 = vand.u32 2147483647, %v541
        %v685 = vand.u32 %v684, 8388607
        %v686 = vor.u32 %v685, 8388608
        %v687 = vsub.s32 0, %v686
        %v688 = vadd.s32 %v683, 1
        %vm689 = vcmp.gt.s32.totalorder %v688, 0
        %v690 = vsel %vm689, %v688, 0
        %v691 = vshrl.u32 %v690, 5
        %v692 = vand.u32 %v690, 31
        %v693 = vsub.s32 32, %v692
        %v694 = vshrl.u32 683565275, %v693
        %v695 = vshll.u32 683565275, %v692
        %v696 = vshrl.u32 2475754826, %v693
        %v697 = vor.u32 %v695, %v696
        %v698 = vshll.u32 2475754826, %v692
        %v699 = vshrl.u32 2131351028, %v693
        %v700 = vor.u32 %v698, %v699
        %v701 = vshll.u32 2131351028, %v692
        %v702 = vshrl.u32 2102212464, %v693
        %v703 = vor.u32 %v701, %v702
        %v704 = vshll.u32 2102212464, %v692
        %v705 = vshrl.u32 920167782, %v693
        %v706 = vor.u32 %v704, %v705
        %v707 = vshll.u32 920167782, %v692
        %v708 = vshrl.u32 1326507024, %v693
        %v709 = vor.u32 %v707, %v708
        %vm710 = vcmp.lt.s32.totalorder %v691, 1
        %vm711 = vcmp.lt.s32.totalorder %v691, 2
        %vm712 = vcmp.lt.s32.totalorder %v691, 3
        %vm713 = vcmp.lt.s32.totalorder %v691, 4
        %v714 = vsel %vm710, %v694, %v697
        %v715 = vsel %vm713, %v703, 2102212464
        %v716 = vsel %vm712, %v700, %v715
        %v717 = vsel %vm711, %v714, %v716
        %v718 = vsel %vm710, %v697, %v700
        %v719 = vsel %vm713, %v706, 920167782
        %v720 = vsel %vm712, %v703, %v719
        %v721 = vsel %vm711, %v718, %v720
        %v722 = vsel %vm710, %v700, %v703
        %v723 = vsel %vm713, %v709, 1326507024
        %v724 = vsel %vm712, %v706, %v723
        %v725 = vsel %vm711, %v722, %v724
        %v726 = vshll.u32 %v686, 8
        %v727 = vmul.u32.u64.compose %v726, %v725
        %v728 = vextract.low.u32 %v727
        %v729 = vextract.high.u32 %v727
        %v730 = vmul.u32.u64.compose %v726, %v721
        %v731 = vextract.low.u32 %v730
        %v732 = vextract.high.u32 %v730
        %v733 = vmul.u32 %v726, %v717
        %v734 = vadd.s32 %v729, %v731
        %vm735 = vc.u32 %v729, %v731
        %v736 = vadd.s32 %v732, 1
        %v737 = vsel %vm735, %v736, %v732
        %v738 = vadd.s32 %v733, %v737
        %v739 = vadd.s32 %v738, 536870912
        %v740 = vshrl.u32 %v739, 30
        %v741 = vshll.u32 %v740, 30
        %v742 = vsub.s32 %v738, %v741
        %vm743 = vcmp.lt.s32.totalorder %v742, 0
        %v744 = vsub.s32 0, %v742
        %v745 = vsel %vm743, %v744, %v742
        %v746 = vclz %v745
        %v747 = vsub.s32 %v746, 2
        %vm748 = vcmp.gt.s32.totalorder 0, %v747
        %v749 = vsel %vm748, 0, %v747
        %v750 = vsub.s32 32, %v749
        %v751 = vshll.u32 %v742, %v749
        %v752 = vshrl.u32 %v734, %v750
        %v753 = vor.u32 %v751, %v752
        %v754 = vsub.s32 4294967266, %v749
        %v755 = vadd.s32 %v754, 127
        %v756 = vshll.u32 %v755, 23
        %v757 = vor.u32 4788187, %v756
        %v758 = vand.u32 2147483647, %v757
        %v760 = vcvt.s32.f32 %v753
        %v761 = vmul.f32 %v760, %v758
        %v762 = vxor.u32 %v761, 2147483648
        %v763 = vsel %vm680, %v762, %v761
        %v764 = vsub.s32 4, %v740
        %v765 = vsel %vm680, %v764, %v740
        %v766 = vsel %vm679, %v541, %v763
        %v767 = vsel %vm679, 0, %v765
        %v768 = vcosq.f32.pop %v766
        %v769 = vsinq.f32.pop %v766
        %vm770 = vweird.f32 %v541
        %v771 = vadd.s32 %v767, 3
        %v772 = vand.u32 %v771, 3
        %vm773 = vcmp.lt.s32.totalorder %v772, 2
        %vm774 = vcmp.eq.s32.totalorder %v772, 0
        %v775 = vxor.u32 %v769, 2147483648
        %v776 = vsel %vm774, %v768, %v775
        %vm777 = vcmp.eq.s32.totalorder %v772, 2
        %v778 = vxor.u32 %v768, 2147483648
        %v779 = vsel %vm777, %v778, %v769
        %v780 = vsel %vm773, %v776, %v779
        %v781 = vsel %vm770, nan, %v780
        %v782 = vand.u32 2147483647, %v546
        %vm783 = vcmp.le.f32.partialorder %v782, 0.7853982
        %vm784 = vcmp.lt.s32.totalorder %v546, 0
        %v785 = vand.u32 %v546, 2139095040
        %v786 = vshrl.u32 %v785, 23
        %v787 = vsub.s32 %v786, 127
        %v788 = vand.u32 2147483647, %v546
        %v789 = vand.u32 %v788, 8388607
        %v790 = vor.u32 %v789, 8388608
        %v791 = vsub.s32 0, %v790
        %v792 = vadd.s32 %v787, 1
        %vm793 = vcmp.gt.s32.totalorder %v792, 0
        %v794 = vsel %vm793, %v792, 0
        %v795 = vshrl.u32 %v794, 5
        %v796 = vand.u32 %v794, 31
        %v797 = vsub.s32 32, %v796
        %v798 = vshrl.u32 683565275, %v797
        %v799 = vshll.u32 683565275, %v796
        %v800 = vshrl.u32 2475754826, %v797
        %v801 = vor.u32 %v799, %v800
        %v802 = vshll.u32 2475754826, %v796
        %v803 = vshrl.u32 2131351028, %v797
        %v804 = vor.u32 %v802, %v803
        %v805 = vshll.u32 2131351028, %v796
        %v806 = vshrl.u32 2102212464, %v797
        %v807 = vor.u32 %v805, %v806
        %v808 = vshll.u32 2102212464, %v796
        %v809 = vshrl.u32 920167782, %v797
        %v810 = vor.u32 %v808, %v809
        %v811 = vshll.u32 920167782, %v796
        %v812 = vshrl.u32 1326507024, %v797
        %v813 = vor.u32 %v811, %v812
        %vm814 = vcmp.lt.s32.totalorder %v795, 1
        %vm815 = vcmp.lt.s32.totalorder %v795, 2
        %vm816 = vcmp.lt.s32.totalorder %v795, 3
        %vm817 = vcmp.lt.s32.totalorder %v795, 4
        %v818 = vsel %vm814, %v798, %v801
        %v819 = vsel %vm817, %v807, 2102212464
        %v820 = vsel %vm816, %v804, %v819
        %v821 = vsel %vm815, %v818, %v820
        %v822 = vsel %vm814, %v801, %v804
        %v823 = vsel %vm817, %v810, 920167782
        %v824 = vsel %vm816, %v807, %v823
        %v825 = vsel %vm815, %v822, %v824
        %v826 = vsel %vm814, %v804, %v807
        %v827 = vsel %vm817, %v813, 1326507024
        %v828 = vsel %vm816, %v810, %v827
        %v829 = vsel %vm815, %v826, %v828
        %v830 = vshll.u32 %v790, 8
        %v831 = vmul.u32.u64.compose %v830, %v829
        %v832 = vextract.low.u32 %v831
        %v833 = vextract.high.u32 %v831
        %v834 = vmul.u32.u64.compose %v830, %v825
        %v835 = vextract.low.u32 %v834
        %v836 = vextract.high.u32 %v834
        %v837 = vmul.u32 %v830, %v821
        %v838 = vadd.s32 %v833, %v835
        %vm839 = vc.u32 %v833, %v835
        %v840 = vadd.s32 %v836, 1
        %v841 = vsel %vm839, %v840, %v836
        %v842 = vadd.s32 %v837, %v841
        %v843 = vadd.s32 %v842, 536870912
        %v844 = vshrl.u32 %v843, 30
        %v845 = vshll.u32 %v844, 30
        %v846 = vsub.s32 %v842, %v845
        %vm847 = vcmp.lt.s32.totalorder %v846, 0
        %v848 = vsub.s32 0, %v846
        %v849 = vsel %vm847, %v848, %v846
        %v850 = vclz %v849
        %v851 = vsub.s32 %v850, 2
        %vm852 = vcmp.gt.s32.totalorder 0, %v851
        %v853 = vsel %vm852, 0, %v851
        %v854 = vsub.s32 32, %v853
        %v855 = vshll.u32 %v846, %v853
        %v856 = vshrl.u32 %v838, %v854
        %v857 = vor.u32 %v855, %v856
        %v858 = vsub.s32 4294967266, %v853
        %v859 = vadd.s32 %v858, 127
        %v860 = vshll.u32 %v859, 23
        %v861 = vor.u32 4788187, %v860
        %v862 = vand.u32 2147483647, %v861
        %v864 = vcvt.s32.f32 %v857
        %v865 = vmul.f32 %v864, %v862
        %v866 = vxor.u32 %v865, 2147483648
        %v867 = vsel %vm784, %v866, %v865
        %v868 = vsub.s32 4, %v844
        %v869 = vsel %vm784, %v868, %v844
        %v870 = vsel %vm783, %v546, %v867
        %v871 = vsel %vm783, 0, %v869
        %v872 = vcosq.f32.pop %v870
        %v873 = vsinq.f32.pop %v870
        %vm874 = vweird.f32 %v546
        %v875 = vadd.s32 %v871, 3
        %v876 = vand.u32 %v875, 3
        %vm877 = vcmp.lt.s32.totalorder %v876, 2
        %vm878 = vcmp.eq.s32.totalorder %v876, 0
        %v879 = vxor.u32 %v873, 2147483648
        %v880 = vsel %vm878, %v872, %v879
        %vm881 = vcmp.eq.s32.totalorder %v876, 2
        %v882 = vxor.u32 %v872, 2147483648
        %v883 = vsel %vm881, %v882, %v873
        %v884 = vsel %vm877, %v880, %v883
        %v885 = vsel %vm874, nan, %v884
        %v886 = vand.u32 2147483647, %v551
        %vm887 = vcmp.le.f32.partialorder %v886, 0.7853982
        %vm888 = vcmp.lt.s32.totalorder %v551, 0
        %v889 = vand.u32 %v551, 2139095040
        %v890 = vshrl.u32 %v889, 23
        %v891 = vsub.s32 %v890, 127
        %v892 = vand.u32 2147483647, %v551
        %v893 = vand.u32 %v892, 8388607
        %v894 = vor.u32 %v893, 8388608
        %v895 = vsub.s32 0, %v894
        %v896 = vadd.s32 %v891, 1
        %vm897 = vcmp.gt.s32.totalorder %v896, 0
        %v898 = vsel %vm897, %v896, 0
        %v899 = vshrl.u32 %v898, 5
        %v900 = vand.u32 %v898, 31
        %v901 = vsub.s32 32, %v900
        %v902 = vshrl.u32 683565275, %v901
        %v903 = vshll.u32 683565275, %v900
        %v904 = vshrl.u32 2475754826, %v901
        %v905 = vor.u32 %v903, %v904
        %v906 = vshll.u32 2475754826, %v900
        %v907 = vshrl.u32 2131351028, %v901
        %v908 = vor.u32 %v906, %v907
        %v909 = vshll.u32 2131351028, %v900
        %v910 = vshrl.u32 2102212464, %v901
        %v911 = vor.u32 %v909, %v910
        %v912 = vshll.u32 2102212464, %v900
        %v913 = vshrl.u32 920167782, %v901
        %v914 = vor.u32 %v912, %v913
        %v915 = vshll.u32 920167782, %v900
        %v916 = vshrl.u32 1326507024, %v901
        %v917 = vor.u32 %v915, %v916
        %vm918 = vcmp.lt.s32.totalorder %v899, 1
        %vm919 = vcmp.lt.s32.totalorder %v899, 2
        %vm920 = vcmp.lt.s32.totalorder %v899, 3
        %vm921 = vcmp.lt.s32.totalorder %v899, 4
        %v922 = vsel %vm918, %v902, %v905
        %v923 = vsel %vm921, %v911, 2102212464
        %v924 = vsel %vm920, %v908, %v923
        %v925 = vsel %vm919, %v922, %v924
        %v926 = vsel %vm918, %v905, %v908
        %v927 = vsel %vm921, %v914, 920167782
        %v928 = vsel %vm920, %v911, %v927
        %v929 = vsel %vm919, %v926, %v928
        %v930 = vsel %vm918, %v908, %v911
        %v931 = vsel %vm921, %v917, 1326507024
        %v932 = vsel %vm920, %v914, %v931
        %v933 = vsel %vm919, %v930, %v932
        %v934 = vshll.u32 %v894, 8
        %v935 = vmul.u32.u64.compose %v934, %v933
        %v936 = vextract.low.u32 %v935
        %v937 = vextract.high.u32 %v935
        %v938 = vmul.u32.u64.compose %v934, %v929
        %v939 = vextract.low.u32 %v938
        %v940 = vextract.high.u32 %v938
        %v941 = vmul.u32 %v934, %v925
        %v942 = vadd.s32 %v937, %v939
        %vm943 = vc.u32 %v937, %v939
        %v944 = vadd.s32 %v940, 1
        %v945 = vsel %vm943, %v944, %v940
        %v946 = vadd.s32 %v941, %v945
        %v947 = vadd.s32 %v946, 536870912
        %v948 = vshrl.u32 %v947, 30
        %v949 = vshll.u32 %v948, 30
        %v950 = vsub.s32 %v946, %v949
        %vm951 = vcmp.lt.s32.totalorder %v950, 0
        %v952 = vsub.s32 0, %v950
        %v953 = vsel %vm951, %v952, %v950
        %v954 = vclz %v953
        %v955 = vsub.s32 %v954, 2
        %vm956 = vcmp.gt.s32.totalorder 0, %v955
        %v957 = vsel %vm956, 0, %v955
        %v958 = vsub.s32 32, %v957
        %v959 = vshll.u32 %v950, %v957
        %v960 = vshrl.u32 %v942, %v958
        %v961 = vor.u32 %v959, %v960
        %v962 = vsub.s32 4294967266, %v957
        %v963 = vadd.s32 %v962, 127
        %v964 = vshll.u32 %v963, 23
        %v965 = vor.u32 4788187, %v964
        %v966 = vand.u32 2147483647, %v965
        %v968 = vcvt.s32.f32 %v961
        %v969 = vmul.f32 %v968, %v966
        %v970 = vxor.u32 %v969, 2147483648
        %v971 = vsel %vm888, %v970, %v969
        %v972 = vsub.s32 4, %v948
        %v973 = vsel %vm888, %v972, %v948
        %v974 = vsel %vm887, %v551, %v971
        %v975 = vsel %vm887, 0, %v973
        %v976 = vcosq.f32.pop %v974
        %v977 = vsinq.f32.pop %v974
        %vm978 = vweird.f32 %v551
        %v979 = vadd.s32 %v975, 3
        %v980 = vand.u32 %v979, 3
        %vm981 = vcmp.lt.s32.totalorder %v980, 2
        %vm982 = vcmp.eq.s32.totalorder %v980, 0
        %v983 = vxor.u32 %v977, 2147483648
        %v984 = vsel %vm982, %v976, %v983
        %vm985 = vcmp.eq.s32.totalorder %v980, 2
        %v986 = vxor.u32 %v976, 2147483648
        %v987 = vsel %vm985, %v986, %v977
        %v988 = vsel %vm981, %v984, %v987
        %v989 = vsel %vm978, nan, %v988
        %v990 = vand.u32 2147483647, %v556
        %vm991 = vcmp.le.f32.partialorder %v990, 0.7853982
        %vm992 = vcmp.lt.s32.totalorder %v556, 0
        %v993 = vand.u32 %v556, 2139095040
        %v994 = vshrl.u32 %v993, 23
        %v995 = vsub.s32 %v994, 127
        %v996 = vand.u32 2147483647, %v556
        %v997 = vand.u32 %v996, 8388607
        %v998 = vor.u32 %v997, 8388608
        %v999 = vsub.s32 0, %v998
        %v1000 = vadd.s32 %v995, 1
        %vm1001 = vcmp.gt.s32.totalorder %v1000, 0
        %v1002 = vsel %vm1001, %v1000, 0
        %v1003 = vshrl.u32 %v1002, 5
        %v1004 = vand.u32 %v1002, 31
        %v1005 = vsub.s32 32, %v1004
        %v1006 = vshrl.u32 683565275, %v1005
        %v1007 = vshll.u32 683565275, %v1004
        %v1008 = vshrl.u32 2475754826, %v1005
        %v1009 = vor.u32 %v1007, %v1008
        %v1010 = vshll.u32 2475754826, %v1004
        %v1011 = vshrl.u32 2131351028, %v1005
        %v1012 = vor.u32 %v1010, %v1011
        %v1013 = vshll.u32 2131351028, %v1004
        %v1014 = vshrl.u32 2102212464, %v1005
        %v1015 = vor.u32 %v1013, %v1014
        %v1016 = vshll.u32 2102212464, %v1004
        %v1017 = vshrl.u32 920167782, %v1005
        %v1018 = vor.u32 %v1016, %v1017
        %v1019 = vshll.u32 920167782, %v1004
        %v1020 = vshrl.u32 1326507024, %v1005
        %v1021 = vor.u32 %v1019, %v1020
        %vm1022 = vcmp.lt.s32.totalorder %v1003, 1
        %vm1023 = vcmp.lt.s32.totalorder %v1003, 2
        %vm1024 = vcmp.lt.s32.totalorder %v1003, 3
        %vm1025 = vcmp.lt.s32.totalorder %v1003, 4
        %v1026 = vsel %vm1022, %v1006, %v1009
        %v1027 = vsel %vm1025, %v1015, 2102212464
        %v1028 = vsel %vm1024, %v1012, %v1027
        %v1029 = vsel %vm1023, %v1026, %v1028
        %v1030 = vsel %vm1022, %v1009, %v1012
        %v1031 = vsel %vm1025, %v1018, 920167782
        %v1032 = vsel %vm1024, %v1015, %v1031
        %v1033 = vsel %vm1023, %v1030, %v1032
        %v1034 = vsel %vm1022, %v1012, %v1015
        %v1035 = vsel %vm1025, %v1021, 1326507024
        %v1036 = vsel %vm1024, %v1018, %v1035
        %v1037 = vsel %vm1023, %v1034, %v1036
        %v1038 = vshll.u32 %v998, 8
        %v1039 = vmul.u32.u64.compose %v1038, %v1037
        %v1040 = vextract.low.u32 %v1039
        %v1041 = vextract.high.u32 %v1039
        %v1042 = vmul.u32.u64.compose %v1038, %v1033
        %v1043 = vextract.low.u32 %v1042
        %v1044 = vextract.high.u32 %v1042
        %v1045 = vmul.u32 %v1038, %v1029
        %v1046 = vadd.s32 %v1041, %v1043
        %vm1047 = vc.u32 %v1041, %v1043
        %v1048 = vadd.s32 %v1044, 1
        %v1049 = vsel %vm1047, %v1048, %v1044
        %v1050 = vadd.s32 %v1045, %v1049
        %v1051 = vadd.s32 %v1050, 536870912
        %v1052 = vshrl.u32 %v1051, 30
        %v1053 = vshll.u32 %v1052, 30
        %v1054 = vsub.s32 %v1050, %v1053
        %vm1055 = vcmp.lt.s32.totalorder %v1054, 0
        %v1056 = vsub.s32 0, %v1054
        %v1057 = vsel %vm1055, %v1056, %v1054
        %v1058 = vclz %v1057
        %v1059 = vsub.s32 %v1058, 2
        %vm1060 = vcmp.gt.s32.totalorder 0, %v1059
        %v1061 = vsel %vm1060, 0, %v1059
        %v1062 = vsub.s32 32, %v1061
        %v1063 = vshll.u32 %v1054, %v1061
        %v1064 = vshrl.u32 %v1046, %v1062
        %v1065 = vor.u32 %v1063, %v1064
        %v1066 = vsub.s32 4294967266, %v1061
        %v1067 = vadd.s32 %v1066, 127
        %v1068 = vshll.u32 %v1067, 23
        %v1069 = vor.u32 4788187, %v1068
        %v1070 = vand.u32 2147483647, %v1069
        %v1072 = vcvt.s32.f32 %v1065
        %v1073 = vmul.f32 %v1072, %v1070
        %v1074 = vxor.u32 %v1073, 2147483648
        %v1075 = vsel %vm992, %v1074, %v1073
        %v1076 = vsub.s32 4, %v1052
        %v1077 = vsel %vm992, %v1076, %v1052
        %v1078 = vsel %vm991, %v556, %v1075
        %v1079 = vsel %vm991, 0, %v1077
        %v1080 = vcosq.f32.pop %v1078
        %v1081 = vsinq.f32.pop %v1078
        %vm1082 = vweird.f32 %v556
        %v1083 = vadd.s32 %v1079, 3
        %v1084 = vand.u32 %v1083, 3
        %vm1085 = vcmp.lt.s32.totalorder %v1084, 2
        %vm1086 = vcmp.eq.s32.totalorder %v1084, 0
        %v1087 = vxor.u32 %v1081, 2147483648
        %v1088 = vsel %vm1086, %v1080, %v1087
        %vm1089 = vcmp.eq.s32.totalorder %v1084, 2
        %v1090 = vxor.u32 %v1080, 2147483648
        %v1091 = vsel %vm1089, %v1090, %v1081
        %v1092 = vsel %vm1085, %v1088, %v1091
        %v1093 = vsel %vm1082, nan, %v1092
        %v1094 = vand.u32 2147483647, %v561
        %vm1095 = vcmp.le.f32.partialorder %v1094, 0.7853982
        %vm1096 = vcmp.lt.s32.totalorder %v561, 0
        %v1097 = vand.u32 %v561, 2139095040
        %v1098 = vshrl.u32 %v1097, 23
        %v1099 = vsub.s32 %v1098, 127
        %v1100 = vand.u32 2147483647, %v561
        %v1101 = vand.u32 %v1100, 8388607
        %v1102 = vor.u32 %v1101, 8388608
        %v1103 = vsub.s32 0, %v1102
        %v1104 = vadd.s32 %v1099, 1
        %vm1105 = vcmp.gt.s32.totalorder %v1104, 0
        %v1106 = vsel %vm1105, %v1104, 0
        %v1107 = vshrl.u32 %v1106, 5
        %v1108 = vand.u32 %v1106, 31
        %v1109 = vsub.s32 32, %v1108
        %v1110 = vshrl.u32 683565275, %v1109
        %v1111 = vshll.u32 683565275, %v1108
        %v1112 = vshrl.u32 2475754826, %v1109
        %v1113 = vor.u32 %v1111, %v1112
        %v1114 = vshll.u32 2475754826, %v1108
        %v1115 = vshrl.u32 2131351028, %v1109
        %v1116 = vor.u32 %v1114, %v1115
        %v1117 = vshll.u32 2131351028, %v1108
        %v1118 = vshrl.u32 2102212464, %v1109
        %v1119 = vor.u32 %v1117, %v1118
        %v1120 = vshll.u32 2102212464, %v1108
        %v1121 = vshrl.u32 920167782, %v1109
        %v1122 = vor.u32 %v1120, %v1121
        %v1123 = vshll.u32 920167782, %v1108
        %v1124 = vshrl.u32 1326507024, %v1109
        %v1125 = vor.u32 %v1123, %v1124
        %vm1126 = vcmp.lt.s32.totalorder %v1107, 1
        %vm1127 = vcmp.lt.s32.totalorder %v1107, 2
        %vm1128 = vcmp.lt.s32.totalorder %v1107, 3
        %vm1129 = vcmp.lt.s32.totalorder %v1107, 4
        %v1130 = vsel %vm1126, %v1110, %v1113
        %v1131 = vsel %vm1129, %v1119, 2102212464
        %v1132 = vsel %vm1128, %v1116, %v1131
        %v1133 = vsel %vm1127, %v1130, %v1132
        %v1134 = vsel %vm1126, %v1113, %v1116
        %v1135 = vsel %vm1129, %v1122, 920167782
        %v1136 = vsel %vm1128, %v1119, %v1135
        %v1137 = vsel %vm1127, %v1134, %v1136
        %v1138 = vsel %vm1126, %v1116, %v1119
        %v1139 = vsel %vm1129, %v1125, 1326507024
        %v1140 = vsel %vm1128, %v1122, %v1139
        %v1141 = vsel %vm1127, %v1138, %v1140
        %v1142 = vshll.u32 %v1102, 8
        %v1143 = vmul.u32.u64.compose %v1142, %v1141
        %v1144 = vextract.low.u32 %v1143
        %v1145 = vextract.high.u32 %v1143
        %v1146 = vmul.u32.u64.compose %v1142, %v1137
        %v1147 = vextract.low.u32 %v1146
        %v1148 = vextract.high.u32 %v1146
        %v1149 = vmul.u32 %v1142, %v1133
        %v1150 = vadd.s32 %v1145, %v1147
        %vm1151 = vc.u32 %v1145, %v1147
        %v1152 = vadd.s32 %v1148, 1
        %v1153 = vsel %vm1151, %v1152, %v1148
        %v1154 = vadd.s32 %v1149, %v1153
        %v1155 = vadd.s32 %v1154, 536870912
        %v1156 = vshrl.u32 %v1155, 30
        %v1157 = vshll.u32 %v1156, 30
        %v1158 = vsub.s32 %v1154, %v1157
        %vm1159 = vcmp.lt.s32.totalorder %v1158, 0
        %v1160 = vsub.s32 0, %v1158
        %v1161 = vsel %vm1159, %v1160, %v1158
        %v1162 = vclz %v1161
        %v1163 = vsub.s32 %v1162, 2
        %vm1164 = vcmp.gt.s32.totalorder 0, %v1163
        %v1165 = vsel %vm1164, 0, %v1163
        %v1166 = vsub.s32 32, %v1165
        %v1167 = vshll.u32 %v1158, %v1165
        %v1168 = vshrl.u32 %v1150, %v1166
        %v1169 = vor.u32 %v1167, %v1168
        %v1170 = vsub.s32 4294967266, %v1165
        %v1171 = vadd.s32 %v1170, 127
        %v1172 = vshll.u32 %v1171, 23
        %v1173 = vor.u32 4788187, %v1172
        %v1174 = vand.u32 2147483647, %v1173
        %v1176 = vcvt.s32.f32 %v1169
        %v1177 = vmul.f32 %v1176, %v1174
        %v1178 = vxor.u32 %v1177, 2147483648
        %v1179 = vsel %vm1096, %v1178, %v1177
        %v1180 = vsub.s32 4, %v1156
        %v1181 = vsel %vm1096, %v1180, %v1156
        %v1182 = vsel %vm1095, %v561, %v1179
        %v1183 = vsel %vm1095, 0, %v1181
        %v1184 = vcosq.f32.pop %v1182
        %v1185 = vsinq.f32.pop %v1182
        %vm1186 = vweird.f32 %v561
        %v1187 = vadd.s32 %v1183, 3
        %v1188 = vand.u32 %v1187, 3
        %vm1189 = vcmp.lt.s32.totalorder %v1188, 2
        %vm1190 = vcmp.eq.s32.totalorder %v1188, 0
        %v1191 = vxor.u32 %v1185, 2147483648
        %v1192 = vsel %vm1190, %v1184, %v1191
        %vm1193 = vcmp.eq.s32.totalorder %v1188, 2
        %v1194 = vxor.u32 %v1184, 2147483648
        %v1195 = vsel %vm1193, %v1194, %v1185
        %v1196 = vsel %vm1189, %v1192, %v1195
        %v1197 = vsel %vm1186, nan, %v1196
        %v1198 = vand.u32 2147483647, %v566
        %vm1199 = vcmp.le.f32.partialorder %v1198, 0.7853982
        %vm1200 = vcmp.lt.s32.totalorder %v566, 0
        %v1201 = vand.u32 %v566, 2139095040
        %v1202 = vshrl.u32 %v1201, 23
        %v1203 = vsub.s32 %v1202, 127
        %v1204 = vand.u32 2147483647, %v566
        %v1205 = vand.u32 %v1204, 8388607
        %v1206 = vor.u32 %v1205, 8388608
        %v1207 = vsub.s32 0, %v1206
        %v1208 = vadd.s32 %v1203, 1
        %vm1209 = vcmp.gt.s32.totalorder %v1208, 0
        %v1210 = vsel %vm1209, %v1208, 0
        %v1211 = vshrl.u32 %v1210, 5
        %v1212 = vand.u32 %v1210, 31
        %v1213 = vsub.s32 32, %v1212
        %v1214 = vshrl.u32 683565275, %v1213
        %v1215 = vshll.u32 683565275, %v1212
        %v1216 = vshrl.u32 2475754826, %v1213
        %v1217 = vor.u32 %v1215, %v1216
        %v1218 = vshll.u32 2475754826, %v1212
        %v1219 = vshrl.u32 2131351028, %v1213
        %v1220 = vor.u32 %v1218, %v1219
        %v1221 = vshll.u32 2131351028, %v1212
        %v1222 = vshrl.u32 2102212464, %v1213
        %v1223 = vor.u32 %v1221, %v1222
        %v1224 = vshll.u32 2102212464, %v1212
        %v1225 = vshrl.u32 920167782, %v1213
        %v1226 = vor.u32 %v1224, %v1225
        %v1227 = vshll.u32 920167782, %v1212
        %v1228 = vshrl.u32 1326507024, %v1213
        %v1229 = vor.u32 %v1227, %v1228
        %vm1230 = vcmp.lt.s32.totalorder %v1211, 1
        %vm1231 = vcmp.lt.s32.totalorder %v1211, 2
        %vm1232 = vcmp.lt.s32.totalorder %v1211, 3
        %vm1233 = vcmp.lt.s32.totalorder %v1211, 4
        %v1234 = vsel %vm1230, %v1214, %v1217
        %v1235 = vsel %vm1233, %v1223, 2102212464
        %v1236 = vsel %vm1232, %v1220, %v1235
        %v1237 = vsel %vm1231, %v1234, %v1236
        %v1238 = vsel %vm1230, %v1217, %v1220
        %v1239 = vsel %vm1233, %v1226, 920167782
        %v1240 = vsel %vm1232, %v1223, %v1239
        %v1241 = vsel %vm1231, %v1238, %v1240
        %v1242 = vsel %vm1230, %v1220, %v1223
        %v1243 = vsel %vm1233, %v1229, 1326507024
        %v1244 = vsel %vm1232, %v1226, %v1243
        %v1245 = vsel %vm1231, %v1242, %v1244
        %v1246 = vshll.u32 %v1206, 8
        %v1247 = vmul.u32.u64.compose %v1246, %v1245
        %v1248 = vextract.low.u32 %v1247
        %v1249 = vextract.high.u32 %v1247
        %v1250 = vmul.u32.u64.compose %v1246, %v1241
        %v1251 = vextract.low.u32 %v1250
        %v1252 = vextract.high.u32 %v1250
        %v1253 = vmul.u32 %v1246, %v1237
        %v1254 = vadd.s32 %v1249, %v1251
        %vm1255 = vc.u32 %v1249, %v1251
        %v1256 = vadd.s32 %v1252, 1
        %v1257 = vsel %vm1255, %v1256, %v1252
        %v1258 = vadd.s32 %v1253, %v1257
        %v1259 = vadd.s32 %v1258, 536870912
        %v1260 = vshrl.u32 %v1259, 30
        %v1261 = vshll.u32 %v1260, 30
        %v1262 = vsub.s32 %v1258, %v1261
        %vm1263 = vcmp.lt.s32.totalorder %v1262, 0
        %v1264 = vsub.s32 0, %v1262
        %v1265 = vsel %vm1263, %v1264, %v1262
        %v1266 = vclz %v1265
        %v1267 = vsub.s32 %v1266, 2
        %vm1268 = vcmp.gt.s32.totalorder 0, %v1267
        %v1269 = vsel %vm1268, 0, %v1267
        %v1270 = vsub.s32 32, %v1269
        %v1271 = vshll.u32 %v1262, %v1269
        %v1272 = vshrl.u32 %v1254, %v1270
        %v1273 = vor.u32 %v1271, %v1272
        %v1274 = vsub.s32 4294967266, %v1269
        %v1275 = vadd.s32 %v1274, 127
        %v1276 = vshll.u32 %v1275, 23
        %v1277 = vor.u32 4788187, %v1276
        %v1278 = vand.u32 2147483647, %v1277
        %v1280 = vcvt.s32.f32 %v1273
        %v1281 = vmul.f32 %v1280, %v1278
        %v1282 = vxor.u32 %v1281, 2147483648
        %v1283 = vsel %vm1200, %v1282, %v1281
        %v1284 = vsub.s32 4, %v1260
        %v1285 = vsel %vm1200, %v1284, %v1260
        %v1286 = vsel %vm1199, %v566, %v1283
        %v1287 = vsel %vm1199, 0, %v1285
        %v1288 = vcosq.f32.pop %v1286
        %v1289 = vsinq.f32.pop %v1286
        %vm1290 = vweird.f32 %v566
        %v1291 = vadd.s32 %v1287, 3
        %v1292 = vand.u32 %v1291, 3
        %vm1293 = vcmp.lt.s32.totalorder %v1292, 2
        %vm1294 = vcmp.eq.s32.totalorder %v1292, 0
        %v1295 = vxor.u32 %v1289, 2147483648
        %v1296 = vsel %vm1294, %v1288, %v1295
        %vm1297 = vcmp.eq.s32.totalorder %v1292, 2
        %v1298 = vxor.u32 %v1288, 2147483648
        %v1299 = vsel %vm1297, %v1298, %v1289
        %v1300 = vsel %vm1293, %v1296, %v1299
        %v1301 = vsel %vm1290, nan, %v1300
        %v1302 = vand.u32 2147483647, %v571
        %vm1303 = vcmp.le.f32.partialorder %v1302, 0.7853982
        %vm1304 = vcmp.lt.s32.totalorder %v571, 0
        %v1305 = vand.u32 %v571, 2139095040
        %v1306 = vshrl.u32 %v1305, 23
        %v1307 = vsub.s32 %v1306, 127
        %v1308 = vand.u32 2147483647, %v571
        %v1309 = vand.u32 %v1308, 8388607
        %v1310 = vor.u32 %v1309, 8388608
        %v1311 = vsub.s32 0, %v1310
        %v1312 = vadd.s32 %v1307, 1
        %vm1313 = vcmp.gt.s32.totalorder %v1312, 0
        %v1314 = vsel %vm1313, %v1312, 0
        %v1315 = vshrl.u32 %v1314, 5
        %v1316 = vand.u32 %v1314, 31
        %v1317 = vsub.s32 32, %v1316
        %v1318 = vshrl.u32 683565275, %v1317
        %v1319 = vshll.u32 683565275, %v1316
        %v1320 = vshrl.u32 2475754826, %v1317
        %v1321 = vor.u32 %v1319, %v1320
        %v1322 = vshll.u32 2475754826, %v1316
        %v1323 = vshrl.u32 2131351028, %v1317
        %v1324 = vor.u32 %v1322, %v1323
        %v1325 = vshll.u32 2131351028, %v1316
        %v1326 = vshrl.u32 2102212464, %v1317
        %v1327 = vor.u32 %v1325, %v1326
        %v1328 = vshll.u32 2102212464, %v1316
        %v1329 = vshrl.u32 920167782, %v1317
        %v1330 = vor.u32 %v1328, %v1329
        %v1331 = vshll.u32 920167782, %v1316
        %v1332 = vshrl.u32 1326507024, %v1317
        %v1333 = vor.u32 %v1331, %v1332
        %vm1334 = vcmp.lt.s32.totalorder %v1315, 1
        %vm1335 = vcmp.lt.s32.totalorder %v1315, 2
        %vm1336 = vcmp.lt.s32.totalorder %v1315, 3
        %vm1337 = vcmp.lt.s32.totalorder %v1315, 4
        %v1338 = vsel %vm1334, %v1318, %v1321
        %v1339 = vsel %vm1337, %v1327, 2102212464
        %v1340 = vsel %vm1336, %v1324, %v1339
        %v1341 = vsel %vm1335, %v1338, %v1340
        %v1342 = vsel %vm1334, %v1321, %v1324
        %v1343 = vsel %vm1337, %v1330, 920167782
        %v1344 = vsel %vm1336, %v1327, %v1343
        %v1345 = vsel %vm1335, %v1342, %v1344
        %v1346 = vsel %vm1334, %v1324, %v1327
        %v1347 = vsel %vm1337, %v1333, 1326507024
        %v1348 = vsel %vm1336, %v1330, %v1347
        %v1349 = vsel %vm1335, %v1346, %v1348
        %v1350 = vshll.u32 %v1310, 8
        %v1351 = vmul.u32.u64.compose %v1350, %v1349
        %v1352 = vextract.low.u32 %v1351
        %v1353 = vextract.high.u32 %v1351
        %v1354 = vmul.u32.u64.compose %v1350, %v1345
        %v1355 = vextract.low.u32 %v1354
        %v1356 = vextract.high.u32 %v1354
        %v1357 = vmul.u32 %v1350, %v1341
        %v1358 = vadd.s32 %v1353, %v1355
        %vm1359 = vc.u32 %v1353, %v1355
        %v1360 = vadd.s32 %v1356, 1
        %v1361 = vsel %vm1359, %v1360, %v1356
        %v1362 = vadd.s32 %v1357, %v1361
        %v1363 = vadd.s32 %v1362, 536870912
        %v1364 = vshrl.u32 %v1363, 30
        %v1365 = vshll.u32 %v1364, 30
        %v1366 = vsub.s32 %v1362, %v1365
        %vm1367 = vcmp.lt.s32.totalorder %v1366, 0
        %v1368 = vsub.s32 0, %v1366
        %v1369 = vsel %vm1367, %v1368, %v1366
        %v1370 = vclz %v1369
        %v1371 = vsub.s32 %v1370, 2
        %vm1372 = vcmp.gt.s32.totalorder 0, %v1371
        %v1373 = vsel %vm1372, 0, %v1371
        %v1374 = vsub.s32 32, %v1373
        %v1375 = vshll.u32 %v1366, %v1373
        %v1376 = vshrl.u32 %v1358, %v1374
        %v1377 = vor.u32 %v1375, %v1376
        %v1378 = vsub.s32 4294967266, %v1373
        %v1379 = vadd.s32 %v1378, 127
        %v1380 = vshll.u32 %v1379, 23
        %v1381 = vor.u32 4788187, %v1380
        %v1382 = vand.u32 2147483647, %v1381
        %v1384 = vcvt.s32.f32 %v1377
        %v1385 = vmul.f32 %v1384, %v1382
        %v1386 = vxor.u32 %v1385, 2147483648
        %v1387 = vsel %vm1304, %v1386, %v1385
        %v1388 = vsub.s32 4, %v1364
        %v1389 = vsel %vm1304, %v1388, %v1364
        %v1390 = vsel %vm1303, %v571, %v1387
        %v1391 = vsel %vm1303, 0, %v1389
        %v1392 = vcosq.f32.pop %v1390
        %v1393 = vsinq.f32.pop %v1390
        %vm1394 = vweird.f32 %v571
        %v1395 = vadd.s32 %v1391, 3
        %v1396 = vand.u32 %v1395, 3
        %vm1397 = vcmp.lt.s32.totalorder %v1396, 2
        %vm1398 = vcmp.eq.s32.totalorder %v1396, 0
        %v1399 = vxor.u32 %v1393, 2147483648
        %v1400 = vsel %vm1398, %v1392, %v1399
        %vm1401 = vcmp.eq.s32.totalorder %v1396, 2
        %v1402 = vxor.u32 %v1392, 2147483648
        %v1403 = vsel %vm1401, %v1402, %v1393
        %v1404 = vsel %vm1397, %v1400, %v1403
        %v1405 = vsel %vm1394, nan, %v1404
        %v1406 = vld [vmem:[%s3] sm:$0xff]
        %v1407 = vld [vmem:[%s3 + $0x8] sm:$0xff]
        %v1408 = vld [vmem:[%s3 + $0x10] sm:$0xff]
        %v1409 = vld [vmem:[%s3 + $0x18] sm:$0xff]
        %v1410 = vld [vmem:[%s3 + $0x20] sm:$0xff]
        %v1411 = vld [vmem:[%s3 + $0x28] sm:$0xff]
        %v1412 = vld [vmem:[%s3 + $0x30] sm:$0xff]
        %v1413 = vld [vmem:[%s3 + $0x38] sm:$0xff]
        %v1414 = vld [vmem:[%s4] sm:$0xff]
        %v1415 = vld [vmem:[%s4 + $0x8] sm:$0xff]
        %v1416 = vld [vmem:[%s4 + $0x10] sm:$0xff]
        %v1417 = vld [vmem:[%s4 + $0x18] sm:$0xff]
        %v1418 = vld [vmem:[%s4 + $0x20] sm:$0xff]
        %v1419 = vld [vmem:[%s4 + $0x28] sm:$0xff]
        %v1420 = vld [vmem:[%s4 + $0x30] sm:$0xff]
        %v1421 = vld [vmem:[%s4 + $0x38] sm:$0xff]
        %1423 = vset.pattern.permute.xlu0 0
        %1424 = vperm.xlu0 %1423, %v1414
        %v1425 = vpop.permute.xlu0 %1424
        %1428 = vset.pattern.permute.xlu0 0
        %1429 = vperm.xlu0 %1428, %v1415
        %v1430 = vpop.permute.xlu0 %1429
        %1433 = vset.pattern.permute.xlu0 0
        %1434 = vperm.xlu0 %1433, %v1416
        %v1435 = vpop.permute.xlu0 %1434
        %1438 = vset.pattern.permute.xlu0 0
        %1439 = vperm.xlu0 %1438, %v1417
        %v1440 = vpop.permute.xlu0 %1439
        %1443 = vset.pattern.permute.xlu0 0
        %1444 = vperm.xlu0 %1443, %v1418
        %v1445 = vpop.permute.xlu0 %1444
        %1448 = vset.pattern.permute.xlu0 0
        %1449 = vperm.xlu0 %1448, %v1419
        %v1450 = vpop.permute.xlu0 %1449
        %1453 = vset.pattern.permute.xlu0 0
        %1454 = vperm.xlu0 %1453, %v1420
        %v1455 = vpop.permute.xlu0 %1454
        %1458 = vset.pattern.permute.xlu0 0
        %1459 = vperm.xlu0 %1458, %v1421
        %v1460 = vpop.permute.xlu0 %1459
        %vm1462 = vcmask 523264
        %v1464 = vsel %vm1462, %v1406, 0
        %v1467 = vsel %vm1462, %v1407, 0
        %v1470 = vsel %vm1462, %v1408, 0
        %v1473 = vsel %vm1462, %v1409, 0
        %v1476 = vsel %vm1462, %v1410, 0
        %v1479 = vsel %vm1462, %v1411, 0
        %v1482 = vsel %vm1462, %v1412, 0
        %v1485 = vsel %vm1462, %v1413, 0
        %1487 = vmatprep.subr.mxu0 0.0
        %1488 = vmatpush1.msra.mxu0 %v677
        %1489 = vmatprep.subr.mxu0 0.0
        %1490 = vmatpush1.msra.mxu0 %v781
        %1491 = vmatprep.subr.mxu0 0.0
        %1492 = vmatpush1.msra.mxu0 %v885
        %1493 = vmatprep.subr.mxu0 0.0
        %1494 = vmatpush1.msra.mxu0 %v989
        %1495 = vmatprep.subr.mxu0 0.0
        %1496 = vmatpush1.msra.mxu0 %v1093
        %1497 = vmatprep.subr.mxu0 0.0
        %1498 = vmatpush1.msra.mxu0 %v1197
        %1499 = vmatprep.subr.mxu0 0.0
        %1500 = vmatpush1.msra.mxu0 %v1301
        %1501 = vmatprep.subr.mxu0 0.0
        %1502 = vmatpush1.msra.mxu0 %v1405
        %1503 = vmatprep.subr.mxu0 0.0
        %1504 = vmatpush1.msra.mxu0 0.0
        %1505 = vmatprep.subr.mxu0 0.0
        %1506 = vmatpush1.msra.mxu0 0.0
        %1507 = vmatprep.subr.mxu0 0.0
        %1508 = vmatpush1.msra.mxu0 0.0
        %1509 = vmatprep.subr.mxu0 0.0
        %1510 = vmatpush1.msra.mxu0 0.0
        %1511 = vmatprep.subr.mxu0 0.0
        %1512 = vmatpush1.msra.mxu0 0.0
        %1513 = vmatprep.subr.mxu0 0.0
        %1514 = vmatpush1.msra.mxu0 0.0
        %1515 = vmatprep.subr.mxu0 0.0
        %1516 = vmatpush1.msra.mxu0 0.0
        %1517 = vmatprep.subr.mxu0 0.0
        %1518 = vmatpush1.msra.mxu0 0.0
        %1519 = vmatprep.subr.mxu0 0.0
        %1520 = vmatpush1.msra.mxu0 0.0
        %1521 = vmatprep.subr.mxu0 0.0
        %1522 = vmatpush1.msra.mxu0 0.0
        %1523 = vmatprep.subr.mxu0 0.0
        %1524 = vmatpush1.msra.mxu0 0.0
        %1525 = vmatprep.subr.mxu0 0.0
        %1526 = vmatpush1.msra.mxu0 0.0
        %1527 = vmatprep.subr.mxu0 0.0
        %1528 = vmatpush1.msra.mxu0 0.0
        %1529 = vmatprep.subr.mxu0 0.0
        %1530 = vmatpush1.msra.mxu0 0.0
        %1531 = vmatprep.subr.mxu0 0.0
        %1532 = vmatpush1.msra.mxu0 0.0
        %1533 = vmatprep.subr.mxu0 0.0
        %1534 = vmatpush1.msra.mxu0 0.0
        %1535 = vmatprep.subr.mxu0 0.0
        %1536 = vmatpush1.msra.mxu0 0.0
        %1537 = vmatprep.subr.mxu0 0.0
        %1538 = vmatpush1.msra.mxu0 0.0
        %1539 = vmatprep.subr.mxu0 0.0
        %1540 = vmatpush1.msra.mxu0 0.0
        %1541 = vmatprep.subr.mxu0 0.0
        %1542 = vmatpush1.msra.mxu0 0.0
        %1543 = vmatprep.subr.mxu0 0.0
        %1544 = vmatpush1.msra.mxu0 0.0
        %1545 = vmatprep.subr.mxu0 0.0
        %1546 = vmatpush1.msra.mxu0 0.0
        %1547 = vmatprep.subr.mxu0 0.0
        %1548 = vmatpush1.msra.mxu0 0.0
        %1549 = vmatprep.subr.mxu0 0.0
        %1550 = vmatpush1.msra.mxu0 0.0
        %1551 = vmatprep.mubr.f32.mxu0 0.0
        %1552 = vmatmul.mubr.f32.gmra.mrb[0].mxu0 %v1464
        %v1553 = vpop.f32.mrb[0].mxu0
        %v1554 = vadd.f32 %v1425, %v1553
        %v1555 = vpop.f32.mrb[0].mxu0
        %1556 = vmatprep.mubr.f32.mxu0 0.0
        %1557 = vmatmul.mubr.f32.gmra.mrb[0].mxu0 %v1467
        %v1558 = vpop.f32.mrb[0].mxu0
        %v1559 = vadd.f32 %v1430, %v1558
        %v1560 = vpop.f32.mrb[0].mxu0
        %1561 = vmatprep.mubr.f32.mxu0 0.0
        %1562 = vmatmul.mubr.f32.gmra.mrb[0].mxu0 %v1470
        %v1563 = vpop.f32.mrb[0].mxu0
        %v1564 = vadd.f32 %v1435, %v1563
        %v1565 = vpop.f32.mrb[0].mxu0
        %1566 = vmatprep.mubr.f32.mxu0 0.0
        %1567 = vmatmul.mubr.f32.gmra.mrb[0].mxu0 %v1473
        %v1568 = vpop.f32.mrb[0].mxu0
        %v1569 = vadd.f32 %v1440, %v1568
        %v1570 = vpop.f32.mrb[0].mxu0
        %1571 = vmatprep.mubr.f32.mxu0 0.0
        %1572 = vmatmul.mubr.f32.gmra.mrb[0].mxu0 %v1476
        %v1573 = vpop.f32.mrb[0].mxu0
        %v1574 = vadd.f32 %v1445, %v1573
        %v1575 = vpop.f32.mrb[0].mxu0
        %1576 = vmatprep.mubr.f32.mxu0 0.0
        %1577 = vmatmul.mubr.f32.gmra.mrb[0].mxu0 %v1479
        %v1578 = vpop.f32.mrb[0].mxu0
        %v1579 = vadd.f32 %v1450, %v1578
        %v1580 = vpop.f32.mrb[0].mxu0
        %1581 = vmatprep.mubr.f32.mxu0 0.0
        %1582 = vmatmul.mubr.f32.gmra.mrb[0].mxu0 %v1482
        %v1583 = vpop.f32.mrb[0].mxu0
        %v1584 = vadd.f32 %v1455, %v1583
        %v1585 = vpop.f32.mrb[0].mxu0
        %1586 = vmatprep.mubr.f32.mxu0 0.0
        %1587 = vmatmul.mubr.f32.gmra.mrb[0].mxu0 %v1485
        %v1588 = vpop.f32.mrb[0].mxu0
        %v1589 = vadd.f32 %v1460, %v1588
        %v1590 = vpop.f32.mrb[0].mxu0
        %1591 = vdwg.mxu0
        %v1592 = vand.u32 2147483647, %v1554
        %vm1593 = vcmp.le.f32.partialorder %v1592, 0.7853982
        %vm1594 = vcmp.lt.s32.totalorder %v1554, 0
        %v1595 = vand.u32 %v1554, 2139095040
        %v1596 = vshrl.u32 %v1595, 23
        %v1597 = vsub.s32 %v1596, 127
        %v1598 = vand.u32 2147483647, %v1554
        %v1599 = vand.u32 %v1598, 8388607
        %v1600 = vor.u32 %v1599, 8388608
        %v1601 = vsub.s32 0, %v1600
        %v1602 = vadd.s32 %v1597, 1
        %vm1603 = vcmp.gt.s32.totalorder %v1602, 0
        %v1604 = vsel %vm1603, %v1602, 0
        %v1605 = vshrl.u32 %v1604, 5
        %v1606 = vand.u32 %v1604, 31
        %v1607 = vsub.s32 32, %v1606
        %v1608 = vshrl.u32 683565275, %v1607
        %v1609 = vshll.u32 683565275, %v1606
        %v1610 = vshrl.u32 2475754826, %v1607
        %v1611 = vor.u32 %v1609, %v1610
        %v1612 = vshll.u32 2475754826, %v1606
        %v1613 = vshrl.u32 2131351028, %v1607
        %v1614 = vor.u32 %v1612, %v1613
        %v1615 = vshll.u32 2131351028, %v1606
        %v1616 = vshrl.u32 2102212464, %v1607
        %v1617 = vor.u32 %v1615, %v1616
        %v1618 = vshll.u32 2102212464, %v1606
        %v1619 = vshrl.u32 920167782, %v1607
        %v1620 = vor.u32 %v1618, %v1619
        %v1621 = vshll.u32 920167782, %v1606
        %v1622 = vshrl.u32 1326507024, %v1607
        %v1623 = vor.u32 %v1621, %v1622
        %vm1624 = vcmp.lt.s32.totalorder %v1605, 1
        %vm1625 = vcmp.lt.s32.totalorder %v1605, 2
        %vm1626 = vcmp.lt.s32.totalorder %v1605, 3
        %vm1627 = vcmp.lt.s32.totalorder %v1605, 4
        %v1628 = vsel %vm1624, %v1608, %v1611
        %v1629 = vsel %vm1627, %v1617, 2102212464
        %v1630 = vsel %vm1626, %v1614, %v1629
        %v1631 = vsel %vm1625, %v1628, %v1630
        %v1632 = vsel %vm1624, %v1611, %v1614
        %v1633 = vsel %vm1627, %v1620, 920167782
        %v1634 = vsel %vm1626, %v1617, %v1633
        %v1635 = vsel %vm1625, %v1632, %v1634
        %v1636 = vsel %vm1624, %v1614, %v1617
        %v1637 = vsel %vm1627, %v1623, 1326507024
        %v1638 = vsel %vm1626, %v1620, %v1637
        %v1639 = vsel %vm1625, %v1636, %v1638
        %v1640 = vshll.u32 %v1600, 8
        %v1641 = vmul.u32.u64.compose %v1640, %v1639
        %v1642 = vextract.low.u32 %v1641
        %v1643 = vextract.high.u32 %v1641
        %v1644 = vmul.u32.u64.compose %v1640, %v1635
        %v1645 = vextract.low.u32 %v1644
        %v1646 = vextract.high.u32 %v1644
        %v1647 = vmul.u32 %v1640, %v1631
        %v1648 = vadd.s32 %v1643, %v1645
        %vm1649 = vc.u32 %v1643, %v1645
        %v1650 = vadd.s32 %v1646, 1
        %v1651 = vsel %vm1649, %v1650, %v1646
        %v1652 = vadd.s32 %v1647, %v1651
        %v1653 = vadd.s32 %v1652, 536870912
        %v1654 = vshrl.u32 %v1653, 30
        %v1655 = vshll.u32 %v1654, 30
        %v1656 = vsub.s32 %v1652, %v1655
        %vm1657 = vcmp.lt.s32.totalorder %v1656, 0
        %v1658 = vsub.s32 0, %v1656
        %v1659 = vsel %vm1657, %v1658, %v1656
        %v1660 = vclz %v1659
        %v1661 = vsub.s32 %v1660, 2
        %vm1662 = vcmp.gt.s32.totalorder 0, %v1661
        %v1663 = vsel %vm1662, 0, %v1661
        %v1664 = vsub.s32 32, %v1663
        %v1665 = vshll.u32 %v1656, %v1663
        %v1666 = vshrl.u32 %v1648, %v1664
        %v1667 = vor.u32 %v1665, %v1666
        %v1668 = vsub.s32 4294967266, %v1663
        %v1669 = vadd.s32 %v1668, 127
        %v1670 = vshll.u32 %v1669, 23
        %v1671 = vor.u32 4788187, %v1670
        %v1672 = vand.u32 2147483647, %v1671
        %v1674 = vcvt.s32.f32 %v1667
        %v1675 = vmul.f32 %v1674, %v1672
        %v1676 = vxor.u32 %v1675, 2147483648
        %v1677 = vsel %vm1594, %v1676, %v1675
        %v1678 = vsub.s32 4, %v1654
        %v1679 = vsel %vm1594, %v1678, %v1654
        %v1680 = vsel %vm1593, %v1554, %v1677
        %v1681 = vsel %vm1593, 0, %v1679
        %v1682 = vcosq.f32.pop %v1680
        %v1683 = vsinq.f32.pop %v1680
        %vm1684 = vweird.f32 %v1554
        %v1685 = vadd.s32 %v1681, 3
        %v1686 = vand.u32 %v1685, 3
        %vm1687 = vcmp.lt.s32.totalorder %v1686, 2
        %vm1688 = vcmp.eq.s32.totalorder %v1686, 0
        %v1689 = vxor.u32 %v1683, 2147483648
        %v1690 = vsel %vm1688, %v1682, %v1689
        %vm1691 = vcmp.eq.s32.totalorder %v1686, 2
        %v1692 = vxor.u32 %v1682, 2147483648
        %v1693 = vsel %vm1691, %v1692, %v1683
        %v1694 = vsel %vm1687, %v1690, %v1693
        %v1695 = vsel %vm1684, nan, %v1694
        %v1696 = vand.u32 2147483647, %v1559
        %vm1697 = vcmp.le.f32.partialorder %v1696, 0.7853982
        %vm1698 = vcmp.lt.s32.totalorder %v1559, 0
        %v1699 = vand.u32 %v1559, 2139095040
        %v1700 = vshrl.u32 %v1699, 23
        %v1701 = vsub.s32 %v1700, 127
        %v1702 = vand.u32 2147483647, %v1559
        %v1703 = vand.u32 %v1702, 8388607
        %v1704 = vor.u32 %v1703, 8388608
        %v1705 = vsub.s32 0, %v1704
        %v1706 = vadd.s32 %v1701, 1
        %vm1707 = vcmp.gt.s32.totalorder %v1706, 0
        %v1708 = vsel %vm1707, %v1706, 0
        %v1709 = vshrl.u32 %v1708, 5
        %v1710 = vand.u32 %v1708, 31
        %v1711 = vsub.s32 32, %v1710
        %v1712 = vshrl.u32 683565275, %v1711
        %v1713 = vshll.u32 683565275, %v1710
        %v1714 = vshrl.u32 2475754826, %v1711
        %v1715 = vor.u32 %v1713, %v1714
        %v1716 = vshll.u32 2475754826, %v1710
        %v1717 = vshrl.u32 2131351028, %v1711
        %v1718 = vor.u32 %v1716, %v1717
        %v1719 = vshll.u32 2131351028, %v1710
        %v1720 = vshrl.u32 2102212464, %v1711
        %v1721 = vor.u32 %v1719, %v1720
        %v1722 = vshll.u32 2102212464, %v1710
        %v1723 = vshrl.u32 920167782, %v1711
        %v1724 = vor.u32 %v1722, %v1723
        %v1725 = vshll.u32 920167782, %v1710
        %v1726 = vshrl.u32 1326507024, %v1711
        %v1727 = vor.u32 %v1725, %v1726
        %vm1728 = vcmp.lt.s32.totalorder %v1709, 1
        %vm1729 = vcmp.lt.s32.totalorder %v1709, 2
        %vm1730 = vcmp.lt.s32.totalorder %v1709, 3
        %vm1731 = vcmp.lt.s32.totalorder %v1709, 4
        %v1732 = vsel %vm1728, %v1712, %v1715
        %v1733 = vsel %vm1731, %v1721, 2102212464
        %v1734 = vsel %vm1730, %v1718, %v1733
        %v1735 = vsel %vm1729, %v1732, %v1734
        %v1736 = vsel %vm1728, %v1715, %v1718
        %v1737 = vsel %vm1731, %v1724, 920167782
        %v1738 = vsel %vm1730, %v1721, %v1737
        %v1739 = vsel %vm1729, %v1736, %v1738
        %v1740 = vsel %vm1728, %v1718, %v1721
        %v1741 = vsel %vm1731, %v1727, 1326507024
        %v1742 = vsel %vm1730, %v1724, %v1741
        %v1743 = vsel %vm1729, %v1740, %v1742
        %v1744 = vshll.u32 %v1704, 8
        %v1745 = vmul.u32.u64.compose %v1744, %v1743
        %v1746 = vextract.low.u32 %v1745
        %v1747 = vextract.high.u32 %v1745
        %v1748 = vmul.u32.u64.compose %v1744, %v1739
        %v1749 = vextract.low.u32 %v1748
        %v1750 = vextract.high.u32 %v1748
        %v1751 = vmul.u32 %v1744, %v1735
        %v1752 = vadd.s32 %v1747, %v1749
        %vm1753 = vc.u32 %v1747, %v1749
        %v1754 = vadd.s32 %v1750, 1
        %v1755 = vsel %vm1753, %v1754, %v1750
        %v1756 = vadd.s32 %v1751, %v1755
        %v1757 = vadd.s32 %v1756, 536870912
        %v1758 = vshrl.u32 %v1757, 30
        %v1759 = vshll.u32 %v1758, 30
        %v1760 = vsub.s32 %v1756, %v1759
        %vm1761 = vcmp.lt.s32.totalorder %v1760, 0
        %v1762 = vsub.s32 0, %v1760
        %v1763 = vsel %vm1761, %v1762, %v1760
        %v1764 = vclz %v1763
        %v1765 = vsub.s32 %v1764, 2
        %vm1766 = vcmp.gt.s32.totalorder 0, %v1765
        %v1767 = vsel %vm1766, 0, %v1765
        %v1768 = vsub.s32 32, %v1767
        %v1769 = vshll.u32 %v1760, %v1767
        %v1770 = vshrl.u32 %v1752, %v1768
        %v1771 = vor.u32 %v1769, %v1770
        %v1772 = vsub.s32 4294967266, %v1767
        %v1773 = vadd.s32 %v1772, 127
        %v1774 = vshll.u32 %v1773, 23
        %v1775 = vor.u32 4788187, %v1774
        %v1776 = vand.u32 2147483647, %v1775
        %v1778 = vcvt.s32.f32 %v1771
        %v1779 = vmul.f32 %v1778, %v1776
        %v1780 = vxor.u32 %v1779, 2147483648
        %v1781 = vsel %vm1698, %v1780, %v1779
        %v1782 = vsub.s32 4, %v1758
        %v1783 = vsel %vm1698, %v1782, %v1758
        %v1784 = vsel %vm1697, %v1559, %v1781
        %v1785 = vsel %vm1697, 0, %v1783
        %v1786 = vcosq.f32.pop %v1784
        %v1787 = vsinq.f32.pop %v1784
        %vm1788 = vweird.f32 %v1559
        %v1789 = vadd.s32 %v1785, 3
        %v1790 = vand.u32 %v1789, 3
        %vm1791 = vcmp.lt.s32.totalorder %v1790, 2
        %vm1792 = vcmp.eq.s32.totalorder %v1790, 0
        %v1793 = vxor.u32 %v1787, 2147483648
        %v1794 = vsel %vm1792, %v1786, %v1793
        %vm1795 = vcmp.eq.s32.totalorder %v1790, 2
        %v1796 = vxor.u32 %v1786, 2147483648
        %v1797 = vsel %vm1795, %v1796, %v1787
        %v1798 = vsel %vm1791, %v1794, %v1797
        %v1799 = vsel %vm1788, nan, %v1798
        %v1800 = vand.u32 2147483647, %v1564
        %vm1801 = vcmp.le.f32.partialorder %v1800, 0.7853982
        %vm1802 = vcmp.lt.s32.totalorder %v1564, 0
        %v1803 = vand.u32 %v1564, 2139095040
        %v1804 = vshrl.u32 %v1803, 23
        %v1805 = vsub.s32 %v1804, 127
        %v1806 = vand.u32 2147483647, %v1564
        %v1807 = vand.u32 %v1806, 8388607
        %v1808 = vor.u32 %v1807, 8388608
        %v1809 = vsub.s32 0, %v1808
        %v1810 = vadd.s32 %v1805, 1
        %vm1811 = vcmp.gt.s32.totalorder %v1810, 0
        %v1812 = vsel %vm1811, %v1810, 0
        %v1813 = vshrl.u32 %v1812, 5
        %v1814 = vand.u32 %v1812, 31
        %v1815 = vsub.s32 32, %v1814
        %v1816 = vshrl.u32 683565275, %v1815
        %v1817 = vshll.u32 683565275, %v1814
        %v1818 = vshrl.u32 2475754826, %v1815
        %v1819 = vor.u32 %v1817, %v1818
        %v1820 = vshll.u32 2475754826, %v1814
        %v1821 = vshrl.u32 2131351028, %v1815
        %v1822 = vor.u32 %v1820, %v1821
        %v1823 = vshll.u32 2131351028, %v1814
        %v1824 = vshrl.u32 2102212464, %v1815
        %v1825 = vor.u32 %v1823, %v1824
        %v1826 = vshll.u32 2102212464, %v1814
        %v1827 = vshrl.u32 920167782, %v1815
        %v1828 = vor.u32 %v1826, %v1827
        %v1829 = vshll.u32 920167782, %v1814
        %v1830 = vshrl.u32 1326507024, %v1815
        %v1831 = vor.u32 %v1829, %v1830
        %vm1832 = vcmp.lt.s32.totalorder %v1813, 1
        %vm1833 = vcmp.lt.s32.totalorder %v1813, 2
        %vm1834 = vcmp.lt.s32.totalorder %v1813, 3
        %vm1835 = vcmp.lt.s32.totalorder %v1813, 4
        %v1836 = vsel %vm1832, %v1816, %v1819
        %v1837 = vsel %vm1835, %v1825, 2102212464
        %v1838 = vsel %vm1834, %v1822, %v1837
        %v1839 = vsel %vm1833, %v1836, %v1838
        %v1840 = vsel %vm1832, %v1819, %v1822
        %v1841 = vsel %vm1835, %v1828, 920167782
        %v1842 = vsel %vm1834, %v1825, %v1841
        %v1843 = vsel %vm1833, %v1840, %v1842
        %v1844 = vsel %vm1832, %v1822, %v1825
        %v1845 = vsel %vm1835, %v1831, 1326507024
        %v1846 = vsel %vm1834, %v1828, %v1845
        %v1847 = vsel %vm1833, %v1844, %v1846
        %v1848 = vshll.u32 %v1808, 8
        %v1849 = vmul.u32.u64.compose %v1848, %v1847
        %v1850 = vextract.low.u32 %v1849
        %v1851 = vextract.high.u32 %v1849
        %v1852 = vmul.u32.u64.compose %v1848, %v1843
        %v1853 = vextract.low.u32 %v1852
        %v1854 = vextract.high.u32 %v1852
        %v1855 = vmul.u32 %v1848, %v1839
        %v1856 = vadd.s32 %v1851, %v1853
        %vm1857 = vc.u32 %v1851, %v1853
        %v1858 = vadd.s32 %v1854, 1
        %v1859 = vsel %vm1857, %v1858, %v1854
        %v1860 = vadd.s32 %v1855, %v1859
        %v1861 = vadd.s32 %v1860, 536870912
        %v1862 = vshrl.u32 %v1861, 30
        %v1863 = vshll.u32 %v1862, 30
        %v1864 = vsub.s32 %v1860, %v1863
        %vm1865 = vcmp.lt.s32.totalorder %v1864, 0
        %v1866 = vsub.s32 0, %v1864
        %v1867 = vsel %vm1865, %v1866, %v1864
        %v1868 = vclz %v1867
        %v1869 = vsub.s32 %v1868, 2
        %vm1870 = vcmp.gt.s32.totalorder 0, %v1869
        %v1871 = vsel %vm1870, 0, %v1869
        %v1872 = vsub.s32 32, %v1871
        %v1873 = vshll.u32 %v1864, %v1871
        %v1874 = vshrl.u32 %v1856, %v1872
        %v1875 = vor.u32 %v1873, %v1874
        %v1876 = vsub.s32 4294967266, %v1871
        %v1877 = vadd.s32 %v1876, 127
        %v1878 = vshll.u32 %v1877, 23
        %v1879 = vor.u32 4788187, %v1878
        %v1880 = vand.u32 2147483647, %v1879
        %v1882 = vcvt.s32.f32 %v1875
        %v1883 = vmul.f32 %v1882, %v1880
        %v1884 = vxor.u32 %v1883, 2147483648
        %v1885 = vsel %vm1802, %v1884, %v1883
        %v1886 = vsub.s32 4, %v1862
        %v1887 = vsel %vm1802, %v1886, %v1862
        %v1888 = vsel %vm1801, %v1564, %v1885
        %v1889 = vsel %vm1801, 0, %v1887
        %v1890 = vcosq.f32.pop %v1888
        %v1891 = vsinq.f32.pop %v1888
        %vm1892 = vweird.f32 %v1564
        %v1893 = vadd.s32 %v1889, 3
        %v1894 = vand.u32 %v1893, 3
        %vm1895 = vcmp.lt.s32.totalorder %v1894, 2
        %vm1896 = vcmp.eq.s32.totalorder %v1894, 0
        %v1897 = vxor.u32 %v1891, 2147483648
        %v1898 = vsel %vm1896, %v1890, %v1897
        %vm1899 = vcmp.eq.s32.totalorder %v1894, 2
        %v1900 = vxor.u32 %v1890, 2147483648
        %v1901 = vsel %vm1899, %v1900, %v1891
        %v1902 = vsel %vm1895, %v1898, %v1901
        %v1903 = vsel %vm1892, nan, %v1902
        %v1904 = vand.u32 2147483647, %v1569
        %vm1905 = vcmp.le.f32.partialorder %v1904, 0.7853982
        %vm1906 = vcmp.lt.s32.totalorder %v1569, 0
        %v1907 = vand.u32 %v1569, 2139095040
        %v1908 = vshrl.u32 %v1907, 23
        %v1909 = vsub.s32 %v1908, 127
        %v1910 = vand.u32 2147483647, %v1569
        %v1911 = vand.u32 %v1910, 8388607
        %v1912 = vor.u32 %v1911, 8388608
        %v1913 = vsub.s32 0, %v1912
        %v1914 = vadd.s32 %v1909, 1
        %vm1915 = vcmp.gt.s32.totalorder %v1914, 0
        %v1916 = vsel %vm1915, %v1914, 0
        %v1917 = vshrl.u32 %v1916, 5
        %v1918 = vand.u32 %v1916, 31
        %v1919 = vsub.s32 32, %v1918
        %v1920 = vshrl.u32 683565275, %v1919
        %v1921 = vshll.u32 683565275, %v1918
        %v1922 = vshrl.u32 2475754826, %v1919
        %v1923 = vor.u32 %v1921, %v1922
        %v1924 = vshll.u32 2475754826, %v1918
        %v1925 = vshrl.u32 2131351028, %v1919
        %v1926 = vor.u32 %v1924, %v1925
        %v1927 = vshll.u32 2131351028, %v1918
        %v1928 = vshrl.u32 2102212464, %v1919
        %v1929 = vor.u32 %v1927, %v1928
        %v1930 = vshll.u32 2102212464, %v1918
        %v1931 = vshrl.u32 920167782, %v1919
        %v1932 = vor.u32 %v1930, %v1931
        %v1933 = vshll.u32 920167782, %v1918
        %v1934 = vshrl.u32 1326507024, %v1919
        %v1935 = vor.u32 %v1933, %v1934
        %vm1936 = vcmp.lt.s32.totalorder %v1917, 1
        %vm1937 = vcmp.lt.s32.totalorder %v1917, 2
        %vm1938 = vcmp.lt.s32.totalorder %v1917, 3
        %vm1939 = vcmp.lt.s32.totalorder %v1917, 4
        %v1940 = vsel %vm1936, %v1920, %v1923
        %v1941 = vsel %vm1939, %v1929, 2102212464
        %v1942 = vsel %vm1938, %v1926, %v1941
        %v1943 = vsel %vm1937, %v1940, %v1942
        %v1944 = vsel %vm1936, %v1923, %v1926
        %v1945 = vsel %vm1939, %v1932, 920167782
        %v1946 = vsel %vm1938, %v1929, %v1945
        %v1947 = vsel %vm1937, %v1944, %v1946
        %v1948 = vsel %vm1936, %v1926, %v1929
        %v1949 = vsel %vm1939, %v1935, 1326507024
        %v1950 = vsel %vm1938, %v1932, %v1949
        %v1951 = vsel %vm1937, %v1948, %v1950
        %v1952 = vshll.u32 %v1912, 8
        %v1953 = vmul.u32.u64.compose %v1952, %v1951
        %v1954 = vextract.low.u32 %v1953
        %v1955 = vextract.high.u32 %v1953
        %v1956 = vmul.u32.u64.compose %v1952, %v1947
        %v1957 = vextract.low.u32 %v1956
        %v1958 = vextract.high.u32 %v1956
        %v1959 = vmul.u32 %v1952, %v1943
        %v1960 = vadd.s32 %v1955, %v1957
        %vm1961 = vc.u32 %v1955, %v1957
        %v1962 = vadd.s32 %v1958, 1
        %v1963 = vsel %vm1961, %v1962, %v1958
        %v1964 = vadd.s32 %v1959, %v1963
        %v1965 = vadd.s32 %v1964, 536870912
        %v1966 = vshrl.u32 %v1965, 30
        %v1967 = vshll.u32 %v1966, 30
        %v1968 = vsub.s32 %v1964, %v1967
        %vm1969 = vcmp.lt.s32.totalorder %v1968, 0
        %v1970 = vsub.s32 0, %v1968
        %v1971 = vsel %vm1969, %v1970, %v1968
        %v1972 = vclz %v1971
        %v1973 = vsub.s32 %v1972, 2
        %vm1974 = vcmp.gt.s32.totalorder 0, %v1973
        %v1975 = vsel %vm1974, 0, %v1973
        %v1976 = vsub.s32 32, %v1975
        %v1977 = vshll.u32 %v1968, %v1975
        %v1978 = vshrl.u32 %v1960, %v1976
        %v1979 = vor.u32 %v1977, %v1978
        %v1980 = vsub.s32 4294967266, %v1975
        %v1981 = vadd.s32 %v1980, 127
        %v1982 = vshll.u32 %v1981, 23
        %v1983 = vor.u32 4788187, %v1982
        %v1984 = vand.u32 2147483647, %v1983
        %v1986 = vcvt.s32.f32 %v1979
        %v1987 = vmul.f32 %v1986, %v1984
        %v1988 = vxor.u32 %v1987, 2147483648
        %v1989 = vsel %vm1906, %v1988, %v1987
        %v1990 = vsub.s32 4, %v1966
        %v1991 = vsel %vm1906, %v1990, %v1966
        %v1992 = vsel %vm1905, %v1569, %v1989
        %v1993 = vsel %vm1905, 0, %v1991
        %v1994 = vcosq.f32.pop %v1992
        %v1995 = vsinq.f32.pop %v1992
        %vm1996 = vweird.f32 %v1569
        %v1997 = vadd.s32 %v1993, 3
        %v1998 = vand.u32 %v1997, 3
        %vm1999 = vcmp.lt.s32.totalorder %v1998, 2
        %vm2000 = vcmp.eq.s32.totalorder %v1998, 0
        %v2001 = vxor.u32 %v1995, 2147483648
        %v2002 = vsel %vm2000, %v1994, %v2001
        %vm2003 = vcmp.eq.s32.totalorder %v1998, 2
        %v2004 = vxor.u32 %v1994, 2147483648
        %v2005 = vsel %vm2003, %v2004, %v1995
        %v2006 = vsel %vm1999, %v2002, %v2005
        %v2007 = vsel %vm1996, nan, %v2006
        %v2008 = vand.u32 2147483647, %v1574
        %vm2009 = vcmp.le.f32.partialorder %v2008, 0.7853982
        %vm2010 = vcmp.lt.s32.totalorder %v1574, 0
        %v2011 = vand.u32 %v1574, 2139095040
        %v2012 = vshrl.u32 %v2011, 23
        %v2013 = vsub.s32 %v2012, 127
        %v2014 = vand.u32 2147483647, %v1574
        %v2015 = vand.u32 %v2014, 8388607
        %v2016 = vor.u32 %v2015, 8388608
        %v2017 = vsub.s32 0, %v2016
        %v2018 = vadd.s32 %v2013, 1
        %vm2019 = vcmp.gt.s32.totalorder %v2018, 0
        %v2020 = vsel %vm2019, %v2018, 0
        %v2021 = vshrl.u32 %v2020, 5
        %v2022 = vand.u32 %v2020, 31
        %v2023 = vsub.s32 32, %v2022
        %v2024 = vshrl.u32 683565275, %v2023
        %v2025 = vshll.u32 683565275, %v2022
        %v2026 = vshrl.u32 2475754826, %v2023
        %v2027 = vor.u32 %v2025, %v2026
        %v2028 = vshll.u32 2475754826, %v2022
        %v2029 = vshrl.u32 2131351028, %v2023
        %v2030 = vor.u32 %v2028, %v2029
        %v2031 = vshll.u32 2131351028, %v2022
        %v2032 = vshrl.u32 2102212464, %v2023
        %v2033 = vor.u32 %v2031, %v2032
        %v2034 = vshll.u32 2102212464, %v2022
        %v2035 = vshrl.u32 920167782, %v2023
        %v2036 = vor.u32 %v2034, %v2035
        %v2037 = vshll.u32 920167782, %v2022
        %v2038 = vshrl.u32 1326507024, %v2023
        %v2039 = vor.u32 %v2037, %v2038
        %vm2040 = vcmp.lt.s32.totalorder %v2021, 1
        %vm2041 = vcmp.lt.s32.totalorder %v2021, 2
        %vm2042 = vcmp.lt.s32.totalorder %v2021, 3
        %vm2043 = vcmp.lt.s32.totalorder %v2021, 4
        %v2044 = vsel %vm2040, %v2024, %v2027
        %v2045 = vsel %vm2043, %v2033, 2102212464
        %v2046 = vsel %vm2042, %v2030, %v2045
        %v2047 = vsel %vm2041, %v2044, %v2046
        %v2048 = vsel %vm2040, %v2027, %v2030
        %v2049 = vsel %vm2043, %v2036, 920167782
        %v2050 = vsel %vm2042, %v2033, %v2049
        %v2051 = vsel %vm2041, %v2048, %v2050
        %v2052 = vsel %vm2040, %v2030, %v2033
        %v2053 = vsel %vm2043, %v2039, 1326507024
        %v2054 = vsel %vm2042, %v2036, %v2053
        %v2055 = vsel %vm2041, %v2052, %v2054
        %v2056 = vshll.u32 %v2016, 8
        %v2057 = vmul.u32.u64.compose %v2056, %v2055
        %v2058 = vextract.low.u32 %v2057
        %v2059 = vextract.high.u32 %v2057
        %v2060 = vmul.u32.u64.compose %v2056, %v2051
        %v2061 = vextract.low.u32 %v2060
        %v2062 = vextract.high.u32 %v2060
        %v2063 = vmul.u32 %v2056, %v2047
        %v2064 = vadd.s32 %v2059, %v2061
        %vm2065 = vc.u32 %v2059, %v2061
        %v2066 = vadd.s32 %v2062, 1
        %v2067 = vsel %vm2065, %v2066, %v2062
        %v2068 = vadd.s32 %v2063, %v2067
        %v2069 = vadd.s32 %v2068, 536870912
        %v2070 = vshrl.u32 %v2069, 30
        %v2071 = vshll.u32 %v2070, 30
        %v2072 = vsub.s32 %v2068, %v2071
        %vm2073 = vcmp.lt.s32.totalorder %v2072, 0
        %v2074 = vsub.s32 0, %v2072
        %v2075 = vsel %vm2073, %v2074, %v2072
        %v2076 = vclz %v2075
        %v2077 = vsub.s32 %v2076, 2
        %vm2078 = vcmp.gt.s32.totalorder 0, %v2077
        %v2079 = vsel %vm2078, 0, %v2077
        %v2080 = vsub.s32 32, %v2079
        %v2081 = vshll.u32 %v2072, %v2079
        %v2082 = vshrl.u32 %v2064, %v2080
        %v2083 = vor.u32 %v2081, %v2082
        %v2084 = vsub.s32 4294967266, %v2079
        %v2085 = vadd.s32 %v2084, 127
        %v2086 = vshll.u32 %v2085, 23
        %v2087 = vor.u32 4788187, %v2086
        %v2088 = vand.u32 2147483647, %v2087
        %v2090 = vcvt.s32.f32 %v2083
        %v2091 = vmul.f32 %v2090, %v2088
        %v2092 = vxor.u32 %v2091, 2147483648
        %v2093 = vsel %vm2010, %v2092, %v2091
        %v2094 = vsub.s32 4, %v2070
        %v2095 = vsel %vm2010, %v2094, %v2070
        %v2096 = vsel %vm2009, %v1574, %v2093
        %v2097 = vsel %vm2009, 0, %v2095
        %v2098 = vcosq.f32.pop %v2096
        %v2099 = vsinq.f32.pop %v2096
        %vm2100 = vweird.f32 %v1574
        %v2101 = vadd.s32 %v2097, 3
        %v2102 = vand.u32 %v2101, 3
        %vm2103 = vcmp.lt.s32.totalorder %v2102, 2
        %vm2104 = vcmp.eq.s32.totalorder %v2102, 0
        %v2105 = vxor.u32 %v2099, 2147483648
        %v2106 = vsel %vm2104, %v2098, %v2105
        %vm2107 = vcmp.eq.s32.totalorder %v2102, 2
        %v2108 = vxor.u32 %v2098, 2147483648
        %v2109 = vsel %vm2107, %v2108, %v2099
        %v2110 = vsel %vm2103, %v2106, %v2109
        %v2111 = vsel %vm2100, nan, %v2110
        %v2112 = vand.u32 2147483647, %v1579
        %vm2113 = vcmp.le.f32.partialorder %v2112, 0.7853982
        %vm2114 = vcmp.lt.s32.totalorder %v1579, 0
        %v2115 = vand.u32 %v1579, 2139095040
        %v2116 = vshrl.u32 %v2115, 23
        %v2117 = vsub.s32 %v2116, 127
        %v2118 = vand.u32 2147483647, %v1579
        %v2119 = vand.u32 %v2118, 8388607
        %v2120 = vor.u32 %v2119, 8388608
        %v2121 = vsub.s32 0, %v2120
        %v2122 = vadd.s32 %v2117, 1
        %vm2123 = vcmp.gt.s32.totalorder %v2122, 0
        %v2124 = vsel %vm2123, %v2122, 0
        %v2125 = vshrl.u32 %v2124, 5
        %v2126 = vand.u32 %v2124, 31
        %v2127 = vsub.s32 32, %v2126
        %v2128 = vshrl.u32 683565275, %v2127
        %v2129 = vshll.u32 683565275, %v2126
        %v2130 = vshrl.u32 2475754826, %v2127
        %v2131 = vor.u32 %v2129, %v2130
        %v2132 = vshll.u32 2475754826, %v2126
        %v2133 = vshrl.u32 2131351028, %v2127
        %v2134 = vor.u32 %v2132, %v2133
        %v2135 = vshll.u32 2131351028, %v2126
        %v2136 = vshrl.u32 2102212464, %v2127
        %v2137 = vor.u32 %v2135, %v2136
        %v2138 = vshll.u32 2102212464, %v2126
        %v2139 = vshrl.u32 920167782, %v2127
        %v2140 = vor.u32 %v2138, %v2139
        %v2141 = vshll.u32 920167782, %v2126
        %v2142 = vshrl.u32 1326507024, %v2127
        %v2143 = vor.u32 %v2141, %v2142
        %vm2144 = vcmp.lt.s32.totalorder %v2125, 1
        %vm2145 = vcmp.lt.s32.totalorder %v2125, 2
        %vm2146 = vcmp.lt.s32.totalorder %v2125, 3
        %vm2147 = vcmp.lt.s32.totalorder %v2125, 4
        %v2148 = vsel %vm2144, %v2128, %v2131
        %v2149 = vsel %vm2147, %v2137, 2102212464
        %v2150 = vsel %vm2146, %v2134, %v2149
        %v2151 = vsel %vm2145, %v2148, %v2150
        %v2152 = vsel %vm2144, %v2131, %v2134
        %v2153 = vsel %vm2147, %v2140, 920167782
        %v2154 = vsel %vm2146, %v2137, %v2153
        %v2155 = vsel %vm2145, %v2152, %v2154
        %v2156 = vsel %vm2144, %v2134, %v2137
        %v2157 = vsel %vm2147, %v2143, 1326507024
        %v2158 = vsel %vm2146, %v2140, %v2157
        %v2159 = vsel %vm2145, %v2156, %v2158
        %v2160 = vshll.u32 %v2120, 8
        %v2161 = vmul.u32.u64.compose %v2160, %v2159
        %v2162 = vextract.low.u32 %v2161
        %v2163 = vextract.high.u32 %v2161
        %v2164 = vmul.u32.u64.compose %v2160, %v2155
        %v2165 = vextract.low.u32 %v2164
        %v2166 = vextract.high.u32 %v2164
        %v2167 = vmul.u32 %v2160, %v2151
        %v2168 = vadd.s32 %v2163, %v2165
        %vm2169 = vc.u32 %v2163, %v2165
        %v2170 = vadd.s32 %v2166, 1
        %v2171 = vsel %vm2169, %v2170, %v2166
        %v2172 = vadd.s32 %v2167, %v2171
        %v2173 = vadd.s32 %v2172, 536870912
        %v2174 = vshrl.u32 %v2173, 30
        %v2175 = vshll.u32 %v2174, 30
        %v2176 = vsub.s32 %v2172, %v2175
        %vm2177 = vcmp.lt.s32.totalorder %v2176, 0
        %v2178 = vsub.s32 0, %v2176
        %v2179 = vsel %vm2177, %v2178, %v2176
        %v2180 = vclz %v2179
        %v2181 = vsub.s32 %v2180, 2
        %vm2182 = vcmp.gt.s32.totalorder 0, %v2181
        %v2183 = vsel %vm2182, 0, %v2181
        %v2184 = vsub.s32 32, %v2183
        %v2185 = vshll.u32 %v2176, %v2183
        %v2186 = vshrl.u32 %v2168, %v2184
        %v2187 = vor.u32 %v2185, %v2186
        %v2188 = vsub.s32 4294967266, %v2183
        %v2189 = vadd.s32 %v2188, 127
        %v2190 = vshll.u32 %v2189, 23
        %v2191 = vor.u32 4788187, %v2190
        %v2192 = vand.u32 2147483647, %v2191
        %v2194 = vcvt.s32.f32 %v2187
        %v2195 = vmul.f32 %v2194, %v2192
        %v2196 = vxor.u32 %v2195, 2147483648
        %v2197 = vsel %vm2114, %v2196, %v2195
        %v2198 = vsub.s32 4, %v2174
        %v2199 = vsel %vm2114, %v2198, %v2174
        %v2200 = vsel %vm2113, %v1579, %v2197
        %v2201 = vsel %vm2113, 0, %v2199
        %v2202 = vcosq.f32.pop %v2200
        %v2203 = vsinq.f32.pop %v2200
        %vm2204 = vweird.f32 %v1579
        %v2205 = vadd.s32 %v2201, 3
        %v2206 = vand.u32 %v2205, 3
        %vm2207 = vcmp.lt.s32.totalorder %v2206, 2
        %vm2208 = vcmp.eq.s32.totalorder %v2206, 0
        %v2209 = vxor.u32 %v2203, 2147483648
        %v2210 = vsel %vm2208, %v2202, %v2209
        %vm2211 = vcmp.eq.s32.totalorder %v2206, 2
        %v2212 = vxor.u32 %v2202, 2147483648
        %v2213 = vsel %vm2211, %v2212, %v2203
        %v2214 = vsel %vm2207, %v2210, %v2213
        %v2215 = vsel %vm2204, nan, %v2214
        %v2216 = vand.u32 2147483647, %v1584
        %vm2217 = vcmp.le.f32.partialorder %v2216, 0.7853982
        %vm2218 = vcmp.lt.s32.totalorder %v1584, 0
        %v2219 = vand.u32 %v1584, 2139095040
        %v2220 = vshrl.u32 %v2219, 23
        %v2221 = vsub.s32 %v2220, 127
        %v2222 = vand.u32 2147483647, %v1584
        %v2223 = vand.u32 %v2222, 8388607
        %v2224 = vor.u32 %v2223, 8388608
        %v2225 = vsub.s32 0, %v2224
        %v2226 = vadd.s32 %v2221, 1
        %vm2227 = vcmp.gt.s32.totalorder %v2226, 0
        %v2228 = vsel %vm2227, %v2226, 0
        %v2229 = vshrl.u32 %v2228, 5
        %v2230 = vand.u32 %v2228, 31
        %v2231 = vsub.s32 32, %v2230
        %v2232 = vshrl.u32 683565275, %v2231
        %v2233 = vshll.u32 683565275, %v2230
        %v2234 = vshrl.u32 2475754826, %v2231
        %v2235 = vor.u32 %v2233, %v2234
        %v2236 = vshll.u32 2475754826, %v2230
        %v2237 = vshrl.u32 2131351028, %v2231
        %v2238 = vor.u32 %v2236, %v2237
        %v2239 = vshll.u32 2131351028, %v2230
        %v2240 = vshrl.u32 2102212464, %v2231
        %v2241 = vor.u32 %v2239, %v2240
        %v2242 = vshll.u32 2102212464, %v2230
        %v2243 = vshrl.u32 920167782, %v2231
        %v2244 = vor.u32 %v2242, %v2243
        %v2245 = vshll.u32 920167782, %v2230
        %v2246 = vshrl.u32 1326507024, %v2231
        %v2247 = vor.u32 %v2245, %v2246
        %vm2248 = vcmp.lt.s32.totalorder %v2229, 1
        %vm2249 = vcmp.lt.s32.totalorder %v2229, 2
        %vm2250 = vcmp.lt.s32.totalorder %v2229, 3
        %vm2251 = vcmp.lt.s32.totalorder %v2229, 4
        %v2252 = vsel %vm2248, %v2232, %v2235
        %v2253 = vsel %vm2251, %v2241, 2102212464
        %v2254 = vsel %vm2250, %v2238, %v2253
        %v2255 = vsel %vm2249, %v2252, %v2254
        %v2256 = vsel %vm2248, %v2235, %v2238
        %v2257 = vsel %vm2251, %v2244, 920167782
        %v2258 = vsel %vm2250, %v2241, %v2257
        %v2259 = vsel %vm2249, %v2256, %v2258
        %v2260 = vsel %vm2248, %v2238, %v2241
        %v2261 = vsel %vm2251, %v2247, 1326507024
        %v2262 = vsel %vm2250, %v2244, %v2261
        %v2263 = vsel %vm2249, %v2260, %v2262
        %v2264 = vshll.u32 %v2224, 8
        %v2265 = vmul.u32.u64.compose %v2264, %v2263
        %v2266 = vextract.low.u32 %v2265
        %v2267 = vextract.high.u32 %v2265
        %v2268 = vmul.u32.u64.compose %v2264, %v2259
        %v2269 = vextract.low.u32 %v2268
        %v2270 = vextract.high.u32 %v2268
        %v2271 = vmul.u32 %v2264, %v2255
        %v2272 = vadd.s32 %v2267, %v2269
        %vm2273 = vc.u32 %v2267, %v2269
        %v2274 = vadd.s32 %v2270, 1
        %v2275 = vsel %vm2273, %v2274, %v2270
        %v2276 = vadd.s32 %v2271, %v2275
        %v2277 = vadd.s32 %v2276, 536870912
        %v2278 = vshrl.u32 %v2277, 30
        %v2279 = vshll.u32 %v2278, 30
        %v2280 = vsub.s32 %v2276, %v2279
        %vm2281 = vcmp.lt.s32.totalorder %v2280, 0
        %v2282 = vsub.s32 0, %v2280
        %v2283 = vsel %vm2281, %v2282, %v2280
        %v2284 = vclz %v2283
        %v2285 = vsub.s32 %v2284, 2
        %vm2286 = vcmp.gt.s32.totalorder 0, %v2285
        %v2287 = vsel %vm2286, 0, %v2285
        %v2288 = vsub.s32 32, %v2287
        %v2289 = vshll.u32 %v2280, %v2287
        %v2290 = vshrl.u32 %v2272, %v2288
        %v2291 = vor.u32 %v2289, %v2290
        %v2292 = vsub.s32 4294967266, %v2287
        %v2293 = vadd.s32 %v2292, 127
        %v2294 = vshll.u32 %v2293, 23
        %v2295 = vor.u32 4788187, %v2294
        %v2296 = vand.u32 2147483647, %v2295
        %v2298 = vcvt.s32.f32 %v2291
        %v2299 = vmul.f32 %v2298, %v2296
        %v2300 = vxor.u32 %v2299, 2147483648
        %v2301 = vsel %vm2218, %v2300, %v2299
        %v2302 = vsub.s32 4, %v2278
        %v2303 = vsel %vm2218, %v2302, %v2278
        %v2304 = vsel %vm2217, %v1584, %v2301
        %v2305 = vsel %vm2217, 0, %v2303
        %v2306 = vcosq.f32.pop %v2304
        %v2307 = vsinq.f32.pop %v2304
        %vm2308 = vweird.f32 %v1584
        %v2309 = vadd.s32 %v2305, 3
        %v2310 = vand.u32 %v2309, 3
        %vm2311 = vcmp.lt.s32.totalorder %v2310, 2
        %vm2312 = vcmp.eq.s32.totalorder %v2310, 0
        %v2313 = vxor.u32 %v2307, 2147483648
        %v2314 = vsel %vm2312, %v2306, %v2313
        %vm2315 = vcmp.eq.s32.totalorder %v2310, 2
        %v2316 = vxor.u32 %v2306, 2147483648
        %v2317 = vsel %vm2315, %v2316, %v2307
        %v2318 = vsel %vm2311, %v2314, %v2317
        %v2319 = vsel %vm2308, nan, %v2318
        %v2320 = vand.u32 2147483647, %v1589
        %vm2321 = vcmp.le.f32.partialorder %v2320, 0.7853982
        %vm2322 = vcmp.lt.s32.totalorder %v1589, 0
        %v2323 = vand.u32 %v1589, 2139095040
        %v2324 = vshrl.u32 %v2323, 23
        %v2325 = vsub.s32 %v2324, 127
        %v2326 = vand.u32 2147483647, %v1589
        %v2327 = vand.u32 %v2326, 8388607
        %v2328 = vor.u32 %v2327, 8388608
        %v2329 = vsub.s32 0, %v2328
        %v2330 = vadd.s32 %v2325, 1
        %vm2331 = vcmp.gt.s32.totalorder %v2330, 0
        %v2332 = vsel %vm2331, %v2330, 0
        %v2333 = vshrl.u32 %v2332, 5
        %v2334 = vand.u32 %v2332, 31
        %v2335 = vsub.s32 32, %v2334
        %v2336 = vshrl.u32 683565275, %v2335
        %v2337 = vshll.u32 683565275, %v2334
        %v2338 = vshrl.u32 2475754826, %v2335
        %v2339 = vor.u32 %v2337, %v2338
        %v2340 = vshll.u32 2475754826, %v2334
        %v2341 = vshrl.u32 2131351028, %v2335
        %v2342 = vor.u32 %v2340, %v2341
        %v2343 = vshll.u32 2131351028, %v2334
        %v2344 = vshrl.u32 2102212464, %v2335
        %v2345 = vor.u32 %v2343, %v2344
        %v2346 = vshll.u32 2102212464, %v2334
        %v2347 = vshrl.u32 920167782, %v2335
        %v2348 = vor.u32 %v2346, %v2347
        %v2349 = vshll.u32 920167782, %v2334
        %v2350 = vshrl.u32 1326507024, %v2335
        %v2351 = vor.u32 %v2349, %v2350
        %vm2352 = vcmp.lt.s32.totalorder %v2333, 1
        %vm2353 = vcmp.lt.s32.totalorder %v2333, 2
        %vm2354 = vcmp.lt.s32.totalorder %v2333, 3
        %vm2355 = vcmp.lt.s32.totalorder %v2333, 4
        %v2356 = vsel %vm2352, %v2336, %v2339
        %v2357 = vsel %vm2355, %v2345, 2102212464
        %v2358 = vsel %vm2354, %v2342, %v2357
        %v2359 = vsel %vm2353, %v2356, %v2358
        %v2360 = vsel %vm2352, %v2339, %v2342
        %v2361 = vsel %vm2355, %v2348, 920167782
        %v2362 = vsel %vm2354, %v2345, %v2361
        %v2363 = vsel %vm2353, %v2360, %v2362
        %v2364 = vsel %vm2352, %v2342, %v2345
        %v2365 = vsel %vm2355, %v2351, 1326507024
        %v2366 = vsel %vm2354, %v2348, %v2365
        %v2367 = vsel %vm2353, %v2364, %v2366
        %v2368 = vshll.u32 %v2328, 8
        %v2369 = vmul.u32.u64.compose %v2368, %v2367
        %v2370 = vextract.low.u32 %v2369
        %v2371 = vextract.high.u32 %v2369
        %v2372 = vmul.u32.u64.compose %v2368, %v2363
        %v2373 = vextract.low.u32 %v2372
        %v2374 = vextract.high.u32 %v2372
        %v2375 = vmul.u32 %v2368, %v2359
        %v2376 = vadd.s32 %v2371, %v2373
        %vm2377 = vc.u32 %v2371, %v2373
        %v2378 = vadd.s32 %v2374, 1
        %v2379 = vsel %vm2377, %v2378, %v2374
        %v2380 = vadd.s32 %v2375, %v2379
        %v2381 = vadd.s32 %v2380, 536870912
        %v2382 = vshrl.u32 %v2381, 30
        %v2383 = vshll.u32 %v2382, 30
        %v2384 = vsub.s32 %v2380, %v2383
        %vm2385 = vcmp.lt.s32.totalorder %v2384, 0
        %v2386 = vsub.s32 0, %v2384
        %v2387 = vsel %vm2385, %v2386, %v2384
        %v2388 = vclz %v2387
        %v2389 = vsub.s32 %v2388, 2
        %vm2390 = vcmp.gt.s32.totalorder 0, %v2389
        %v2391 = vsel %vm2390, 0, %v2389
        %v2392 = vsub.s32 32, %v2391
        %v2393 = vshll.u32 %v2384, %v2391
        %v2394 = vshrl.u32 %v2376, %v2392
        %v2395 = vor.u32 %v2393, %v2394
        %v2396 = vsub.s32 4294967266, %v2391
        %v2397 = vadd.s32 %v2396, 127
        %v2398 = vshll.u32 %v2397, 23
        %v2399 = vor.u32 4788187, %v2398
        %v2400 = vand.u32 2147483647, %v2399
        %v2402 = vcvt.s32.f32 %v2395
        %v2403 = vmul.f32 %v2402, %v2400
        %v2404 = vxor.u32 %v2403, 2147483648
        %v2405 = vsel %vm2322, %v2404, %v2403
        %v2406 = vsub.s32 4, %v2382
        %v2407 = vsel %vm2322, %v2406, %v2382
        %v2408 = vsel %vm2321, %v1589, %v2405
        %v2409 = vsel %vm2321, 0, %v2407
        %v2410 = vcosq.f32.pop %v2408
        %v2411 = vsinq.f32.pop %v2408
        %vm2412 = vweird.f32 %v1589
        %v2413 = vadd.s32 %v2409, 3
        %v2414 = vand.u32 %v2413, 3
        %vm2415 = vcmp.lt.s32.totalorder %v2414, 2
        %vm2416 = vcmp.eq.s32.totalorder %v2414, 0
        %v2417 = vxor.u32 %v2411, 2147483648
        %v2418 = vsel %vm2416, %v2410, %v2417
        %vm2419 = vcmp.eq.s32.totalorder %v2414, 2
        %v2420 = vxor.u32 %v2410, 2147483648
        %v2421 = vsel %vm2419, %v2420, %v2411
        %v2422 = vsel %vm2415, %v2418, %v2421
        %v2423 = vsel %vm2412, nan, %v2422
        %v2424 = vld [vmem:[%s5] sm:$0xff]
        %v2425 = vld [vmem:[%s5 + $0x8] sm:$0xff]
        %v2426 = vld [vmem:[%s5 + $0x10] sm:$0xff]
        %v2427 = vld [vmem:[%s5 + $0x18] sm:$0xff]
        %v2428 = vld [vmem:[%s5 + $0x20] sm:$0xff]
        %v2429 = vld [vmem:[%s5 + $0x28] sm:$0xff]
        %v2430 = vld [vmem:[%s5 + $0x30] sm:$0xff]
        %v2431 = vld [vmem:[%s5 + $0x38] sm:$0xff]
        %v2432 = vld [vmem:[%s6] sm:$0xff]
        %v2433 = vld [vmem:[%s6 + $0x8] sm:$0xff]
        %v2434 = vld [vmem:[%s6 + $0x10] sm:$0xff]
        %v2435 = vld [vmem:[%s6 + $0x18] sm:$0xff]
        %v2436 = vld [vmem:[%s6 + $0x20] sm:$0xff]
        %v2437 = vld [vmem:[%s6 + $0x28] sm:$0xff]
        %v2438 = vld [vmem:[%s6 + $0x30] sm:$0xff]
        %v2439 = vld [vmem:[%s6 + $0x38] sm:$0xff]
        %2441 = vset.pattern.permute.xlu0 0
        %2442 = vperm.xlu0 %2441, %v2432
        %v2443 = vpop.permute.xlu0 %2442
        %2446 = vset.pattern.permute.xlu0 0
        %2447 = vperm.xlu0 %2446, %v2433
        %v2448 = vpop.permute.xlu0 %2447
        %2451 = vset.pattern.permute.xlu0 0
        %2452 = vperm.xlu0 %2451, %v2434
        %v2453 = vpop.permute.xlu0 %2452
        %2456 = vset.pattern.permute.xlu0 0
        %2457 = vperm.xlu0 %2456, %v2435
        %v2458 = vpop.permute.xlu0 %2457
        %2461 = vset.pattern.permute.xlu0 0
        %2462 = vperm.xlu0 %2461, %v2436
        %v2463 = vpop.permute.xlu0 %2462
        %2466 = vset.pattern.permute.xlu0 0
        %2467 = vperm.xlu0 %2466, %v2437
        %v2468 = vpop.permute.xlu0 %2467
        %2471 = vset.pattern.permute.xlu0 0
        %2472 = vperm.xlu0 %2471, %v2438
        %v2473 = vpop.permute.xlu0 %2472
        %2476 = vset.pattern.permute.xlu0 0
        %2477 = vperm.xlu0 %2476, %v2439
        %v2478 = vpop.permute.xlu0 %2477
        %v2481 = vsel %vm1462, %v2424, 0
        %v2484 = vsel %vm1462, %v2425, 0
        %v2487 = vsel %vm1462, %v2426, 0
        %v2490 = vsel %vm1462, %v2427, 0
        %v2493 = vsel %vm1462, %v2428, 0
        %v2496 = vsel %vm1462, %v2429, 0
        %v2499 = vsel %vm1462, %v2430, 0
        %v2502 = vsel %vm1462, %v2431, 0
        %2504 = vmatprep.subr.mxu0 0.0
        %2505 = vmatpush1.msra.mxu0 %v1695
        %2506 = vmatprep.subr.mxu0 0.0
        %2507 = vmatpush1.msra.mxu0 %v1799
        %2508 = vmatprep.subr.mxu0 0.0
        %2509 = vmatpush1.msra.mxu0 %v1903
        %2510 = vmatprep.subr.mxu0 0.0
        %2511 = vmatpush1.msra.mxu0 %v2007
        %2512 = vmatprep.subr.mxu0 0.0
        %2513 = vmatpush1.msra.mxu0 %v2111
        %2514 = vmatprep.subr.mxu0 0.0
        %2515 = vmatpush1.msra.mxu0 %v2215
        %2516 = vmatprep.subr.mxu0 0.0
        %2517 = vmatpush1.msra.mxu0 %v2319
        %2518 = vmatprep.subr.mxu0 0.0
        %2519 = vmatpush1.msra.mxu0 %v2423
        %2520 = vmatprep.subr.mxu0 0.0
        %2521 = vmatpush1.msra.mxu0 0.0
        %2522 = vmatprep.subr.mxu0 0.0
        %2523 = vmatpush1.msra.mxu0 0.0
        %2524 = vmatprep.subr.mxu0 0.0
        %2525 = vmatpush1.msra.mxu0 0.0
        %2526 = vmatprep.subr.mxu0 0.0
        %2527 = vmatpush1.msra.mxu0 0.0
        %2528 = vmatprep.subr.mxu0 0.0
        %2529 = vmatpush1.msra.mxu0 0.0
        %2530 = vmatprep.subr.mxu0 0.0
        %2531 = vmatpush1.msra.mxu0 0.0
        %2532 = vmatprep.subr.mxu0 0.0
        %2533 = vmatpush1.msra.mxu0 0.0
        %2534 = vmatprep.subr.mxu0 0.0
        %2535 = vmatpush1.msra.mxu0 0.0
        %2536 = vmatprep.subr.mxu0 0.0
        %2537 = vmatpush1.msra.mxu0 0.0
        %2538 = vmatprep.subr.mxu0 0.0
        %2539 = vmatpush1.msra.mxu0 0.0
        %2540 = vmatprep.subr.mxu0 0.0
        %2541 = vmatpush1.msra.mxu0 0.0
        %2542 = vmatprep.subr.mxu0 0.0
        %2543 = vmatpush1.msra.mxu0 0.0
        %2544 = vmatprep.subr.mxu0 0.0
        %2545 = vmatpush1.msra.mxu0 0.0
        %2546 = vmatprep.subr.mxu0 0.0
        %2547 = vmatpush1.msra.mxu0 0.0
        %2548 = vmatprep.subr.mxu0 0.0
        %2549 = vmatpush1.msra.mxu0 0.0
        %2550 = vmatprep.subr.mxu0 0.0
        %2551 = vmatpush1.msra.mxu0 0.0
        %2552 = vmatprep.subr.mxu0 0.0
        %2553 = vmatpush1.msra.mxu0 0.0
        %2554 = vmatprep.subr.mxu0 0.0
        %2555 = vmatpush1.msra.mxu0 0.0
        %2556 = vmatprep.subr.mxu0 0.0
        %2557 = vmatpush1.msra.mxu0 0.0
        %2558 = vmatprep.subr.mxu0 0.0
        %2559 = vmatpush1.msra.mxu0 0.0
        %2560 = vmatprep.subr.mxu0 0.0
        %2561 = vmatpush1.msra.mxu0 0.0
        %2562 = vmatprep.subr.mxu0 0.0
        %2563 = vmatpush1.msra.mxu0 0.0
        %2564 = vmatprep.subr.mxu0 0.0
        %2565 = vmatpush1.msra.mxu0 0.0
        %2566 = vmatprep.subr.mxu0 0.0
        %2567 = vmatpush1.msra.mxu0 0.0
        %2568 = vmatprep.mubr.f32.mxu0 0.0
        %2569 = vmatmul.mubr.f32.gmra.mrb[0].mxu0 %v2481
        %v2570 = vpop.f32.mrb[0].mxu0
        %v2571 = vadd.f32 %v2443, %v2570
        %v2572 = vpop.f32.mrb[0].mxu0
        %2573 = vmatprep.mubr.f32.mxu0 0.0
        %2574 = vmatmul.mubr.f32.gmra.mrb[0].mxu0 %v2484
        %v2575 = vpop.f32.mrb[0].mxu0
        %v2576 = vadd.f32 %v2448, %v2575
        %v2577 = vpop.f32.mrb[0].mxu0
        %2578 = vmatprep.mubr.f32.mxu0 0.0
        %2579 = vmatmul.mubr.f32.gmra.mrb[0].mxu0 %v2487
        %v2580 = vpop.f32.mrb[0].mxu0
        %v2581 = vadd.f32 %v2453, %v2580
        %v2582 = vpop.f32.mrb[0].mxu0
        %2583 = vmatprep.mubr.f32.mxu0 0.0
        %2584 = vmatmul.mubr.f32.gmra.mrb[0].mxu0 %v2490
        %v2585 = vpop.f32.mrb[0].mxu0
        %v2586 = vadd.f32 %v2458, %v2585
        %v2587 = vpop.f32.mrb[0].mxu0
        %2588 = vmatprep.mubr.f32.mxu0 0.0
        %2589 = vmatmul.mubr.f32.gmra.mrb[0].mxu0 %v2493
        %v2590 = vpop.f32.mrb[0].mxu0
        %v2591 = vadd.f32 %v2463, %v2590
        %v2592 = vpop.f32.mrb[0].mxu0
        %2593 = vmatprep.mubr.f32.mxu0 0.0
        %2594 = vmatmul.mubr.f32.gmra.mrb[0].mxu0 %v2496
        %v2595 = vpop.f32.mrb[0].mxu0
        %v2596 = vadd.f32 %v2468, %v2595
        %v2597 = vpop.f32.mrb[0].mxu0
        %2598 = vmatprep.mubr.f32.mxu0 0.0
        %2599 = vmatmul.mubr.f32.gmra.mrb[0].mxu0 %v2499
        %v2600 = vpop.f32.mrb[0].mxu0
        %v2601 = vadd.f32 %v2473, %v2600
        %v2602 = vpop.f32.mrb[0].mxu0
        %2603 = vmatprep.mubr.f32.mxu0 0.0
        %2604 = vmatmul.mubr.f32.gmra.mrb[0].mxu0 %v2502
        %v2605 = vpop.f32.mrb[0].mxu0
        %v2606 = vadd.f32 %v2478, %v2605
        %v2607 = vpop.f32.mrb[0].mxu0
        %2608 = vdwg.mxu0
        %v2609 = vand.u32 2147483647, %v2571
        %vm2610 = vcmp.le.f32.partialorder %v2609, 0.7853982
        %vm2611 = vcmp.lt.s32.totalorder %v2571, 0
        %v2612 = vand.u32 %v2571, 2139095040
        %v2613 = vshrl.u32 %v2612, 23
        %v2614 = vsub.s32 %v2613, 127
        %v2615 = vand.u32 2147483647, %v2571
        %v2616 = vand.u32 %v2615, 8388607
        %v2617 = vor.u32 %v2616, 8388608
        %v2618 = vsub.s32 0, %v2617
        %v2619 = vadd.s32 %v2614, 1
        %vm2620 = vcmp.gt.s32.totalorder %v2619, 0
        %v2621 = vsel %vm2620, %v2619, 0
        %v2622 = vshrl.u32 %v2621, 5
        %v2623 = vand.u32 %v2621, 31
        %v2624 = vsub.s32 32, %v2623
        %v2625 = vshrl.u32 683565275, %v2624
        %v2626 = vshll.u32 683565275, %v2623
        %v2627 = vshrl.u32 2475754826, %v2624
        %v2628 = vor.u32 %v2626, %v2627
        %v2629 = vshll.u32 2475754826, %v2623
        %v2630 = vshrl.u32 2131351028, %v2624
        %v2631 = vor.u32 %v2629, %v2630
        %v2632 = vshll.u32 2131351028, %v2623
        %v2633 = vshrl.u32 2102212464, %v2624
        %v2634 = vor.u32 %v2632, %v2633
        %v2635 = vshll.u32 2102212464, %v2623
        %v2636 = vshrl.u32 920167782, %v2624
        %v2637 = vor.u32 %v2635, %v2636
        %v2638 = vshll.u32 920167782, %v2623
        %v2639 = vshrl.u32 1326507024, %v2624
        %v2640 = vor.u32 %v2638, %v2639
        %vm2641 = vcmp.lt.s32.totalorder %v2622, 1
        %vm2642 = vcmp.lt.s32.totalorder %v2622, 2
        %vm2643 = vcmp.lt.s32.totalorder %v2622, 3
        %vm2644 = vcmp.lt.s32.totalorder %v2622, 4
        %v2645 = vsel %vm2641, %v2625, %v2628
        %v2646 = vsel %vm2644, %v2634, 2102212464
        %v2647 = vsel %vm2643, %v2631, %v2646
        %v2648 = vsel %vm2642, %v2645, %v2647
        %v2649 = vsel %vm2641, %v2628, %v2631
        %v2650 = vsel %vm2644, %v2637, 920167782
        %v2651 = vsel %vm2643, %v2634, %v2650
        %v2652 = vsel %vm2642, %v2649, %v2651
        %v2653 = vsel %vm2641, %v2631, %v2634
        %v2654 = vsel %vm2644, %v2640, 1326507024
        %v2655 = vsel %vm2643, %v2637, %v2654
        %v2656 = vsel %vm2642, %v2653, %v2655
        %v2657 = vshll.u32 %v2617, 8
        %v2658 = vmul.u32.u64.compose %v2657, %v2656
        %v2659 = vextract.low.u32 %v2658
        %v2660 = vextract.high.u32 %v2658
        %v2661 = vmul.u32.u64.compose %v2657, %v2652
        %v2662 = vextract.low.u32 %v2661
        %v2663 = vextract.high.u32 %v2661
        %v2664 = vmul.u32 %v2657, %v2648
        %v2665 = vadd.s32 %v2660, %v2662
        %vm2666 = vc.u32 %v2660, %v2662
        %v2667 = vadd.s32 %v2663, 1
        %v2668 = vsel %vm2666, %v2667, %v2663
        %v2669 = vadd.s32 %v2664, %v2668
        %v2670 = vadd.s32 %v2669, 536870912
        %v2671 = vshrl.u32 %v2670, 30
        %v2672 = vshll.u32 %v2671, 30
        %v2673 = vsub.s32 %v2669, %v2672
        %vm2674 = vcmp.lt.s32.totalorder %v2673, 0
        %v2675 = vsub.s32 0, %v2673
        %v2676 = vsel %vm2674, %v2675, %v2673
        %v2677 = vclz %v2676
        %v2678 = vsub.s32 %v2677, 2
        %vm2679 = vcmp.gt.s32.totalorder 0, %v2678
        %v2680 = vsel %vm2679, 0, %v2678
        %v2681 = vsub.s32 32, %v2680
        %v2682 = vshll.u32 %v2673, %v2680
        %v2683 = vshrl.u32 %v2665, %v2681
        %v2684 = vor.u32 %v2682, %v2683
        %v2685 = vsub.s32 4294967266, %v2680
        %v2686 = vadd.s32 %v2685, 127
        %v2687 = vshll.u32 %v2686, 23
        %v2688 = vor.u32 4788187, %v2687
        %v2689 = vand.u32 2147483647, %v2688
        %v2691 = vcvt.s32.f32 %v2684
        %v2692 = vmul.f32 %v2691, %v2689
        %v2693 = vxor.u32 %v2692, 2147483648
        %v2694 = vsel %vm2611, %v2693, %v2692
        %v2695 = vsub.s32 4, %v2671
        %v2696 = vsel %vm2611, %v2695, %v2671
        %v2697 = vsel %vm2610, %v2571, %v2694
        %v2698 = vsel %vm2610, 0, %v2696
        %v2699 = vcosq.f32.pop %v2697
        %v2700 = vsinq.f32.pop %v2697
        %vm2701 = vweird.f32 %v2571
        %v2702 = vadd.s32 %v2698, 3
        %v2703 = vand.u32 %v2702, 3
        %vm2704 = vcmp.lt.s32.totalorder %v2703, 2
        %vm2705 = vcmp.eq.s32.totalorder %v2703, 0
        %v2706 = vxor.u32 %v2700, 2147483648
        %v2707 = vsel %vm2705, %v2699, %v2706
        %vm2708 = vcmp.eq.s32.totalorder %v2703, 2
        %v2709 = vxor.u32 %v2699, 2147483648
        %v2710 = vsel %vm2708, %v2709, %v2700
        %v2711 = vsel %vm2704, %v2707, %v2710
        %v2712 = vsel %vm2701, nan, %v2711
        %v2713 = vand.u32 2147483647, %v2576
        %vm2714 = vcmp.le.f32.partialorder %v2713, 0.7853982
        %vm2715 = vcmp.lt.s32.totalorder %v2576, 0
        %v2716 = vand.u32 %v2576, 2139095040
        %v2717 = vshrl.u32 %v2716, 23
        %v2718 = vsub.s32 %v2717, 127
        %v2719 = vand.u32 2147483647, %v2576
        %v2720 = vand.u32 %v2719, 8388607
        %v2721 = vor.u32 %v2720, 8388608
        %v2722 = vsub.s32 0, %v2721
        %v2723 = vadd.s32 %v2718, 1
        %vm2724 = vcmp.gt.s32.totalorder %v2723, 0
        %v2725 = vsel %vm2724, %v2723, 0
        %v2726 = vshrl.u32 %v2725, 5
        %v2727 = vand.u32 %v2725, 31
        %v2728 = vsub.s32 32, %v2727
        %v2729 = vshrl.u32 683565275, %v2728
        %v2730 = vshll.u32 683565275, %v2727
        %v2731 = vshrl.u32 2475754826, %v2728
        %v2732 = vor.u32 %v2730, %v2731
        %v2733 = vshll.u32 2475754826, %v2727
        %v2734 = vshrl.u32 2131351028, %v2728
        %v2735 = vor.u32 %v2733, %v2734
        %v2736 = vshll.u32 2131351028, %v2727
        %v2737 = vshrl.u32 2102212464, %v2728
        %v2738 = vor.u32 %v2736, %v2737
        %v2739 = vshll.u32 2102212464, %v2727
        %v2740 = vshrl.u32 920167782, %v2728
        %v2741 = vor.u32 %v2739, %v2740
        %v2742 = vshll.u32 920167782, %v2727
        %v2743 = vshrl.u32 1326507024, %v2728
        %v2744 = vor.u32 %v2742, %v2743
        %vm2745 = vcmp.lt.s32.totalorder %v2726, 1
        %vm2746 = vcmp.lt.s32.totalorder %v2726, 2
        %vm2747 = vcmp.lt.s32.totalorder %v2726, 3
        %vm2748 = vcmp.lt.s32.totalorder %v2726, 4
        %v2749 = vsel %vm2745, %v2729, %v2732
        %v2750 = vsel %vm2748, %v2738, 2102212464
        %v2751 = vsel %vm2747, %v2735, %v2750
        %v2752 = vsel %vm2746, %v2749, %v2751
        %v2753 = vsel %vm2745, %v2732, %v2735
        %v2754 = vsel %vm2748, %v2741, 920167782
        %v2755 = vsel %vm2747, %v2738, %v2754
        %v2756 = vsel %vm2746, %v2753, %v2755
        %v2757 = vsel %vm2745, %v2735, %v2738
        %v2758 = vsel %vm2748, %v2744, 1326507024
        %v2759 = vsel %vm2747, %v2741, %v2758
        %v2760 = vsel %vm2746, %v2757, %v2759
        %v2761 = vshll.u32 %v2721, 8
        %v2762 = vmul.u32.u64.compose %v2761, %v2760
        %v2763 = vextract.low.u32 %v2762
        %v2764 = vextract.high.u32 %v2762
        %v2765 = vmul.u32.u64.compose %v2761, %v2756
        %v2766 = vextract.low.u32 %v2765
        %v2767 = vextract.high.u32 %v2765
        %v2768 = vmul.u32 %v2761, %v2752
        %v2769 = vadd.s32 %v2764, %v2766
        %vm2770 = vc.u32 %v2764, %v2766
        %v2771 = vadd.s32 %v2767, 1
        %v2772 = vsel %vm2770, %v2771, %v2767
        %v2773 = vadd.s32 %v2768, %v2772
        %v2774 = vadd.s32 %v2773, 536870912
        %v2775 = vshrl.u32 %v2774, 30
        %v2776 = vshll.u32 %v2775, 30
        %v2777 = vsub.s32 %v2773, %v2776
        %vm2778 = vcmp.lt.s32.totalorder %v2777, 0
        %v2779 = vsub.s32 0, %v2777
        %v2780 = vsel %vm2778, %v2779, %v2777
        %v2781 = vclz %v2780
        %v2782 = vsub.s32 %v2781, 2
        %vm2783 = vcmp.gt.s32.totalorder 0, %v2782
        %v2784 = vsel %vm2783, 0, %v2782
        %v2785 = vsub.s32 32, %v2784
        %v2786 = vshll.u32 %v2777, %v2784
        %v2787 = vshrl.u32 %v2769, %v2785
        %v2788 = vor.u32 %v2786, %v2787
        %v2789 = vsub.s32 4294967266, %v2784
        %v2790 = vadd.s32 %v2789, 127
        %v2791 = vshll.u32 %v2790, 23
        %v2792 = vor.u32 4788187, %v2791
        %v2793 = vand.u32 2147483647, %v2792
        %v2795 = vcvt.s32.f32 %v2788
        %v2796 = vmul.f32 %v2795, %v2793
        %v2797 = vxor.u32 %v2796, 2147483648
        %v2798 = vsel %vm2715, %v2797, %v2796
        %v2799 = vsub.s32 4, %v2775
        %v2800 = vsel %vm2715, %v2799, %v2775
        %v2801 = vsel %vm2714, %v2576, %v2798
        %v2802 = vsel %vm2714, 0, %v2800
        %v2803 = vcosq.f32.pop %v2801
        %v2804 = vsinq.f32.pop %v2801
        %vm2805 = vweird.f32 %v2576
        %v2806 = vadd.s32 %v2802, 3
        %v2807 = vand.u32 %v2806, 3
        %vm2808 = vcmp.lt.s32.totalorder %v2807, 2
        %vm2809 = vcmp.eq.s32.totalorder %v2807, 0
        %v2810 = vxor.u32 %v2804, 2147483648
        %v2811 = vsel %vm2809, %v2803, %v2810
        %vm2812 = vcmp.eq.s32.totalorder %v2807, 2
        %v2813 = vxor.u32 %v2803, 2147483648
        %v2814 = vsel %vm2812, %v2813, %v2804
        %v2815 = vsel %vm2808, %v2811, %v2814
        %v2816 = vsel %vm2805, nan, %v2815
        %v2817 = vand.u32 2147483647, %v2581
        %vm2818 = vcmp.le.f32.partialorder %v2817, 0.7853982
        %vm2819 = vcmp.lt.s32.totalorder %v2581, 0
        %v2820 = vand.u32 %v2581, 2139095040
        %v2821 = vshrl.u32 %v2820, 23
        %v2822 = vsub.s32 %v2821, 127
        %v2823 = vand.u32 2147483647, %v2581
        %v2824 = vand.u32 %v2823, 8388607
        %v2825 = vor.u32 %v2824, 8388608
        %v2826 = vsub.s32 0, %v2825
        %v2827 = vadd.s32 %v2822, 1
        %vm2828 = vcmp.gt.s32.totalorder %v2827, 0
        %v2829 = vsel %vm2828, %v2827, 0
        %v2830 = vshrl.u32 %v2829, 5
        %v2831 = vand.u32 %v2829, 31
        %v2832 = vsub.s32 32, %v2831
        %v2833 = vshrl.u32 683565275, %v2832
        %v2834 = vshll.u32 683565275, %v2831
        %v2835 = vshrl.u32 2475754826, %v2832
        %v2836 = vor.u32 %v2834, %v2835
        %v2837 = vshll.u32 2475754826, %v2831
        %v2838 = vshrl.u32 2131351028, %v2832
        %v2839 = vor.u32 %v2837, %v2838
        %v2840 = vshll.u32 2131351028, %v2831
        %v2841 = vshrl.u32 2102212464, %v2832
        %v2842 = vor.u32 %v2840, %v2841
        %v2843 = vshll.u32 2102212464, %v2831
        %v2844 = vshrl.u32 920167782, %v2832
        %v2845 = vor.u32 %v2843, %v2844
        %v2846 = vshll.u32 920167782, %v2831
        %v2847 = vshrl.u32 1326507024, %v2832
        %v2848 = vor.u32 %v2846, %v2847
        %vm2849 = vcmp.lt.s32.totalorder %v2830, 1
        %vm2850 = vcmp.lt.s32.totalorder %v2830, 2
        %vm2851 = vcmp.lt.s32.totalorder %v2830, 3
        %vm2852 = vcmp.lt.s32.totalorder %v2830, 4
        %v2853 = vsel %vm2849, %v2833, %v2836
        %v2854 = vsel %vm2852, %v2842, 2102212464
        %v2855 = vsel %vm2851, %v2839, %v2854
        %v2856 = vsel %vm2850, %v2853, %v2855
        %v2857 = vsel %vm2849, %v2836, %v2839
        %v2858 = vsel %vm2852, %v2845, 920167782
        %v2859 = vsel %vm2851, %v2842, %v2858
        %v2860 = vsel %vm2850, %v2857, %v2859
        %v2861 = vsel %vm2849, %v2839, %v2842
        %v2862 = vsel %vm2852, %v2848, 1326507024
        %v2863 = vsel %vm2851, %v2845, %v2862
        %v2864 = vsel %vm2850, %v2861, %v2863
        %v2865 = vshll.u32 %v2825, 8
        %v2866 = vmul.u32.u64.compose %v2865, %v2864
        %v2867 = vextract.low.u32 %v2866
        %v2868 = vextract.high.u32 %v2866
        %v2869 = vmul.u32.u64.compose %v2865, %v2860
        %v2870 = vextract.low.u32 %v2869
        %v2871 = vextract.high.u32 %v2869
        %v2872 = vmul.u32 %v2865, %v2856
        %v2873 = vadd.s32 %v2868, %v2870
        %vm2874 = vc.u32 %v2868, %v2870
        %v2875 = vadd.s32 %v2871, 1
        %v2876 = vsel %vm2874, %v2875, %v2871
        %v2877 = vadd.s32 %v2872, %v2876
        %v2878 = vadd.s32 %v2877, 536870912
        %v2879 = vshrl.u32 %v2878, 30
        %v2880 = vshll.u32 %v2879, 30
        %v2881 = vsub.s32 %v2877, %v2880
        %vm2882 = vcmp.lt.s32.totalorder %v2881, 0
        %v2883 = vsub.s32 0, %v2881
        %v2884 = vsel %vm2882, %v2883, %v2881
        %v2885 = vclz %v2884
        %v2886 = vsub.s32 %v2885, 2
        %vm2887 = vcmp.gt.s32.totalorder 0, %v2886
        %v2888 = vsel %vm2887, 0, %v2886
        %v2889 = vsub.s32 32, %v2888
        %v2890 = vshll.u32 %v2881, %v2888
        %v2891 = vshrl.u32 %v2873, %v2889
        %v2892 = vor.u32 %v2890, %v2891
        %v2893 = vsub.s32 4294967266, %v2888
        %v2894 = vadd.s32 %v2893, 127
        %v2895 = vshll.u32 %v2894, 23
        %v2896 = vor.u32 4788187, %v2895
        %v2897 = vand.u32 2147483647, %v2896
        %v2899 = vcvt.s32.f32 %v2892
        %v2900 = vmul.f32 %v2899, %v2897
        %v2901 = vxor.u32 %v2900, 2147483648
        %v2902 = vsel %vm2819, %v2901, %v2900
        %v2903 = vsub.s32 4, %v2879
        %v2904 = vsel %vm2819, %v2903, %v2879
        %v2905 = vsel %vm2818, %v2581, %v2902
        %v2906 = vsel %vm2818, 0, %v2904
        %v2907 = vcosq.f32.pop %v2905
        %v2908 = vsinq.f32.pop %v2905
        %vm2909 = vweird.f32 %v2581
        %v2910 = vadd.s32 %v2906, 3
        %v2911 = vand.u32 %v2910, 3
        %vm2912 = vcmp.lt.s32.totalorder %v2911, 2
        %vm2913 = vcmp.eq.s32.totalorder %v2911, 0
        %v2914 = vxor.u32 %v2908, 2147483648
        %v2915 = vsel %vm2913, %v2907, %v2914
        %vm2916 = vcmp.eq.s32.totalorder %v2911, 2
        %v2917 = vxor.u32 %v2907, 2147483648
        %v2918 = vsel %vm2916, %v2917, %v2908
        %v2919 = vsel %vm2912, %v2915, %v2918
        %v2920 = vsel %vm2909, nan, %v2919
        %v2921 = vand.u32 2147483647, %v2586
        %vm2922 = vcmp.le.f32.partialorder %v2921, 0.7853982
        %vm2923 = vcmp.lt.s32.totalorder %v2586, 0
        %v2924 = vand.u32 %v2586, 2139095040
        %v2925 = vshrl.u32 %v2924, 23
        %v2926 = vsub.s32 %v2925, 127
        %v2927 = vand.u32 2147483647, %v2586
        %v2928 = vand.u32 %v2927, 8388607
        %v2929 = vor.u32 %v2928, 8388608
        %v2930 = vsub.s32 0, %v2929
        %v2931 = vadd.s32 %v2926, 1
        %vm2932 = vcmp.gt.s32.totalorder %v2931, 0
        %v2933 = vsel %vm2932, %v2931, 0
        %v2934 = vshrl.u32 %v2933, 5
        %v2935 = vand.u32 %v2933, 31
        %v2936 = vsub.s32 32, %v2935
        %v2937 = vshrl.u32 683565275, %v2936
        %v2938 = vshll.u32 683565275, %v2935
        %v2939 = vshrl.u32 2475754826, %v2936
        %v2940 = vor.u32 %v2938, %v2939
        %v2941 = vshll.u32 2475754826, %v2935
        %v2942 = vshrl.u32 2131351028, %v2936
        %v2943 = vor.u32 %v2941, %v2942
        %v2944 = vshll.u32 2131351028, %v2935
        %v2945 = vshrl.u32 2102212464, %v2936
        %v2946 = vor.u32 %v2944, %v2945
        %v2947 = vshll.u32 2102212464, %v2935
        %v2948 = vshrl.u32 920167782, %v2936
        %v2949 = vor.u32 %v2947, %v2948
        %v2950 = vshll.u32 920167782, %v2935
        %v2951 = vshrl.u32 1326507024, %v2936
        %v2952 = vor.u32 %v2950, %v2951
        %vm2953 = vcmp.lt.s32.totalorder %v2934, 1
        %vm2954 = vcmp.lt.s32.totalorder %v2934, 2
        %vm2955 = vcmp.lt.s32.totalorder %v2934, 3
        %vm2956 = vcmp.lt.s32.totalorder %v2934, 4
        %v2957 = vsel %vm2953, %v2937, %v2940
        %v2958 = vsel %vm2956, %v2946, 2102212464
        %v2959 = vsel %vm2955, %v2943, %v2958
        %v2960 = vsel %vm2954, %v2957, %v2959
        %v2961 = vsel %vm2953, %v2940, %v2943
        %v2962 = vsel %vm2956, %v2949, 920167782
        %v2963 = vsel %vm2955, %v2946, %v2962
        %v2964 = vsel %vm2954, %v2961, %v2963
        %v2965 = vsel %vm2953, %v2943, %v2946
        %v2966 = vsel %vm2956, %v2952, 1326507024
        %v2967 = vsel %vm2955, %v2949, %v2966
        %v2968 = vsel %vm2954, %v2965, %v2967
        %v2969 = vshll.u32 %v2929, 8
        %v2970 = vmul.u32.u64.compose %v2969, %v2968
        %v2971 = vextract.low.u32 %v2970
        %v2972 = vextract.high.u32 %v2970
        %v2973 = vmul.u32.u64.compose %v2969, %v2964
        %v2974 = vextract.low.u32 %v2973
        %v2975 = vextract.high.u32 %v2973
        %v2976 = vmul.u32 %v2969, %v2960
        %v2977 = vadd.s32 %v2972, %v2974
        %vm2978 = vc.u32 %v2972, %v2974
        %v2979 = vadd.s32 %v2975, 1
        %v2980 = vsel %vm2978, %v2979, %v2975
        %v2981 = vadd.s32 %v2976, %v2980
        %v2982 = vadd.s32 %v2981, 536870912
        %v2983 = vshrl.u32 %v2982, 30
        %v2984 = vshll.u32 %v2983, 30
        %v2985 = vsub.s32 %v2981, %v2984
        %vm2986 = vcmp.lt.s32.totalorder %v2985, 0
        %v2987 = vsub.s32 0, %v2985
        %v2988 = vsel %vm2986, %v2987, %v2985
        %v2989 = vclz %v2988
        %v2990 = vsub.s32 %v2989, 2
        %vm2991 = vcmp.gt.s32.totalorder 0, %v2990
        %v2992 = vsel %vm2991, 0, %v2990
        %v2993 = vsub.s32 32, %v2992
        %v2994 = vshll.u32 %v2985, %v2992
        %v2995 = vshrl.u32 %v2977, %v2993
        %v2996 = vor.u32 %v2994, %v2995
        %v2997 = vsub.s32 4294967266, %v2992
        %v2998 = vadd.s32 %v2997, 127
        %v2999 = vshll.u32 %v2998, 23
        %v3000 = vor.u32 4788187, %v2999
        %v3001 = vand.u32 2147483647, %v3000
        %v3003 = vcvt.s32.f32 %v2996
        %v3004 = vmul.f32 %v3003, %v3001
        %v3005 = vxor.u32 %v3004, 2147483648
        %v3006 = vsel %vm2923, %v3005, %v3004
        %v3007 = vsub.s32 4, %v2983
        %v3008 = vsel %vm2923, %v3007, %v2983
        %v3009 = vsel %vm2922, %v2586, %v3006
        %v3010 = vsel %vm2922, 0, %v3008
        %v3011 = vcosq.f32.pop %v3009
        %v3012 = vsinq.f32.pop %v3009
        %vm3013 = vweird.f32 %v2586
        %v3014 = vadd.s32 %v3010, 3
        %v3015 = vand.u32 %v3014, 3
        %vm3016 = vcmp.lt.s32.totalorder %v3015, 2
        %vm3017 = vcmp.eq.s32.totalorder %v3015, 0
        %v3018 = vxor.u32 %v3012, 2147483648
        %v3019 = vsel %vm3017, %v3011, %v3018
        %vm3020 = vcmp.eq.s32.totalorder %v3015, 2
        %v3021 = vxor.u32 %v3011, 2147483648
        %v3022 = vsel %vm3020, %v3021, %v3012
        %v3023 = vsel %vm3016, %v3019, %v3022
        %v3024 = vsel %vm3013, nan, %v3023
        %v3025 = vand.u32 2147483647, %v2591
        %vm3026 = vcmp.le.f32.partialorder %v3025, 0.7853982
        %vm3027 = vcmp.lt.s32.totalorder %v2591, 0
        %v3028 = vand.u32 %v2591, 2139095040
        %v3029 = vshrl.u32 %v3028, 23
        %v3030 = vsub.s32 %v3029, 127
        %v3031 = vand.u32 2147483647, %v2591
        %v3032 = vand.u32 %v3031, 8388607
        %v3033 = vor.u32 %v3032, 8388608
        %v3034 = vsub.s32 0, %v3033
        %v3035 = vadd.s32 %v3030, 1
        %vm3036 = vcmp.gt.s32.totalorder %v3035, 0
        %v3037 = vsel %vm3036, %v3035, 0
        %v3038 = vshrl.u32 %v3037, 5
        %v3039 = vand.u32 %v3037, 31
        %v3040 = vsub.s32 32, %v3039
        %v3041 = vshrl.u32 683565275, %v3040
        %v3042 = vshll.u32 683565275, %v3039
        %v3043 = vshrl.u32 2475754826, %v3040
        %v3044 = vor.u32 %v3042, %v3043
        %v3045 = vshll.u32 2475754826, %v3039
        %v3046 = vshrl.u32 2131351028, %v3040
        %v3047 = vor.u32 %v3045, %v3046
        %v3048 = vshll.u32 2131351028, %v3039
        %v3049 = vshrl.u32 2102212464, %v3040
        %v3050 = vor.u32 %v3048, %v3049
        %v3051 = vshll.u32 2102212464, %v3039
        %v3052 = vshrl.u32 920167782, %v3040
        %v3053 = vor.u32 %v3051, %v3052
        %v3054 = vshll.u32 920167782, %v3039
        %v3055 = vshrl.u32 1326507024, %v3040
        %v3056 = vor.u32 %v3054, %v3055
        %vm3057 = vcmp.lt.s32.totalorder %v3038, 1
        %vm3058 = vcmp.lt.s32.totalorder %v3038, 2
        %vm3059 = vcmp.lt.s32.totalorder %v3038, 3
        %vm3060 = vcmp.lt.s32.totalorder %v3038, 4
        %v3061 = vsel %vm3057, %v3041, %v3044
        %v3062 = vsel %vm3060, %v3050, 2102212464
        %v3063 = vsel %vm3059, %v3047, %v3062
        %v3064 = vsel %vm3058, %v3061, %v3063
        %v3065 = vsel %vm3057, %v3044, %v3047
        %v3066 = vsel %vm3060, %v3053, 920167782
        %v3067 = vsel %vm3059, %v3050, %v3066
        %v3068 = vsel %vm3058, %v3065, %v3067
        %v3069 = vsel %vm3057, %v3047, %v3050
        %v3070 = vsel %vm3060, %v3056, 1326507024
        %v3071 = vsel %vm3059, %v3053, %v3070
        %v3072 = vsel %vm3058, %v3069, %v3071
        %v3073 = vshll.u32 %v3033, 8
        %v3074 = vmul.u32.u64.compose %v3073, %v3072
        %v3075 = vextract.low.u32 %v3074
        %v3076 = vextract.high.u32 %v3074
        %v3077 = vmul.u32.u64.compose %v3073, %v3068
        %v3078 = vextract.low.u32 %v3077
        %v3079 = vextract.high.u32 %v3077
        %v3080 = vmul.u32 %v3073, %v3064
        %v3081 = vadd.s32 %v3076, %v3078
        %vm3082 = vc.u32 %v3076, %v3078
        %v3083 = vadd.s32 %v3079, 1
        %v3084 = vsel %vm3082, %v3083, %v3079
        %v3085 = vadd.s32 %v3080, %v3084
        %v3086 = vadd.s32 %v3085, 536870912
        %v3087 = vshrl.u32 %v3086, 30
        %v3088 = vshll.u32 %v3087, 30
        %v3089 = vsub.s32 %v3085, %v3088
        %vm3090 = vcmp.lt.s32.totalorder %v3089, 0
        %v3091 = vsub.s32 0, %v3089
        %v3092 = vsel %vm3090, %v3091, %v3089
        %v3093 = vclz %v3092
        %v3094 = vsub.s32 %v3093, 2
        %vm3095 = vcmp.gt.s32.totalorder 0, %v3094
        %v3096 = vsel %vm3095, 0, %v3094
        %v3097 = vsub.s32 32, %v3096
        %v3098 = vshll.u32 %v3089, %v3096
        %v3099 = vshrl.u32 %v3081, %v3097
        %v3100 = vor.u32 %v3098, %v3099
        %v3101 = vsub.s32 4294967266, %v3096
        %v3102 = vadd.s32 %v3101, 127
        %v3103 = vshll.u32 %v3102, 23
        %v3104 = vor.u32 4788187, %v3103
        %v3105 = vand.u32 2147483647, %v3104
        %v3107 = vcvt.s32.f32 %v3100
        %v3108 = vmul.f32 %v3107, %v3105
        %v3109 = vxor.u32 %v3108, 2147483648
        %v3110 = vsel %vm3027, %v3109, %v3108
        %v3111 = vsub.s32 4, %v3087
        %v3112 = vsel %vm3027, %v3111, %v3087
        %v3113 = vsel %vm3026, %v2591, %v3110
        %v3114 = vsel %vm3026, 0, %v3112
        %v3115 = vcosq.f32.pop %v3113
        %v3116 = vsinq.f32.pop %v3113
        %vm3117 = vweird.f32 %v2591
        %v3118 = vadd.s32 %v3114, 3
        %v3119 = vand.u32 %v3118, 3
        %vm3120 = vcmp.lt.s32.totalorder %v3119, 2
        %vm3121 = vcmp.eq.s32.totalorder %v3119, 0
        %v3122 = vxor.u32 %v3116, 2147483648
        %v3123 = vsel %vm3121, %v3115, %v3122
        %vm3124 = vcmp.eq.s32.totalorder %v3119, 2
        %v3125 = vxor.u32 %v3115, 2147483648
        %v3126 = vsel %vm3124, %v3125, %v3116
        %v3127 = vsel %vm3120, %v3123, %v3126
        %v3128 = vsel %vm3117, nan, %v3127
        %v3129 = vand.u32 2147483647, %v2596
        %vm3130 = vcmp.le.f32.partialorder %v3129, 0.7853982
        %vm3131 = vcmp.lt.s32.totalorder %v2596, 0
        %v3132 = vand.u32 %v2596, 2139095040
        %v3133 = vshrl.u32 %v3132, 23
        %v3134 = vsub.s32 %v3133, 127
        %v3135 = vand.u32 2147483647, %v2596
        %v3136 = vand.u32 %v3135, 8388607
        %v3137 = vor.u32 %v3136, 8388608
        %v3138 = vsub.s32 0, %v3137
        %v3139 = vadd.s32 %v3134, 1
        %vm3140 = vcmp.gt.s32.totalorder %v3139, 0
        %v3141 = vsel %vm3140, %v3139, 0
        %v3142 = vshrl.u32 %v3141, 5
        %v3143 = vand.u32 %v3141, 31
        %v3144 = vsub.s32 32, %v3143
        %v3145 = vshrl.u32 683565275, %v3144
        %v3146 = vshll.u32 683565275, %v3143
        %v3147 = vshrl.u32 2475754826, %v3144
        %v3148 = vor.u32 %v3146, %v3147
        %v3149 = vshll.u32 2475754826, %v3143
        %v3150 = vshrl.u32 2131351028, %v3144
        %v3151 = vor.u32 %v3149, %v3150
        %v3152 = vshll.u32 2131351028, %v3143
        %v3153 = vshrl.u32 2102212464, %v3144
        %v3154 = vor.u32 %v3152, %v3153
        %v3155 = vshll.u32 2102212464, %v3143
        %v3156 = vshrl.u32 920167782, %v3144
        %v3157 = vor.u32 %v3155, %v3156
        %v3158 = vshll.u32 920167782, %v3143
        %v3159 = vshrl.u32 1326507024, %v3144
        %v3160 = vor.u32 %v3158, %v3159
        %vm3161 = vcmp.lt.s32.totalorder %v3142, 1
        %vm3162 = vcmp.lt.s32.totalorder %v3142, 2
        %vm3163 = vcmp.lt.s32.totalorder %v3142, 3
        %vm3164 = vcmp.lt.s32.totalorder %v3142, 4
        %v3165 = vsel %vm3161, %v3145, %v3148
        %v3166 = vsel %vm3164, %v3154, 2102212464
        %v3167 = vsel %vm3163, %v3151, %v3166
        %v3168 = vsel %vm3162, %v3165, %v3167
        %v3169 = vsel %vm3161, %v3148, %v3151
        %v3170 = vsel %vm3164, %v3157, 920167782
        %v3171 = vsel %vm3163, %v3154, %v3170
        %v3172 = vsel %vm3162, %v3169, %v3171
        %v3173 = vsel %vm3161, %v3151, %v3154
        %v3174 = vsel %vm3164, %v3160, 1326507024
        %v3175 = vsel %vm3163, %v3157, %v3174
        %v3176 = vsel %vm3162, %v3173, %v3175
        %v3177 = vshll.u32 %v3137, 8
        %v3178 = vmul.u32.u64.compose %v3177, %v3176
        %v3179 = vextract.low.u32 %v3178
        %v3180 = vextract.high.u32 %v3178
        %v3181 = vmul.u32.u64.compose %v3177, %v3172
        %v3182 = vextract.low.u32 %v3181
        %v3183 = vextract.high.u32 %v3181
        %v3184 = vmul.u32 %v3177, %v3168
        %v3185 = vadd.s32 %v3180, %v3182
        %vm3186 = vc.u32 %v3180, %v3182
        %v3187 = vadd.s32 %v3183, 1
        %v3188 = vsel %vm3186, %v3187, %v3183
        %v3189 = vadd.s32 %v3184, %v3188
        %v3190 = vadd.s32 %v3189, 536870912
        %v3191 = vshrl.u32 %v3190, 30
        %v3192 = vshll.u32 %v3191, 30
        %v3193 = vsub.s32 %v3189, %v3192
        %vm3194 = vcmp.lt.s32.totalorder %v3193, 0
        %v3195 = vsub.s32 0, %v3193
        %v3196 = vsel %vm3194, %v3195, %v3193
        %v3197 = vclz %v3196
        %v3198 = vsub.s32 %v3197, 2
        %vm3199 = vcmp.gt.s32.totalorder 0, %v3198
        %v3200 = vsel %vm3199, 0, %v3198
        %v3201 = vsub.s32 32, %v3200
        %v3202 = vshll.u32 %v3193, %v3200
        %v3203 = vshrl.u32 %v3185, %v3201
        %v3204 = vor.u32 %v3202, %v3203
        %v3205 = vsub.s32 4294967266, %v3200
        %v3206 = vadd.s32 %v3205, 127
        %v3207 = vshll.u32 %v3206, 23
        %v3208 = vor.u32 4788187, %v3207
        %v3209 = vand.u32 2147483647, %v3208
        %v3211 = vcvt.s32.f32 %v3204
        %v3212 = vmul.f32 %v3211, %v3209
        %v3213 = vxor.u32 %v3212, 2147483648
        %v3214 = vsel %vm3131, %v3213, %v3212
        %v3215 = vsub.s32 4, %v3191
        %v3216 = vsel %vm3131, %v3215, %v3191
        %v3217 = vsel %vm3130, %v2596, %v3214
        %v3218 = vsel %vm3130, 0, %v3216
        %v3219 = vcosq.f32.pop %v3217
        %v3220 = vsinq.f32.pop %v3217
        %vm3221 = vweird.f32 %v2596
        %v3222 = vadd.s32 %v3218, 3
        %v3223 = vand.u32 %v3222, 3
        %vm3224 = vcmp.lt.s32.totalorder %v3223, 2
        %vm3225 = vcmp.eq.s32.totalorder %v3223, 0
        %v3226 = vxor.u32 %v3220, 2147483648
        %v3227 = vsel %vm3225, %v3219, %v3226
        %vm3228 = vcmp.eq.s32.totalorder %v3223, 2
        %v3229 = vxor.u32 %v3219, 2147483648
        %v3230 = vsel %vm3228, %v3229, %v3220
        %v3231 = vsel %vm3224, %v3227, %v3230
        %v3232 = vsel %vm3221, nan, %v3231
        %v3233 = vand.u32 2147483647, %v2601
        %vm3234 = vcmp.le.f32.partialorder %v3233, 0.7853982
        %vm3235 = vcmp.lt.s32.totalorder %v2601, 0
        %v3236 = vand.u32 %v2601, 2139095040
        %v3237 = vshrl.u32 %v3236, 23
        %v3238 = vsub.s32 %v3237, 127
        %v3239 = vand.u32 2147483647, %v2601
        %v3240 = vand.u32 %v3239, 8388607
        %v3241 = vor.u32 %v3240, 8388608
        %v3242 = vsub.s32 0, %v3241
        %v3243 = vadd.s32 %v3238, 1
        %vm3244 = vcmp.gt.s32.totalorder %v3243, 0
        %v3245 = vsel %vm3244, %v3243, 0
        %v3246 = vshrl.u32 %v3245, 5
        %v3247 = vand.u32 %v3245, 31
        %v3248 = vsub.s32 32, %v3247
        %v3249 = vshrl.u32 683565275, %v3248
        %v3250 = vshll.u32 683565275, %v3247
        %v3251 = vshrl.u32 2475754826, %v3248
        %v3252 = vor.u32 %v3250, %v3251
        %v3253 = vshll.u32 2475754826, %v3247
        %v3254 = vshrl.u32 2131351028, %v3248
        %v3255 = vor.u32 %v3253, %v3254
        %v3256 = vshll.u32 2131351028, %v3247
        %v3257 = vshrl.u32 2102212464, %v3248
        %v3258 = vor.u32 %v3256, %v3257
        %v3259 = vshll.u32 2102212464, %v3247
        %v3260 = vshrl.u32 920167782, %v3248
        %v3261 = vor.u32 %v3259, %v3260
        %v3262 = vshll.u32 920167782, %v3247
        %v3263 = vshrl.u32 1326507024, %v3248
        %v3264 = vor.u32 %v3262, %v3263
        %vm3265 = vcmp.lt.s32.totalorder %v3246, 1
        %vm3266 = vcmp.lt.s32.totalorder %v3246, 2
        %vm3267 = vcmp.lt.s32.totalorder %v3246, 3
        %vm3268 = vcmp.lt.s32.totalorder %v3246, 4
        %v3269 = vsel %vm3265, %v3249, %v3252
        %v3270 = vsel %vm3268, %v3258, 2102212464
        %v3271 = vsel %vm3267, %v3255, %v3270
        %v3272 = vsel %vm3266, %v3269, %v3271
        %v3273 = vsel %vm3265, %v3252, %v3255
        %v3274 = vsel %vm3268, %v3261, 920167782
        %v3275 = vsel %vm3267, %v3258, %v3274
        %v3276 = vsel %vm3266, %v3273, %v3275
        %v3277 = vsel %vm3265, %v3255, %v3258
        %v3278 = vsel %vm3268, %v3264, 1326507024
        %v3279 = vsel %vm3267, %v3261, %v3278
        %v3280 = vsel %vm3266, %v3277, %v3279
        %v3281 = vshll.u32 %v3241, 8
        %v3282 = vmul.u32.u64.compose %v3281, %v3280
        %v3283 = vextract.low.u32 %v3282
        %v3284 = vextract.high.u32 %v3282
        %v3285 = vmul.u32.u64.compose %v3281, %v3276
        %v3286 = vextract.low.u32 %v3285
        %v3287 = vextract.high.u32 %v3285
        %v3288 = vmul.u32 %v3281, %v3272
        %v3289 = vadd.s32 %v3284, %v3286
        %vm3290 = vc.u32 %v3284, %v3286
        %v3291 = vadd.s32 %v3287, 1
        %v3292 = vsel %vm3290, %v3291, %v3287
        %v3293 = vadd.s32 %v3288, %v3292
        %v3294 = vadd.s32 %v3293, 536870912
        %v3295 = vshrl.u32 %v3294, 30
        %v3296 = vshll.u32 %v3295, 30
        %v3297 = vsub.s32 %v3293, %v3296
        %vm3298 = vcmp.lt.s32.totalorder %v3297, 0
        %v3299 = vsub.s32 0, %v3297
        %v3300 = vsel %vm3298, %v3299, %v3297
        %v3301 = vclz %v3300
        %v3302 = vsub.s32 %v3301, 2
        %vm3303 = vcmp.gt.s32.totalorder 0, %v3302
        %v3304 = vsel %vm3303, 0, %v3302
        %v3305 = vsub.s32 32, %v3304
        %v3306 = vshll.u32 %v3297, %v3304
        %v3307 = vshrl.u32 %v3289, %v3305
        %v3308 = vor.u32 %v3306, %v3307
        %v3309 = vsub.s32 4294967266, %v3304
        %v3310 = vadd.s32 %v3309, 127
        %v3311 = vshll.u32 %v3310, 23
        %v3312 = vor.u32 4788187, %v3311
        %v3313 = vand.u32 2147483647, %v3312
        %v3315 = vcvt.s32.f32 %v3308
        %v3316 = vmul.f32 %v3315, %v3313
        %v3317 = vxor.u32 %v3316, 2147483648
        %v3318 = vsel %vm3235, %v3317, %v3316
        %v3319 = vsub.s32 4, %v3295
        %v3320 = vsel %vm3235, %v3319, %v3295
        %v3321 = vsel %vm3234, %v2601, %v3318
        %v3322 = vsel %vm3234, 0, %v3320
        %v3323 = vcosq.f32.pop %v3321
        %v3324 = vsinq.f32.pop %v3321
        %vm3325 = vweird.f32 %v2601
        %v3326 = vadd.s32 %v3322, 3
        %v3327 = vand.u32 %v3326, 3
        %vm3328 = vcmp.lt.s32.totalorder %v3327, 2
        %vm3329 = vcmp.eq.s32.totalorder %v3327, 0
        %v3330 = vxor.u32 %v3324, 2147483648
        %v3331 = vsel %vm3329, %v3323, %v3330
        %vm3332 = vcmp.eq.s32.totalorder %v3327, 2
        %v3333 = vxor.u32 %v3323, 2147483648
        %v3334 = vsel %vm3332, %v3333, %v3324
        %v3335 = vsel %vm3328, %v3331, %v3334
        %v3336 = vsel %vm3325, nan, %v3335
        %v3337 = vand.u32 2147483647, %v2606
        %vm3338 = vcmp.le.f32.partialorder %v3337, 0.7853982
        %vm3339 = vcmp.lt.s32.totalorder %v2606, 0
        %v3340 = vand.u32 %v2606, 2139095040
        %v3341 = vshrl.u32 %v3340, 23
        %v3342 = vsub.s32 %v3341, 127
        %v3343 = vand.u32 2147483647, %v2606
        %v3344 = vand.u32 %v3343, 8388607
        %v3345 = vor.u32 %v3344, 8388608
        %v3346 = vsub.s32 0, %v3345
        %v3347 = vadd.s32 %v3342, 1
        %vm3348 = vcmp.gt.s32.totalorder %v3347, 0
        %v3349 = vsel %vm3348, %v3347, 0
        %v3350 = vshrl.u32 %v3349, 5
        %v3351 = vand.u32 %v3349, 31
        %v3352 = vsub.s32 32, %v3351
        %v3353 = vshrl.u32 683565275, %v3352
        %v3354 = vshll.u32 683565275, %v3351
        %v3355 = vshrl.u32 2475754826, %v3352
        %v3356 = vor.u32 %v3354, %v3355
        %v3357 = vshll.u32 2475754826, %v3351
        %v3358 = vshrl.u32 2131351028, %v3352
        %v3359 = vor.u32 %v3357, %v3358
        %v3360 = vshll.u32 2131351028, %v3351
        %v3361 = vshrl.u32 2102212464, %v3352
        %v3362 = vor.u32 %v3360, %v3361
        %v3363 = vshll.u32 2102212464, %v3351
        %v3364 = vshrl.u32 920167782, %v3352
        %v3365 = vor.u32 %v3363, %v3364
        %v3366 = vshll.u32 920167782, %v3351
        %v3367 = vshrl.u32 1326507024, %v3352
        %v3368 = vor.u32 %v3366, %v3367
        %vm3369 = vcmp.lt.s32.totalorder %v3350, 1
        %vm3370 = vcmp.lt.s32.totalorder %v3350, 2
        %vm3371 = vcmp.lt.s32.totalorder %v3350, 3
        %vm3372 = vcmp.lt.s32.totalorder %v3350, 4
        %v3373 = vsel %vm3369, %v3353, %v3356
        %v3374 = vsel %vm3372, %v3362, 2102212464
        %v3375 = vsel %vm3371, %v3359, %v3374
        %v3376 = vsel %vm3370, %v3373, %v3375
        %v3377 = vsel %vm3369, %v3356, %v3359
        %v3378 = vsel %vm3372, %v3365, 920167782
        %v3379 = vsel %vm3371, %v3362, %v3378
        %v3380 = vsel %vm3370, %v3377, %v3379
        %v3381 = vsel %vm3369, %v3359, %v3362
        %v3382 = vsel %vm3372, %v3368, 1326507024
        %v3383 = vsel %vm3371, %v3365, %v3382
        %v3384 = vsel %vm3370, %v3381, %v3383
        %v3385 = vshll.u32 %v3345, 8
        %v3386 = vmul.u32.u64.compose %v3385, %v3384
        %v3387 = vextract.low.u32 %v3386
        %v3388 = vextract.high.u32 %v3386
        %v3389 = vmul.u32.u64.compose %v3385, %v3380
        %v3390 = vextract.low.u32 %v3389
        %v3391 = vextract.high.u32 %v3389
        %v3392 = vmul.u32 %v3385, %v3376
        %v3393 = vadd.s32 %v3388, %v3390
        %vm3394 = vc.u32 %v3388, %v3390
        %v3395 = vadd.s32 %v3391, 1
        %v3396 = vsel %vm3394, %v3395, %v3391
        %v3397 = vadd.s32 %v3392, %v3396
        %v3398 = vadd.s32 %v3397, 536870912
        %v3399 = vshrl.u32 %v3398, 30
        %v3400 = vshll.u32 %v3399, 30
        %v3401 = vsub.s32 %v3397, %v3400
        %vm3402 = vcmp.lt.s32.totalorder %v3401, 0
        %v3403 = vsub.s32 0, %v3401
        %v3404 = vsel %vm3402, %v3403, %v3401
        %v3405 = vclz %v3404
        %v3406 = vsub.s32 %v3405, 2
        %vm3407 = vcmp.gt.s32.totalorder 0, %v3406
        %v3408 = vsel %vm3407, 0, %v3406
        %v3409 = vsub.s32 32, %v3408
        %v3410 = vshll.u32 %v3401, %v3408
        %v3411 = vshrl.u32 %v3393, %v3409
        %v3412 = vor.u32 %v3410, %v3411
        %v3413 = vsub.s32 4294967266, %v3408
        %v3414 = vadd.s32 %v3413, 127
        %v3415 = vshll.u32 %v3414, 23
        %v3416 = vor.u32 4788187, %v3415
        %v3417 = vand.u32 2147483647, %v3416
        %v3419 = vcvt.s32.f32 %v3412
        %v3420 = vmul.f32 %v3419, %v3417
        %v3421 = vxor.u32 %v3420, 2147483648
        %v3422 = vsel %vm3339, %v3421, %v3420
        %v3423 = vsub.s32 4, %v3399
        %v3424 = vsel %vm3339, %v3423, %v3399
        %v3425 = vsel %vm3338, %v2606, %v3422
        %v3426 = vsel %vm3338, 0, %v3424
        %v3427 = vcosq.f32.pop %v3425
        %v3428 = vsinq.f32.pop %v3425
        %vm3429 = vweird.f32 %v2606
        %v3430 = vadd.s32 %v3426, 3
        %v3431 = vand.u32 %v3430, 3
        %vm3432 = vcmp.lt.s32.totalorder %v3431, 2
        %vm3433 = vcmp.eq.s32.totalorder %v3431, 0
        %v3434 = vxor.u32 %v3428, 2147483648
        %v3435 = vsel %vm3433, %v3427, %v3434
        %vm3436 = vcmp.eq.s32.totalorder %v3431, 2
        %v3437 = vxor.u32 %v3427, 2147483648
        %v3438 = vsel %vm3436, %v3437, %v3428
        %v3439 = vsel %vm3432, %v3435, %v3438
        %v3440 = vsel %vm3429, nan, %v3439
        %v3441 = vld [vmem:[%s7] sm:$0xff]
        %v3442 = vld [vmem:[%s7 + $0x8] sm:$0xff]
        %v3443 = vld [vmem:[%s7 + $0x10] sm:$0xff]
        %v3444 = vld [vmem:[%s7 + $0x18] sm:$0xff]
        %v3445 = vld [vmem:[%s7 + $0x20] sm:$0xff]
        %v3446 = vld [vmem:[%s7 + $0x28] sm:$0xff]
        %v3447 = vld [vmem:[%s7 + $0x30] sm:$0xff]
        %v3448 = vld [vmem:[%s7 + $0x38] sm:$0xff]
        %v3449 = vld [vmem:[%s8] sm:$0xff]
        %v3450 = vld [vmem:[%s8 + $0x8] sm:$0xff]
        %v3451 = vld [vmem:[%s8 + $0x10] sm:$0xff]
        %v3452 = vld [vmem:[%s8 + $0x18] sm:$0xff]
        %v3453 = vld [vmem:[%s8 + $0x20] sm:$0xff]
        %v3454 = vld [vmem:[%s8 + $0x28] sm:$0xff]
        %v3455 = vld [vmem:[%s8 + $0x30] sm:$0xff]
        %v3456 = vld [vmem:[%s8 + $0x38] sm:$0xff]
        %3458 = vset.pattern.permute.xlu0 0
        %3459 = vperm.xlu0 %3458, %v3449
        %v3460 = vpop.permute.xlu0 %3459
        %3463 = vset.pattern.permute.xlu0 0
        %3464 = vperm.xlu0 %3463, %v3450
        %v3465 = vpop.permute.xlu0 %3464
        %3468 = vset.pattern.permute.xlu0 0
        %3469 = vperm.xlu0 %3468, %v3451
        %v3470 = vpop.permute.xlu0 %3469
        %3473 = vset.pattern.permute.xlu0 0
        %3474 = vperm.xlu0 %3473, %v3452
        %v3475 = vpop.permute.xlu0 %3474
        %3478 = vset.pattern.permute.xlu0 0
        %3479 = vperm.xlu0 %3478, %v3453
        %v3480 = vpop.permute.xlu0 %3479
        %3483 = vset.pattern.permute.xlu0 0
        %3484 = vperm.xlu0 %3483, %v3454
        %v3485 = vpop.permute.xlu0 %3484
        %3488 = vset.pattern.permute.xlu0 0
        %3489 = vperm.xlu0 %3488, %v3455
        %v3490 = vpop.permute.xlu0 %3489
        %3493 = vset.pattern.permute.xlu0 0
        %3494 = vperm.xlu0 %3493, %v3456
        %v3495 = vpop.permute.xlu0 %3494
        %v3498 = vsel %vm1462, %v3441, 0
        %v3501 = vsel %vm1462, %v3442, 0
        %v3504 = vsel %vm1462, %v3443, 0
        %v3507 = vsel %vm1462, %v3444, 0
        %v3510 = vsel %vm1462, %v3445, 0
        %v3513 = vsel %vm1462, %v3446, 0
        %v3516 = vsel %vm1462, %v3447, 0
        %v3519 = vsel %vm1462, %v3448, 0
        %3521 = vmatprep.subr.mxu0 0.0
        %3522 = vmatpush1.msra.mxu0 %v2712
        %3523 = vmatprep.subr.mxu0 0.0
        %3524 = vmatpush1.msra.mxu0 %v2816
        %3525 = vmatprep.subr.mxu0 0.0
        %3526 = vmatpush1.msra.mxu0 %v2920
        %3527 = vmatprep.subr.mxu0 0.0
        %3528 = vmatpush1.msra.mxu0 %v3024
        %3529 = vmatprep.subr.mxu0 0.0
        %3530 = vmatpush1.msra.mxu0 %v3128
        %3531 = vmatprep.subr.mxu0 0.0
        %3532 = vmatpush1.msra.mxu0 %v3232
        %3533 = vmatprep.subr.mxu0 0.0
        %3534 = vmatpush1.msra.mxu0 %v3336
        %3535 = vmatprep.subr.mxu0 0.0
        %3536 = vmatpush1.msra.mxu0 %v3440
        %3537 = vmatprep.subr.mxu0 0.0
        %3538 = vmatpush1.msra.mxu0 0.0
        %3539 = vmatprep.subr.mxu0 0.0
        %3540 = vmatpush1.msra.mxu0 0.0
        %3541 = vmatprep.subr.mxu0 0.0
        %3542 = vmatpush1.msra.mxu0 0.0
        %3543 = vmatprep.subr.mxu0 0.0
        %3544 = vmatpush1.msra.mxu0 0.0
        %3545 = vmatprep.subr.mxu0 0.0
        %3546 = vmatpush1.msra.mxu0 0.0
        %3547 = vmatprep.subr.mxu0 0.0
        %3548 = vmatpush1.msra.mxu0 0.0
        %3549 = vmatprep.subr.mxu0 0.0
        %3550 = vmatpush1.msra.mxu0 0.0
        %3551 = vmatprep.subr.mxu0 0.0
        %3552 = vmatpush1.msra.mxu0 0.0
        %3553 = vmatprep.subr.mxu0 0.0
        %3554 = vmatpush1.msra.mxu0 0.0
        %3555 = vmatprep.subr.mxu0 0.0
        %3556 = vmatpush1.msra.mxu0 0.0
        %3557 = vmatprep.subr.mxu0 0.0
        %3558 = vmatpush1.msra.mxu0 0.0
        %3559 = vmatprep.subr.mxu0 0.0
        %3560 = vmatpush1.msra.mxu0 0.0
        %3561 = vmatprep.subr.mxu0 0.0
        %3562 = vmatpush1.msra.mxu0 0.0
        %3563 = vmatprep.subr.mxu0 0.0
        %3564 = vmatpush1.msra.mxu0 0.0
        %3565 = vmatprep.subr.mxu0 0.0
        %3566 = vmatpush1.msra.mxu0 0.0
        %3567 = vmatprep.subr.mxu0 0.0
        %3568 = vmatpush1.msra.mxu0 0.0
        %3569 = vmatprep.subr.mxu0 0.0
        %3570 = vmatpush1.msra.mxu0 0.0
        %3571 = vmatprep.subr.mxu0 0.0
        %3572 = vmatpush1.msra.mxu0 0.0
        %3573 = vmatprep.subr.mxu0 0.0
        %3574 = vmatpush1.msra.mxu0 0.0
        %3575 = vmatprep.subr.mxu0 0.0
        %3576 = vmatpush1.msra.mxu0 0.0
        %3577 = vmatprep.subr.mxu0 0.0
        %3578 = vmatpush1.msra.mxu0 0.0
        %3579 = vmatprep.subr.mxu0 0.0
        %3580 = vmatpush1.msra.mxu0 0.0
        %3581 = vmatprep.subr.mxu0 0.0
        %3582 = vmatpush1.msra.mxu0 0.0
        %3583 = vmatprep.subr.mxu0 0.0
        %3584 = vmatpush1.msra.mxu0 0.0
        %3585 = vmatprep.mubr.f32.mxu0 0.0
        %3586 = vmatmul.mubr.f32.gmra.mrb[0].mxu0 %v3498
        %v3587 = vpop.f32.mrb[0].mxu0
        %v3588 = vadd.f32 %v3460, %v3587
        %v3589 = vpop.f32.mrb[0].mxu0
        %3590 = vmatprep.mubr.f32.mxu0 0.0
        %3591 = vmatmul.mubr.f32.gmra.mrb[0].mxu0 %v3501
        %v3592 = vpop.f32.mrb[0].mxu0
        %v3593 = vadd.f32 %v3465, %v3592
        %v3594 = vpop.f32.mrb[0].mxu0
        %3595 = vmatprep.mubr.f32.mxu0 0.0
        %3596 = vmatmul.mubr.f32.gmra.mrb[0].mxu0 %v3504
        %v3597 = vpop.f32.mrb[0].mxu0
        %v3598 = vadd.f32 %v3470, %v3597
        %v3599 = vpop.f32.mrb[0].mxu0
        %3600 = vmatprep.mubr.f32.mxu0 0.0
        %3601 = vmatmul.mubr.f32.gmra.mrb[0].mxu0 %v3507
        %v3602 = vpop.f32.mrb[0].mxu0
        %v3603 = vadd.f32 %v3475, %v3602
        %v3604 = vpop.f32.mrb[0].mxu0
        %3605 = vmatprep.mubr.f32.mxu0 0.0
        %3606 = vmatmul.mubr.f32.gmra.mrb[0].mxu0 %v3510
        %v3607 = vpop.f32.mrb[0].mxu0
        %v3608 = vadd.f32 %v3480, %v3607
        %v3609 = vpop.f32.mrb[0].mxu0
        %3610 = vmatprep.mubr.f32.mxu0 0.0
        %3611 = vmatmul.mubr.f32.gmra.mrb[0].mxu0 %v3513
        %v3612 = vpop.f32.mrb[0].mxu0
        %v3613 = vadd.f32 %v3485, %v3612
        %v3614 = vpop.f32.mrb[0].mxu0
        %3615 = vmatprep.mubr.f32.mxu0 0.0
        %3616 = vmatmul.mubr.f32.gmra.mrb[0].mxu0 %v3516
        %v3617 = vpop.f32.mrb[0].mxu0
        %v3618 = vadd.f32 %v3490, %v3617
        %v3619 = vpop.f32.mrb[0].mxu0
        %3620 = vmatprep.mubr.f32.mxu0 0.0
        %3621 = vmatmul.mubr.f32.gmra.mrb[0].mxu0 %v3519
        %v3622 = vpop.f32.mrb[0].mxu0
        %v3623 = vadd.f32 %v3495, %v3622
        %v3624 = vpop.f32.mrb[0].mxu0
        %3625 = vdwg.mxu0
        %v3626 = vand.u32 2147483647, %v3588
        %vm3627 = vcmp.le.f32.partialorder %v3626, 0.7853982
        %vm3628 = vcmp.lt.s32.totalorder %v3588, 0
        %v3629 = vand.u32 %v3588, 2139095040
        %v3630 = vshrl.u32 %v3629, 23
        %v3631 = vsub.s32 %v3630, 127
        %v3632 = vand.u32 2147483647, %v3588
        %v3633 = vand.u32 %v3632, 8388607
        %v3634 = vor.u32 %v3633, 8388608
        %v3635 = vsub.s32 0, %v3634
        %v3636 = vadd.s32 %v3631, 1
        %vm3637 = vcmp.gt.s32.totalorder %v3636, 0
        %v3638 = vsel %vm3637, %v3636, 0
        %v3639 = vshrl.u32 %v3638, 5
        %v3640 = vand.u32 %v3638, 31
        %v3641 = vsub.s32 32, %v3640
        %v3642 = vshrl.u32 683565275, %v3641
        %v3643 = vshll.u32 683565275, %v3640
        %v3644 = vshrl.u32 2475754826, %v3641
        %v3645 = vor.u32 %v3643, %v3644
        %v3646 = vshll.u32 2475754826, %v3640
        %v3647 = vshrl.u32 2131351028, %v3641
        %v3648 = vor.u32 %v3646, %v3647
        %v3649 = vshll.u32 2131351028, %v3640
        %v3650 = vshrl.u32 2102212464, %v3641
        %v3651 = vor.u32 %v3649, %v3650
        %v3652 = vshll.u32 2102212464, %v3640
        %v3653 = vshrl.u32 920167782, %v3641
        %v3654 = vor.u32 %v3652, %v3653
        %v3655 = vshll.u32 920167782, %v3640
        %v3656 = vshrl.u32 1326507024, %v3641
        %v3657 = vor.u32 %v3655, %v3656
        %vm3658 = vcmp.lt.s32.totalorder %v3639, 1
        %vm3659 = vcmp.lt.s32.totalorder %v3639, 2
        %vm3660 = vcmp.lt.s32.totalorder %v3639, 3
        %vm3661 = vcmp.lt.s32.totalorder %v3639, 4
        %v3662 = vsel %vm3658, %v3642, %v3645
        %v3663 = vsel %vm3661, %v3651, 2102212464
        %v3664 = vsel %vm3660, %v3648, %v3663
        %v3665 = vsel %vm3659, %v3662, %v3664
        %v3666 = vsel %vm3658, %v3645, %v3648
        %v3667 = vsel %vm3661, %v3654, 920167782
        %v3668 = vsel %vm3660, %v3651, %v3667
        %v3669 = vsel %vm3659, %v3666, %v3668
        %v3670 = vsel %vm3658, %v3648, %v3651
        %v3671 = vsel %vm3661, %v3657, 1326507024
        %v3672 = vsel %vm3660, %v3654, %v3671
        %v3673 = vsel %vm3659, %v3670, %v3672
        %v3674 = vshll.u32 %v3634, 8
        %v3675 = vmul.u32.u64.compose %v3674, %v3673
        %v3676 = vextract.low.u32 %v3675
        %v3677 = vextract.high.u32 %v3675
        %v3678 = vmul.u32.u64.compose %v3674, %v3669
        %v3679 = vextract.low.u32 %v3678
        %v3680 = vextract.high.u32 %v3678
        %v3681 = vmul.u32 %v3674, %v3665
        %v3682 = vadd.s32 %v3677, %v3679
        %vm3683 = vc.u32 %v3677, %v3679
        %v3684 = vadd.s32 %v3680, 1
        %v3685 = vsel %vm3683, %v3684, %v3680
        %v3686 = vadd.s32 %v3681, %v3685
        %v3687 = vadd.s32 %v3686, 536870912
        %v3688 = vshrl.u32 %v3687, 30
        %v3689 = vshll.u32 %v3688, 30
        %v3690 = vsub.s32 %v3686, %v3689
        %vm3691 = vcmp.lt.s32.totalorder %v3690, 0
        %v3692 = vsub.s32 0, %v3690
        %v3693 = vsel %vm3691, %v3692, %v3690
        %v3694 = vclz %v3693
        %v3695 = vsub.s32 %v3694, 2
        %vm3696 = vcmp.gt.s32.totalorder 0, %v3695
        %v3697 = vsel %vm3696, 0, %v3695
        %v3698 = vsub.s32 32, %v3697
        %v3699 = vshll.u32 %v3690, %v3697
        %v3700 = vshrl.u32 %v3682, %v3698
        %v3701 = vor.u32 %v3699, %v3700
        %v3702 = vsub.s32 4294967266, %v3697
        %v3703 = vadd.s32 %v3702, 127
        %v3704 = vshll.u32 %v3703, 23
        %v3705 = vor.u32 4788187, %v3704
        %v3706 = vand.u32 2147483647, %v3705
        %v3708 = vcvt.s32.f32 %v3701
        %v3709 = vmul.f32 %v3708, %v3706
        %v3710 = vxor.u32 %v3709, 2147483648
        %v3711 = vsel %vm3628, %v3710, %v3709
        %v3712 = vsub.s32 4, %v3688
        %v3713 = vsel %vm3628, %v3712, %v3688
        %v3714 = vsel %vm3627, %v3588, %v3711
        %v3715 = vsel %vm3627, 0, %v3713
        %v3716 = vcosq.f32.pop %v3714
        %v3717 = vsinq.f32.pop %v3714
        %vm3718 = vweird.f32 %v3588
        %v3719 = vadd.s32 %v3715, 3
        %v3720 = vand.u32 %v3719, 3
        %vm3721 = vcmp.lt.s32.totalorder %v3720, 2
        %vm3722 = vcmp.eq.s32.totalorder %v3720, 0
        %v3723 = vxor.u32 %v3717, 2147483648
        %v3724 = vsel %vm3722, %v3716, %v3723
        %vm3725 = vcmp.eq.s32.totalorder %v3720, 2
        %v3726 = vxor.u32 %v3716, 2147483648
        %v3727 = vsel %vm3725, %v3726, %v3717
        %v3728 = vsel %vm3721, %v3724, %v3727
        %v3729 = vsel %vm3718, nan, %v3728
        %v3730 = vand.u32 2147483647, %v3593
        %vm3731 = vcmp.le.f32.partialorder %v3730, 0.7853982
        %vm3732 = vcmp.lt.s32.totalorder %v3593, 0
        %v3733 = vand.u32 %v3593, 2139095040
        %v3734 = vshrl.u32 %v3733, 23
        %v3735 = vsub.s32 %v3734, 127
        %v3736 = vand.u32 2147483647, %v3593
        %v3737 = vand.u32 %v3736, 8388607
        %v3738 = vor.u32 %v3737, 8388608
        %v3739 = vsub.s32 0, %v3738
        %v3740 = vadd.s32 %v3735, 1
        %vm3741 = vcmp.gt.s32.totalorder %v3740, 0
        %v3742 = vsel %vm3741, %v3740, 0
        %v3743 = vshrl.u32 %v3742, 5
        %v3744 = vand.u32 %v3742, 31
        %v3745 = vsub.s32 32, %v3744
        %v3746 = vshrl.u32 683565275, %v3745
        %v3747 = vshll.u32 683565275, %v3744
        %v3748 = vshrl.u32 2475754826, %v3745
        %v3749 = vor.u32 %v3747, %v3748
        %v3750 = vshll.u32 2475754826, %v3744
        %v3751 = vshrl.u32 2131351028, %v3745
        %v3752 = vor.u32 %v3750, %v3751
        %v3753 = vshll.u32 2131351028, %v3744
        %v3754 = vshrl.u32 2102212464, %v3745
        %v3755 = vor.u32 %v3753, %v3754
        %v3756 = vshll.u32 2102212464, %v3744
        %v3757 = vshrl.u32 920167782, %v3745
        %v3758 = vor.u32 %v3756, %v3757
        %v3759 = vshll.u32 920167782, %v3744
        %v3760 = vshrl.u32 1326507024, %v3745
        %v3761 = vor.u32 %v3759, %v3760
        %vm3762 = vcmp.lt.s32.totalorder %v3743, 1
        %vm3763 = vcmp.lt.s32.totalorder %v3743, 2
        %vm3764 = vcmp.lt.s32.totalorder %v3743, 3
        %vm3765 = vcmp.lt.s32.totalorder %v3743, 4
        %v3766 = vsel %vm3762, %v3746, %v3749
        %v3767 = vsel %vm3765, %v3755, 2102212464
        %v3768 = vsel %vm3764, %v3752, %v3767
        %v3769 = vsel %vm3763, %v3766, %v3768
        %v3770 = vsel %vm3762, %v3749, %v3752
        %v3771 = vsel %vm3765, %v3758, 920167782
        %v3772 = vsel %vm3764, %v3755, %v3771
        %v3773 = vsel %vm3763, %v3770, %v3772
        %v3774 = vsel %vm3762, %v3752, %v3755
        %v3775 = vsel %vm3765, %v3761, 1326507024
        %v3776 = vsel %vm3764, %v3758, %v3775
        %v3777 = vsel %vm3763, %v3774, %v3776
        %v3778 = vshll.u32 %v3738, 8
        %v3779 = vmul.u32.u64.compose %v3778, %v3777
        %v3780 = vextract.low.u32 %v3779
        %v3781 = vextract.high.u32 %v3779
        %v3782 = vmul.u32.u64.compose %v3778, %v3773
        %v3783 = vextract.low.u32 %v3782
        %v3784 = vextract.high.u32 %v3782
        %v3785 = vmul.u32 %v3778, %v3769
        %v3786 = vadd.s32 %v3781, %v3783
        %vm3787 = vc.u32 %v3781, %v3783
        %v3788 = vadd.s32 %v3784, 1
        %v3789 = vsel %vm3787, %v3788, %v3784
        %v3790 = vadd.s32 %v3785, %v3789
        %v3791 = vadd.s32 %v3790, 536870912
        %v3792 = vshrl.u32 %v3791, 30
        %v3793 = vshll.u32 %v3792, 30
        %v3794 = vsub.s32 %v3790, %v3793
        %vm3795 = vcmp.lt.s32.totalorder %v3794, 0
        %v3796 = vsub.s32 0, %v3794
        %v3797 = vsel %vm3795, %v3796, %v3794
        %v3798 = vclz %v3797
        %v3799 = vsub.s32 %v3798, 2
        %vm3800 = vcmp.gt.s32.totalorder 0, %v3799
        %v3801 = vsel %vm3800, 0, %v3799
        %v3802 = vsub.s32 32, %v3801
        %v3803 = vshll.u32 %v3794, %v3801
        %v3804 = vshrl.u32 %v3786, %v3802
        %v3805 = vor.u32 %v3803, %v3804
        %v3806 = vsub.s32 4294967266, %v3801
        %v3807 = vadd.s32 %v3806, 127
        %v3808 = vshll.u32 %v3807, 23
        %v3809 = vor.u32 4788187, %v3808
        %v3810 = vand.u32 2147483647, %v3809
        %v3812 = vcvt.s32.f32 %v3805
        %v3813 = vmul.f32 %v3812, %v3810
        %v3814 = vxor.u32 %v3813, 2147483648
        %v3815 = vsel %vm3732, %v3814, %v3813
        %v3816 = vsub.s32 4, %v3792
        %v3817 = vsel %vm3732, %v3816, %v3792
        %v3818 = vsel %vm3731, %v3593, %v3815
        %v3819 = vsel %vm3731, 0, %v3817
        %v3820 = vcosq.f32.pop %v3818
        %v3821 = vsinq.f32.pop %v3818
        %vm3822 = vweird.f32 %v3593
        %v3823 = vadd.s32 %v3819, 3
        %v3824 = vand.u32 %v3823, 3
        %vm3825 = vcmp.lt.s32.totalorder %v3824, 2
        %vm3826 = vcmp.eq.s32.totalorder %v3824, 0
        %v3827 = vxor.u32 %v3821, 2147483648
        %v3828 = vsel %vm3826, %v3820, %v3827
        %vm3829 = vcmp.eq.s32.totalorder %v3824, 2
        %v3830 = vxor.u32 %v3820, 2147483648
        %v3831 = vsel %vm3829, %v3830, %v3821
        %v3832 = vsel %vm3825, %v3828, %v3831
        %v3833 = vsel %vm3822, nan, %v3832
        %v3834 = vand.u32 2147483647, %v3598
        %vm3835 = vcmp.le.f32.partialorder %v3834, 0.7853982
        %vm3836 = vcmp.lt.s32.totalorder %v3598, 0
        %v3837 = vand.u32 %v3598, 2139095040
        %v3838 = vshrl.u32 %v3837, 23
        %v3839 = vsub.s32 %v3838, 127
        %v3840 = vand.u32 2147483647, %v3598
        %v3841 = vand.u32 %v3840, 8388607
        %v3842 = vor.u32 %v3841, 8388608
        %v3843 = vsub.s32 0, %v3842
        %v3844 = vadd.s32 %v3839, 1
        %vm3845 = vcmp.gt.s32.totalorder %v3844, 0
        %v3846 = vsel %vm3845, %v3844, 0
        %v3847 = vshrl.u32 %v3846, 5
        %v3848 = vand.u32 %v3846, 31
        %v3849 = vsub.s32 32, %v3848
        %v3850 = vshrl.u32 683565275, %v3849
        %v3851 = vshll.u32 683565275, %v3848
        %v3852 = vshrl.u32 2475754826, %v3849
        %v3853 = vor.u32 %v3851, %v3852
        %v3854 = vshll.u32 2475754826, %v3848
        %v3855 = vshrl.u32 2131351028, %v3849
        %v3856 = vor.u32 %v3854, %v3855
        %v3857 = vshll.u32 2131351028, %v3848
        %v3858 = vshrl.u32 2102212464, %v3849
        %v3859 = vor.u32 %v3857, %v3858
        %v3860 = vshll.u32 2102212464, %v3848
        %v3861 = vshrl.u32 920167782, %v3849
        %v3862 = vor.u32 %v3860, %v3861
        %v3863 = vshll.u32 920167782, %v3848
        %v3864 = vshrl.u32 1326507024, %v3849
        %v3865 = vor.u32 %v3863, %v3864
        %vm3866 = vcmp.lt.s32.totalorder %v3847, 1
        %vm3867 = vcmp.lt.s32.totalorder %v3847, 2
        %vm3868 = vcmp.lt.s32.totalorder %v3847, 3
        %vm3869 = vcmp.lt.s32.totalorder %v3847, 4
        %v3870 = vsel %vm3866, %v3850, %v3853
        %v3871 = vsel %vm3869, %v3859, 2102212464
        %v3872 = vsel %vm3868, %v3856, %v3871
        %v3873 = vsel %vm3867, %v3870, %v3872
        %v3874 = vsel %vm3866, %v3853, %v3856
        %v3875 = vsel %vm3869, %v3862, 920167782
        %v3876 = vsel %vm3868, %v3859, %v3875
        %v3877 = vsel %vm3867, %v3874, %v3876
        %v3878 = vsel %vm3866, %v3856, %v3859
        %v3879 = vsel %vm3869, %v3865, 1326507024
        %v3880 = vsel %vm3868, %v3862, %v3879
        %v3881 = vsel %vm3867, %v3878, %v3880
        %v3882 = vshll.u32 %v3842, 8
        %v3883 = vmul.u32.u64.compose %v3882, %v3881
        %v3884 = vextract.low.u32 %v3883
        %v3885 = vextract.high.u32 %v3883
        %v3886 = vmul.u32.u64.compose %v3882, %v3877
        %v3887 = vextract.low.u32 %v3886
        %v3888 = vextract.high.u32 %v3886
        %v3889 = vmul.u32 %v3882, %v3873
        %v3890 = vadd.s32 %v3885, %v3887
        %vm3891 = vc.u32 %v3885, %v3887
        %v3892 = vadd.s32 %v3888, 1
        %v3893 = vsel %vm3891, %v3892, %v3888
        %v3894 = vadd.s32 %v3889, %v3893
        %v3895 = vadd.s32 %v3894, 536870912
        %v3896 = vshrl.u32 %v3895, 30
        %v3897 = vshll.u32 %v3896, 30
        %v3898 = vsub.s32 %v3894, %v3897
        %vm3899 = vcmp.lt.s32.totalorder %v3898, 0
        %v3900 = vsub.s32 0, %v3898
        %v3901 = vsel %vm3899, %v3900, %v3898
        %v3902 = vclz %v3901
        %v3903 = vsub.s32 %v3902, 2
        %vm3904 = vcmp.gt.s32.totalorder 0, %v3903
        %v3905 = vsel %vm3904, 0, %v3903
        %v3906 = vsub.s32 32, %v3905
        %v3907 = vshll.u32 %v3898, %v3905
        %v3908 = vshrl.u32 %v3890, %v3906
        %v3909 = vor.u32 %v3907, %v3908
        %v3910 = vsub.s32 4294967266, %v3905
        %v3911 = vadd.s32 %v3910, 127
        %v3912 = vshll.u32 %v3911, 23
        %v3913 = vor.u32 4788187, %v3912
        %v3914 = vand.u32 2147483647, %v3913
        %v3916 = vcvt.s32.f32 %v3909
        %v3917 = vmul.f32 %v3916, %v3914
        %v3918 = vxor.u32 %v3917, 2147483648
        %v3919 = vsel %vm3836, %v3918, %v3917
        %v3920 = vsub.s32 4, %v3896
        %v3921 = vsel %vm3836, %v3920, %v3896
        %v3922 = vsel %vm3835, %v3598, %v3919
        %v3923 = vsel %vm3835, 0, %v3921
        %v3924 = vcosq.f32.pop %v3922
        %v3925 = vsinq.f32.pop %v3922
        %vm3926 = vweird.f32 %v3598
        %v3927 = vadd.s32 %v3923, 3
        %v3928 = vand.u32 %v3927, 3
        %vm3929 = vcmp.lt.s32.totalorder %v3928, 2
        %vm3930 = vcmp.eq.s32.totalorder %v3928, 0
        %v3931 = vxor.u32 %v3925, 2147483648
        %v3932 = vsel %vm3930, %v3924, %v3931
        %vm3933 = vcmp.eq.s32.totalorder %v3928, 2
        %v3934 = vxor.u32 %v3924, 2147483648
        %v3935 = vsel %vm3933, %v3934, %v3925
        %v3936 = vsel %vm3929, %v3932, %v3935
        %v3937 = vsel %vm3926, nan, %v3936
        %v3938 = vand.u32 2147483647, %v3603
        %vm3939 = vcmp.le.f32.partialorder %v3938, 0.7853982
        %vm3940 = vcmp.lt.s32.totalorder %v3603, 0
        %v3941 = vand.u32 %v3603, 2139095040
        %v3942 = vshrl.u32 %v3941, 23
        %v3943 = vsub.s32 %v3942, 127
        %v3944 = vand.u32 2147483647, %v3603
        %v3945 = vand.u32 %v3944, 8388607
        %v3946 = vor.u32 %v3945, 8388608
        %v3947 = vsub.s32 0, %v3946
        %v3948 = vadd.s32 %v3943, 1
        %vm3949 = vcmp.gt.s32.totalorder %v3948, 0
        %v3950 = vsel %vm3949, %v3948, 0
        %v3951 = vshrl.u32 %v3950, 5
        %v3952 = vand.u32 %v3950, 31
        %v3953 = vsub.s32 32, %v3952
        %v3954 = vshrl.u32 683565275, %v3953
        %v3955 = vshll.u32 683565275, %v3952
        %v3956 = vshrl.u32 2475754826, %v3953
        %v3957 = vor.u32 %v3955, %v3956
        %v3958 = vshll.u32 2475754826, %v3952
        %v3959 = vshrl.u32 2131351028, %v3953
        %v3960 = vor.u32 %v3958, %v3959
        %v3961 = vshll.u32 2131351028, %v3952
        %v3962 = vshrl.u32 2102212464, %v3953
        %v3963 = vor.u32 %v3961, %v3962
        %v3964 = vshll.u32 2102212464, %v3952
        %v3965 = vshrl.u32 920167782, %v3953
        %v3966 = vor.u32 %v3964, %v3965
        %v3967 = vshll.u32 920167782, %v3952
        %v3968 = vshrl.u32 1326507024, %v3953
        %v3969 = vor.u32 %v3967, %v3968
        %vm3970 = vcmp.lt.s32.totalorder %v3951, 1
        %vm3971 = vcmp.lt.s32.totalorder %v3951, 2
        %vm3972 = vcmp.lt.s32.totalorder %v3951, 3
        %vm3973 = vcmp.lt.s32.totalorder %v3951, 4
        %v3974 = vsel %vm3970, %v3954, %v3957
        %v3975 = vsel %vm3973, %v3963, 2102212464
        %v3976 = vsel %vm3972, %v3960, %v3975
        %v3977 = vsel %vm3971, %v3974, %v3976
        %v3978 = vsel %vm3970, %v3957, %v3960
        %v3979 = vsel %vm3973, %v3966, 920167782
        %v3980 = vsel %vm3972, %v3963, %v3979
        %v3981 = vsel %vm3971, %v3978, %v3980
        %v3982 = vsel %vm3970, %v3960, %v3963
        %v3983 = vsel %vm3973, %v3969, 1326507024
        %v3984 = vsel %vm3972, %v3966, %v3983
        %v3985 = vsel %vm3971, %v3982, %v3984
        %v3986 = vshll.u32 %v3946, 8
        %v3987 = vmul.u32.u64.compose %v3986, %v3985
        %v3988 = vextract.low.u32 %v3987
        %v3989 = vextract.high.u32 %v3987
        %v3990 = vmul.u32.u64.compose %v3986, %v3981
        %v3991 = vextract.low.u32 %v3990
        %v3992 = vextract.high.u32 %v3990
        %v3993 = vmul.u32 %v3986, %v3977
        %v3994 = vadd.s32 %v3989, %v3991
        %vm3995 = vc.u32 %v3989, %v3991
        %v3996 = vadd.s32 %v3992, 1
        %v3997 = vsel %vm3995, %v3996, %v3992
        %v3998 = vadd.s32 %v3993, %v3997
        %v3999 = vadd.s32 %v3998, 536870912
        %v4000 = vshrl.u32 %v3999, 30
        %v4001 = vshll.u32 %v4000, 30
        %v4002 = vsub.s32 %v3998, %v4001
        %vm4003 = vcmp.lt.s32.totalorder %v4002, 0
        %v4004 = vsub.s32 0, %v4002
        %v4005 = vsel %vm4003, %v4004, %v4002
        %v4006 = vclz %v4005
        %v4007 = vsub.s32 %v4006, 2
        %vm4008 = vcmp.gt.s32.totalorder 0, %v4007
        %v4009 = vsel %vm4008, 0, %v4007
        %v4010 = vsub.s32 32, %v4009
        %v4011 = vshll.u32 %v4002, %v4009
        %v4012 = vshrl.u32 %v3994, %v4010
        %v4013 = vor.u32 %v4011, %v4012
        %v4014 = vsub.s32 4294967266, %v4009
        %v4015 = vadd.s32 %v4014, 127
        %v4016 = vshll.u32 %v4015, 23
        %v4017 = vor.u32 4788187, %v4016
        %v4018 = vand.u32 2147483647, %v4017
        %v4020 = vcvt.s32.f32 %v4013
        %v4021 = vmul.f32 %v4020, %v4018
        %v4022 = vxor.u32 %v4021, 2147483648
        %v4023 = vsel %vm3940, %v4022, %v4021
        %v4024 = vsub.s32 4, %v4000
        %v4025 = vsel %vm3940, %v4024, %v4000
        %v4026 = vsel %vm3939, %v3603, %v4023
        %v4027 = vsel %vm3939, 0, %v4025
        %v4028 = vcosq.f32.pop %v4026
        %v4029 = vsinq.f32.pop %v4026
        %vm4030 = vweird.f32 %v3603
        %v4031 = vadd.s32 %v4027, 3
        %v4032 = vand.u32 %v4031, 3
        %vm4033 = vcmp.lt.s32.totalorder %v4032, 2
        %vm4034 = vcmp.eq.s32.totalorder %v4032, 0
        %v4035 = vxor.u32 %v4029, 2147483648
        %v4036 = vsel %vm4034, %v4028, %v4035
        %vm4037 = vcmp.eq.s32.totalorder %v4032, 2
        %v4038 = vxor.u32 %v4028, 2147483648
        %v4039 = vsel %vm4037, %v4038, %v4029
        %v4040 = vsel %vm4033, %v4036, %v4039
        %v4041 = vsel %vm4030, nan, %v4040
        %v4042 = vand.u32 2147483647, %v3608
        %vm4043 = vcmp.le.f32.partialorder %v4042, 0.7853982
        %vm4044 = vcmp.lt.s32.totalorder %v3608, 0
        %v4045 = vand.u32 %v3608, 2139095040
        %v4046 = vshrl.u32 %v4045, 23
        %v4047 = vsub.s32 %v4046, 127
        %v4048 = vand.u32 2147483647, %v3608
        %v4049 = vand.u32 %v4048, 8388607
        %v4050 = vor.u32 %v4049, 8388608
        %v4051 = vsub.s32 0, %v4050
        %v4052 = vadd.s32 %v4047, 1
        %vm4053 = vcmp.gt.s32.totalorder %v4052, 0
        %v4054 = vsel %vm4053, %v4052, 0
        %v4055 = vshrl.u32 %v4054, 5
        %v4056 = vand.u32 %v4054, 31
        %v4057 = vsub.s32 32, %v4056
        %v4058 = vshrl.u32 683565275, %v4057
        %v4059 = vshll.u32 683565275, %v4056
        %v4060 = vshrl.u32 2475754826, %v4057
        %v4061 = vor.u32 %v4059, %v4060
        %v4062 = vshll.u32 2475754826, %v4056
        %v4063 = vshrl.u32 2131351028, %v4057
        %v4064 = vor.u32 %v4062, %v4063
        %v4065 = vshll.u32 2131351028, %v4056
        %v4066 = vshrl.u32 2102212464, %v4057
        %v4067 = vor.u32 %v4065, %v4066
        %v4068 = vshll.u32 2102212464, %v4056
        %v4069 = vshrl.u32 920167782, %v4057
        %v4070 = vor.u32 %v4068, %v4069
        %v4071 = vshll.u32 920167782, %v4056
        %v4072 = vshrl.u32 1326507024, %v4057
        %v4073 = vor.u32 %v4071, %v4072
        %vm4074 = vcmp.lt.s32.totalorder %v4055, 1
        %vm4075 = vcmp.lt.s32.totalorder %v4055, 2
        %vm4076 = vcmp.lt.s32.totalorder %v4055, 3
        %vm4077 = vcmp.lt.s32.totalorder %v4055, 4
        %v4078 = vsel %vm4074, %v4058, %v4061
        %v4079 = vsel %vm4077, %v4067, 2102212464
        %v4080 = vsel %vm4076, %v4064, %v4079
        %v4081 = vsel %vm4075, %v4078, %v4080
        %v4082 = vsel %vm4074, %v4061, %v4064
        %v4083 = vsel %vm4077, %v4070, 920167782
        %v4084 = vsel %vm4076, %v4067, %v4083
        %v4085 = vsel %vm4075, %v4082, %v4084
        %v4086 = vsel %vm4074, %v4064, %v4067
        %v4087 = vsel %vm4077, %v4073, 1326507024
        %v4088 = vsel %vm4076, %v4070, %v4087
        %v4089 = vsel %vm4075, %v4086, %v4088
        %v4090 = vshll.u32 %v4050, 8
        %v4091 = vmul.u32.u64.compose %v4090, %v4089
        %v4092 = vextract.low.u32 %v4091
        %v4093 = vextract.high.u32 %v4091
        %v4094 = vmul.u32.u64.compose %v4090, %v4085
        %v4095 = vextract.low.u32 %v4094
        %v4096 = vextract.high.u32 %v4094
        %v4097 = vmul.u32 %v4090, %v4081
        %v4098 = vadd.s32 %v4093, %v4095
        %vm4099 = vc.u32 %v4093, %v4095
        %v4100 = vadd.s32 %v4096, 1
        %v4101 = vsel %vm4099, %v4100, %v4096
        %v4102 = vadd.s32 %v4097, %v4101
        %v4103 = vadd.s32 %v4102, 536870912
        %v4104 = vshrl.u32 %v4103, 30
        %v4105 = vshll.u32 %v4104, 30
        %v4106 = vsub.s32 %v4102, %v4105
        %vm4107 = vcmp.lt.s32.totalorder %v4106, 0
        %v4108 = vsub.s32 0, %v4106
        %v4109 = vsel %vm4107, %v4108, %v4106
        %v4110 = vclz %v4109
        %v4111 = vsub.s32 %v4110, 2
        %vm4112 = vcmp.gt.s32.totalorder 0, %v4111
        %v4113 = vsel %vm4112, 0, %v4111
        %v4114 = vsub.s32 32, %v4113
        %v4115 = vshll.u32 %v4106, %v4113
        %v4116 = vshrl.u32 %v4098, %v4114
        %v4117 = vor.u32 %v4115, %v4116
        %v4118 = vsub.s32 4294967266, %v4113
        %v4119 = vadd.s32 %v4118, 127
        %v4120 = vshll.u32 %v4119, 23
        %v4121 = vor.u32 4788187, %v4120
        %v4122 = vand.u32 2147483647, %v4121
        %v4124 = vcvt.s32.f32 %v4117
        %v4125 = vmul.f32 %v4124, %v4122
        %v4126 = vxor.u32 %v4125, 2147483648
        %v4127 = vsel %vm4044, %v4126, %v4125
        %v4128 = vsub.s32 4, %v4104
        %v4129 = vsel %vm4044, %v4128, %v4104
        %v4130 = vsel %vm4043, %v3608, %v4127
        %v4131 = vsel %vm4043, 0, %v4129
        %v4132 = vcosq.f32.pop %v4130
        %v4133 = vsinq.f32.pop %v4130
        %vm4134 = vweird.f32 %v3608
        %v4135 = vadd.s32 %v4131, 3
        %v4136 = vand.u32 %v4135, 3
        %vm4137 = vcmp.lt.s32.totalorder %v4136, 2
        %vm4138 = vcmp.eq.s32.totalorder %v4136, 0
        %v4139 = vxor.u32 %v4133, 2147483648
        %v4140 = vsel %vm4138, %v4132, %v4139
        %vm4141 = vcmp.eq.s32.totalorder %v4136, 2
        %v4142 = vxor.u32 %v4132, 2147483648
        %v4143 = vsel %vm4141, %v4142, %v4133
        %v4144 = vsel %vm4137, %v4140, %v4143
        %v4145 = vsel %vm4134, nan, %v4144
        %v4146 = vand.u32 2147483647, %v3613
        %vm4147 = vcmp.le.f32.partialorder %v4146, 0.7853982
        %vm4148 = vcmp.lt.s32.totalorder %v3613, 0
        %v4149 = vand.u32 %v3613, 2139095040
        %v4150 = vshrl.u32 %v4149, 23
        %v4151 = vsub.s32 %v4150, 127
        %v4152 = vand.u32 2147483647, %v3613
        %v4153 = vand.u32 %v4152, 8388607
        %v4154 = vor.u32 %v4153, 8388608
        %v4155 = vsub.s32 0, %v4154
        %v4156 = vadd.s32 %v4151, 1
        %vm4157 = vcmp.gt.s32.totalorder %v4156, 0
        %v4158 = vsel %vm4157, %v4156, 0
        %v4159 = vshrl.u32 %v4158, 5
        %v4160 = vand.u32 %v4158, 31
        %v4161 = vsub.s32 32, %v4160
        %v4162 = vshrl.u32 683565275, %v4161
        %v4163 = vshll.u32 683565275, %v4160
        %v4164 = vshrl.u32 2475754826, %v4161
        %v4165 = vor.u32 %v4163, %v4164
        %v4166 = vshll.u32 2475754826, %v4160
        %v4167 = vshrl.u32 2131351028, %v4161
        %v4168 = vor.u32 %v4166, %v4167
        %v4169 = vshll.u32 2131351028, %v4160
        %v4170 = vshrl.u32 2102212464, %v4161
        %v4171 = vor.u32 %v4169, %v4170
        %v4172 = vshll.u32 2102212464, %v4160
        %v4173 = vshrl.u32 920167782, %v4161
        %v4174 = vor.u32 %v4172, %v4173
        %v4175 = vshll.u32 920167782, %v4160
        %v4176 = vshrl.u32 1326507024, %v4161
        %v4177 = vor.u32 %v4175, %v4176
        %vm4178 = vcmp.lt.s32.totalorder %v4159, 1
        %vm4179 = vcmp.lt.s32.totalorder %v4159, 2
        %vm4180 = vcmp.lt.s32.totalorder %v4159, 3
        %vm4181 = vcmp.lt.s32.totalorder %v4159, 4
        %v4182 = vsel %vm4178, %v4162, %v4165
        %v4183 = vsel %vm4181, %v4171, 2102212464
        %v4184 = vsel %vm4180, %v4168, %v4183
        %v4185 = vsel %vm4179, %v4182, %v4184
        %v4186 = vsel %vm4178, %v4165, %v4168
        %v4187 = vsel %vm4181, %v4174, 920167782
        %v4188 = vsel %vm4180, %v4171, %v4187
        %v4189 = vsel %vm4179, %v4186, %v4188
        %v4190 = vsel %vm4178, %v4168, %v4171
        %v4191 = vsel %vm4181, %v4177, 1326507024
        %v4192 = vsel %vm4180, %v4174, %v4191
        %v4193 = vsel %vm4179, %v4190, %v4192
        %v4194 = vshll.u32 %v4154, 8
        %v4195 = vmul.u32.u64.compose %v4194, %v4193
        %v4196 = vextract.low.u32 %v4195
        %v4197 = vextract.high.u32 %v4195
        %v4198 = vmul.u32.u64.compose %v4194, %v4189
        %v4199 = vextract.low.u32 %v4198
        %v4200 = vextract.high.u32 %v4198
        %v4201 = vmul.u32 %v4194, %v4185
        %v4202 = vadd.s32 %v4197, %v4199
        %vm4203 = vc.u32 %v4197, %v4199
        %v4204 = vadd.s32 %v4200, 1
        %v4205 = vsel %vm4203, %v4204, %v4200
        %v4206 = vadd.s32 %v4201, %v4205
        %v4207 = vadd.s32 %v4206, 536870912
        %v4208 = vshrl.u32 %v4207, 30
        %v4209 = vshll.u32 %v4208, 30
        %v4210 = vsub.s32 %v4206, %v4209
        %vm4211 = vcmp.lt.s32.totalorder %v4210, 0
        %v4212 = vsub.s32 0, %v4210
        %v4213 = vsel %vm4211, %v4212, %v4210
        %v4214 = vclz %v4213
        %v4215 = vsub.s32 %v4214, 2
        %vm4216 = vcmp.gt.s32.totalorder 0, %v4215
        %v4217 = vsel %vm4216, 0, %v4215
        %v4218 = vsub.s32 32, %v4217
        %v4219 = vshll.u32 %v4210, %v4217
        %v4220 = vshrl.u32 %v4202, %v4218
        %v4221 = vor.u32 %v4219, %v4220
        %v4222 = vsub.s32 4294967266, %v4217
        %v4223 = vadd.s32 %v4222, 127
        %v4224 = vshll.u32 %v4223, 23
        %v4225 = vor.u32 4788187, %v4224
        %v4226 = vand.u32 2147483647, %v4225
        %v4228 = vcvt.s32.f32 %v4221
        %v4229 = vmul.f32 %v4228, %v4226
        %v4230 = vxor.u32 %v4229, 2147483648
        %v4231 = vsel %vm4148, %v4230, %v4229
        %v4232 = vsub.s32 4, %v4208
        %v4233 = vsel %vm4148, %v4232, %v4208
        %v4234 = vsel %vm4147, %v3613, %v4231
        %v4235 = vsel %vm4147, 0, %v4233
        %v4236 = vcosq.f32.pop %v4234
        %v4237 = vsinq.f32.pop %v4234
        %vm4238 = vweird.f32 %v3613
        %v4239 = vadd.s32 %v4235, 3
        %v4240 = vand.u32 %v4239, 3
        %vm4241 = vcmp.lt.s32.totalorder %v4240, 2
        %vm4242 = vcmp.eq.s32.totalorder %v4240, 0
        %v4243 = vxor.u32 %v4237, 2147483648
        %v4244 = vsel %vm4242, %v4236, %v4243
        %vm4245 = vcmp.eq.s32.totalorder %v4240, 2
        %v4246 = vxor.u32 %v4236, 2147483648
        %v4247 = vsel %vm4245, %v4246, %v4237
        %v4248 = vsel %vm4241, %v4244, %v4247
        %v4249 = vsel %vm4238, nan, %v4248
        %v4250 = vand.u32 2147483647, %v3618
        %vm4251 = vcmp.le.f32.partialorder %v4250, 0.7853982
        %vm4252 = vcmp.lt.s32.totalorder %v3618, 0
        %v4253 = vand.u32 %v3618, 2139095040
        %v4254 = vshrl.u32 %v4253, 23
        %v4255 = vsub.s32 %v4254, 127
        %v4256 = vand.u32 2147483647, %v3618
        %v4257 = vand.u32 %v4256, 8388607
        %v4258 = vor.u32 %v4257, 8388608
        %v4259 = vsub.s32 0, %v4258
        %v4260 = vadd.s32 %v4255, 1
        %vm4261 = vcmp.gt.s32.totalorder %v4260, 0
        %v4262 = vsel %vm4261, %v4260, 0
        %v4263 = vshrl.u32 %v4262, 5
        %v4264 = vand.u32 %v4262, 31
        %v4265 = vsub.s32 32, %v4264
        %v4266 = vshrl.u32 683565275, %v4265
        %v4267 = vshll.u32 683565275, %v4264
        %v4268 = vshrl.u32 2475754826, %v4265
        %v4269 = vor.u32 %v4267, %v4268
        %v4270 = vshll.u32 2475754826, %v4264
        %v4271 = vshrl.u32 2131351028, %v4265
        %v4272 = vor.u32 %v4270, %v4271
        %v4273 = vshll.u32 2131351028, %v4264
        %v4274 = vshrl.u32 2102212464, %v4265
        %v4275 = vor.u32 %v4273, %v4274
        %v4276 = vshll.u32 2102212464, %v4264
        %v4277 = vshrl.u32 920167782, %v4265
        %v4278 = vor.u32 %v4276, %v4277
        %v4279 = vshll.u32 920167782, %v4264
        %v4280 = vshrl.u32 1326507024, %v4265
        %v4281 = vor.u32 %v4279, %v4280
        %vm4282 = vcmp.lt.s32.totalorder %v4263, 1
        %vm4283 = vcmp.lt.s32.totalorder %v4263, 2
        %vm4284 = vcmp.lt.s32.totalorder %v4263, 3
        %vm4285 = vcmp.lt.s32.totalorder %v4263, 4
        %v4286 = vsel %vm4282, %v4266, %v4269
        %v4287 = vsel %vm4285, %v4275, 2102212464
        %v4288 = vsel %vm4284, %v4272, %v4287
        %v4289 = vsel %vm4283, %v4286, %v4288
        %v4290 = vsel %vm4282, %v4269, %v4272
        %v4291 = vsel %vm4285, %v4278, 920167782
        %v4292 = vsel %vm4284, %v4275, %v4291
        %v4293 = vsel %vm4283, %v4290, %v4292
        %v4294 = vsel %vm4282, %v4272, %v4275
        %v4295 = vsel %vm4285, %v4281, 1326507024
        %v4296 = vsel %vm4284, %v4278, %v4295
        %v4297 = vsel %vm4283, %v4294, %v4296
        %v4298 = vshll.u32 %v4258, 8
        %v4299 = vmul.u32.u64.compose %v4298, %v4297
        %v4300 = vextract.low.u32 %v4299
        %v4301 = vextract.high.u32 %v4299
        %v4302 = vmul.u32.u64.compose %v4298, %v4293
        %v4303 = vextract.low.u32 %v4302
        %v4304 = vextract.high.u32 %v4302
        %v4305 = vmul.u32 %v4298, %v4289
        %v4306 = vadd.s32 %v4301, %v4303
        %vm4307 = vc.u32 %v4301, %v4303
        %v4308 = vadd.s32 %v4304, 1
        %v4309 = vsel %vm4307, %v4308, %v4304
        %v4310 = vadd.s32 %v4305, %v4309
        %v4311 = vadd.s32 %v4310, 536870912
        %v4312 = vshrl.u32 %v4311, 30
        %v4313 = vshll.u32 %v4312, 30
        %v4314 = vsub.s32 %v4310, %v4313
        %vm4315 = vcmp.lt.s32.totalorder %v4314, 0
        %v4316 = vsub.s32 0, %v4314
        %v4317 = vsel %vm4315, %v4316, %v4314
        %v4318 = vclz %v4317
        %v4319 = vsub.s32 %v4318, 2
        %vm4320 = vcmp.gt.s32.totalorder 0, %v4319
        %v4321 = vsel %vm4320, 0, %v4319
        %v4322 = vsub.s32 32, %v4321
        %v4323 = vshll.u32 %v4314, %v4321
        %v4324 = vshrl.u32 %v4306, %v4322
        %v4325 = vor.u32 %v4323, %v4324
        %v4326 = vsub.s32 4294967266, %v4321
        %v4327 = vadd.s32 %v4326, 127
        %v4328 = vshll.u32 %v4327, 23
        %v4329 = vor.u32 4788187, %v4328
        %v4330 = vand.u32 2147483647, %v4329
        %v4332 = vcvt.s32.f32 %v4325
        %v4333 = vmul.f32 %v4332, %v4330
        %v4334 = vxor.u32 %v4333, 2147483648
        %v4335 = vsel %vm4252, %v4334, %v4333
        %v4336 = vsub.s32 4, %v4312
        %v4337 = vsel %vm4252, %v4336, %v4312
        %v4338 = vsel %vm4251, %v3618, %v4335
        %v4339 = vsel %vm4251, 0, %v4337
        %v4340 = vcosq.f32.pop %v4338
        %v4341 = vsinq.f32.pop %v4338
        %vm4342 = vweird.f32 %v3618
        %v4343 = vadd.s32 %v4339, 3
        %v4344 = vand.u32 %v4343, 3
        %vm4345 = vcmp.lt.s32.totalorder %v4344, 2
        %vm4346 = vcmp.eq.s32.totalorder %v4344, 0
        %v4347 = vxor.u32 %v4341, 2147483648
        %v4348 = vsel %vm4346, %v4340, %v4347
        %vm4349 = vcmp.eq.s32.totalorder %v4344, 2
        %v4350 = vxor.u32 %v4340, 2147483648
        %v4351 = vsel %vm4349, %v4350, %v4341
        %v4352 = vsel %vm4345, %v4348, %v4351
        %v4353 = vsel %vm4342, nan, %v4352
        %v4354 = vand.u32 2147483647, %v3623
        %vm4355 = vcmp.le.f32.partialorder %v4354, 0.7853982
        %vm4356 = vcmp.lt.s32.totalorder %v3623, 0
        %v4357 = vand.u32 %v3623, 2139095040
        %v4358 = vshrl.u32 %v4357, 23
        %v4359 = vsub.s32 %v4358, 127
        %v4360 = vand.u32 2147483647, %v3623
        %v4361 = vand.u32 %v4360, 8388607
        %v4362 = vor.u32 %v4361, 8388608
        %v4363 = vsub.s32 0, %v4362
        %v4364 = vadd.s32 %v4359, 1
        %vm4365 = vcmp.gt.s32.totalorder %v4364, 0
        %v4366 = vsel %vm4365, %v4364, 0
        %v4367 = vshrl.u32 %v4366, 5
        %v4368 = vand.u32 %v4366, 31
        %v4369 = vsub.s32 32, %v4368
        %v4370 = vshrl.u32 683565275, %v4369
        %v4371 = vshll.u32 683565275, %v4368
        %v4372 = vshrl.u32 2475754826, %v4369
        %v4373 = vor.u32 %v4371, %v4372
        %v4374 = vshll.u32 2475754826, %v4368
        %v4375 = vshrl.u32 2131351028, %v4369
        %v4376 = vor.u32 %v4374, %v4375
        %v4377 = vshll.u32 2131351028, %v4368
        %v4378 = vshrl.u32 2102212464, %v4369
        %v4379 = vor.u32 %v4377, %v4378
        %v4380 = vshll.u32 2102212464, %v4368
        %v4381 = vshrl.u32 920167782, %v4369
        %v4382 = vor.u32 %v4380, %v4381
        %v4383 = vshll.u32 920167782, %v4368
        %v4384 = vshrl.u32 1326507024, %v4369
        %v4385 = vor.u32 %v4383, %v4384
        %vm4386 = vcmp.lt.s32.totalorder %v4367, 1
        %vm4387 = vcmp.lt.s32.totalorder %v4367, 2
        %vm4388 = vcmp.lt.s32.totalorder %v4367, 3
        %vm4389 = vcmp.lt.s32.totalorder %v4367, 4
        %v4390 = vsel %vm4386, %v4370, %v4373
        %v4391 = vsel %vm4389, %v4379, 2102212464
        %v4392 = vsel %vm4388, %v4376, %v4391
        %v4393 = vsel %vm4387, %v4390, %v4392
        %v4394 = vsel %vm4386, %v4373, %v4376
        %v4395 = vsel %vm4389, %v4382, 920167782
        %v4396 = vsel %vm4388, %v4379, %v4395
        %v4397 = vsel %vm4387, %v4394, %v4396
        %v4398 = vsel %vm4386, %v4376, %v4379
        %v4399 = vsel %vm4389, %v4385, 1326507024
        %v4400 = vsel %vm4388, %v4382, %v4399
        %v4401 = vsel %vm4387, %v4398, %v4400
        %v4402 = vshll.u32 %v4362, 8
        %v4403 = vmul.u32.u64.compose %v4402, %v4401
        %v4404 = vextract.low.u32 %v4403
        %v4405 = vextract.high.u32 %v4403
        %v4406 = vmul.u32.u64.compose %v4402, %v4397
        %v4407 = vextract.low.u32 %v4406
        %v4408 = vextract.high.u32 %v4406
        %v4409 = vmul.u32 %v4402, %v4393
        %v4410 = vadd.s32 %v4405, %v4407
        %vm4411 = vc.u32 %v4405, %v4407
        %v4412 = vadd.s32 %v4408, 1
        %v4413 = vsel %vm4411, %v4412, %v4408
        %v4414 = vadd.s32 %v4409, %v4413
        %v4415 = vadd.s32 %v4414, 536870912
        %v4416 = vshrl.u32 %v4415, 30
        %v4417 = vshll.u32 %v4416, 30
        %v4418 = vsub.s32 %v4414, %v4417
        %vm4419 = vcmp.lt.s32.totalorder %v4418, 0
        %v4420 = vsub.s32 0, %v4418
        %v4421 = vsel %vm4419, %v4420, %v4418
        %v4422 = vclz %v4421
        %v4423 = vsub.s32 %v4422, 2
        %vm4424 = vcmp.gt.s32.totalorder 0, %v4423
        %v4425 = vsel %vm4424, 0, %v4423
        %v4426 = vsub.s32 32, %v4425
        %v4427 = vshll.u32 %v4418, %v4425
        %v4428 = vshrl.u32 %v4410, %v4426
        %v4429 = vor.u32 %v4427, %v4428
        %v4430 = vsub.s32 4294967266, %v4425
        %v4431 = vadd.s32 %v4430, 127
        %v4432 = vshll.u32 %v4431, 23
        %v4433 = vor.u32 4788187, %v4432
        %v4434 = vand.u32 2147483647, %v4433
        %v4436 = vcvt.s32.f32 %v4429
        %v4437 = vmul.f32 %v4436, %v4434
        %v4438 = vxor.u32 %v4437, 2147483648
        %v4439 = vsel %vm4356, %v4438, %v4437
        %v4440 = vsub.s32 4, %v4416
        %v4441 = vsel %vm4356, %v4440, %v4416
        %v4442 = vsel %vm4355, %v3623, %v4439
        %v4443 = vsel %vm4355, 0, %v4441
        %v4444 = vcosq.f32.pop %v4442
        %v4445 = vsinq.f32.pop %v4442
        %vm4446 = vweird.f32 %v3623
        %v4447 = vadd.s32 %v4443, 3
        %v4448 = vand.u32 %v4447, 3
        %vm4449 = vcmp.lt.s32.totalorder %v4448, 2
        %vm4450 = vcmp.eq.s32.totalorder %v4448, 0
        %v4451 = vxor.u32 %v4445, 2147483648
        %v4452 = vsel %vm4450, %v4444, %v4451
        %vm4453 = vcmp.eq.s32.totalorder %v4448, 2
        %v4454 = vxor.u32 %v4444, 2147483648
        %v4455 = vsel %vm4453, %v4454, %v4445
        %v4456 = vsel %vm4449, %v4452, %v4455
        %v4457 = vsel %vm4446, nan, %v4456
        %v4458 = vld [vmem:[%s9] sm:$0xff]
        %v4459 = vld [vmem:[%s9 + $0x8] sm:$0xff]
        %v4460 = vld [vmem:[%s9 + $0x10] sm:$0xff]
        %v4461 = vld [vmem:[%s9 + $0x18] sm:$0xff]
        %v4462 = vld [vmem:[%s9 + $0x20] sm:$0xff]
        %v4463 = vld [vmem:[%s9 + $0x28] sm:$0xff]
        %v4464 = vld [vmem:[%s9 + $0x30] sm:$0xff]
        %v4465 = vld [vmem:[%s9 + $0x38] sm:$0xff]
        %v4466 = vld [vmem:[#allocation2] sm:$0x1]
        %4468 = vset.pattern.permute.xlu0 0
        %4469 = vperm.xlu0 %4468, %v4458
        %v4470 = vpop.permute.xlu0 %4469
        %4473 = vset.pattern.permute.xlu0 0
        %4474 = vperm.xlu0 %4473, %v4459
        %v4475 = vpop.permute.xlu0 %4474
        %4478 = vset.pattern.permute.xlu0 0
        %4479 = vperm.xlu0 %4478, %v4460
        %v4480 = vpop.permute.xlu0 %4479
        %4483 = vset.pattern.permute.xlu0 0
        %4484 = vperm.xlu0 %4483, %v4461
        %v4485 = vpop.permute.xlu0 %4484
        %4488 = vset.pattern.permute.xlu0 0
        %4489 = vperm.xlu0 %4488, %v4462
        %v4490 = vpop.permute.xlu0 %4489
        %4493 = vset.pattern.permute.xlu0 0
        %4494 = vperm.xlu0 %4493, %v4463
        %v4495 = vpop.permute.xlu0 %4494
        %4498 = vset.pattern.permute.xlu0 0
        %4499 = vperm.xlu0 %4498, %v4464
        %v4500 = vpop.permute.xlu0 %4499
        %4503 = vset.pattern.permute.xlu0 0
        %4504 = vperm.xlu0 %4503, %v4465
        %v4505 = vpop.permute.xlu0 %4504
        %v4507 = vmul.f32 %v4470, %v3729
        %v4508 = vmul.f32 %v4475, %v3833
        %v4509 = vmul.f32 %v4480, %v3937
        %v4510 = vmul.f32 %v4485, %v4041
        %v4511 = vmul.f32 %v4490, %v4145
        %v4512 = vmul.f32 %v4495, %v4249
        %v4513 = vmul.f32 %v4500, %v4353
        %v4514 = vmul.f32 %v4505, %v4457
        %v4515 = vadd.f32 %v4507, %v4508
        %v4516 = vadd.f32 %v4515, %v4509
        %v4517 = vadd.f32 %v4516, %v4510
        %v4518 = vadd.f32 %v4517, %v4511
        %v4519 = vadd.f32 %v4518, %v4512
        %v4520 = vadd.f32 %v4519, %v4513
        %v4521 = vadd.f32 %v4520, %v4514
        %v4522 = vrot.slane %v4521, 4
        %v4523 = vadd.f32 %v4521, %v4522
        %v4524 = vrot.slane %v4523, 2
        %v4525 = vadd.f32 %v4523, %v4524
        %v4526 = vrot.slane %v4525, 1
        %v4527 = vadd.f32 %v4525, %v4526
        %4529 = vset.pattern.permute.xlu0 0
        %4530 = vperm.xlu0 %4529, %v4466
        %v4531 = vpop.permute.xlu0 %4530
        %v4533 = vlaneseq
        %v4534 = vshrl.u32 %v4533, 7
        %v4535 = vsub.s32 0, %v4534
        %v4536 = vrot.slane %v4531, %v4535
        %v4537 = vadd.f32 %v4527, %v4536
        %4538 = vst [vmem:[%s378] sm:$0x1] %v4537
        %s4539 = sand.u32 %s271, 1
        %s4540 = scalar_lea.sflag [#allocation4], %s4539
        %s4541 = sand.u32 %s271, 1
        %s4542 = scalar_lea.vmem [#allocation3], %s4541
        // Predicated region
        $region65: #{tpu_custom_call.1} parent=63 // pred_check
          %p4543 = pneg %p281
        $region66: #{tpu_custom_call.1} parent=63 // pred_check_branch
          %4545 = sbr.rel (%p4543) target = $region68
        $region67: #{tpu_custom_call.1} parent=63 // pred_region
          %s4547 = ssub.s32 16, 16
          %4548 = vsyncadd %s4540, %s4547
          %s4549 = smul.addr %s27, 16
          %s4550 = scalar_lea.hbm %s11, %s4549
          %s4552 = sshll.u32 %s4542, 4
          %s4553 = int_to_ptr.vmem [resolvable:$true] %s4552
          %4555 = dma.vmem_to_hbm [thread:$0]  %s4553, 16, %s4550, %s4540
        $region68: #{tpu_custom_call.1} parent=63 // pred_fallthru
          _
      $region64: #{tpu_custom_call.1} parent=5 // pred_fallthru
        _
      %p4556 = scmp.le.s32.totalorder 2, %s22
      // Predicated region
      $region69: #{tpu_custom_call.1} parent=5 // pred_check
        %p4557 = pneg %p4556
      $region70: #{tpu_custom_call.1} parent=5 // pred_check_branch
        %4559 = sbr.rel (%p4557) target = $region72
      $region71: #{tpu_custom_call.1} parent=5 // pred_region
        %s4560 = ssub.s32 %s22, 2
        // Predicated region
        $region73: #{tpu_custom_call.1} parent=71 // pred_check
          %p4561 = pneg %p287
        $region74: #{tpu_custom_call.1} parent=71 // pred_check_branch
          %4563 = sbr.rel (%p4561) target = $region76
        $region75: #{tpu_custom_call.1} parent=71 // pred_region
          %s4564 = sand.u32 %s272, 1
          %s4565 = scalar_lea.sflag [#allocation4], %s4564
          %s4566 = sand.u32 %s272, 1
          %s4567 = scalar_lea.vmem [#allocation3], %s4566
          %4568 = dma.done %s4565, 16
        $region76: #{tpu_custom_call.1} parent=71 // pred_fallthru
          _
      $region72: #{tpu_custom_call.1} parent=5 // pred_fallthru
        _
    $region6: #{tpu_custom_call.1} parent=1 // loop_footer
      %s26 = sadd.s32 1, %s22
    $region7: #{tpu_custom_call.1} parent=1 // loop_footer_branch
      %21 = sbr.rel target = $region3
    $region8: #{tpu_custom_call.1} parent=1 // loop_exit
      _
    %4569 = vsyncpa [#allocation4], 1
    %s4570 = scalar_lea.sflag [#allocation4], 1
    %4571 = vsyncpa %s4570, 1

</llo_original>
